<compile_context>
chip_gen: v7x
topology: tpu7x:2x2x1
jax: 0.10.0
libtpu: 0.0.40
codegen_flags: <defaults>
</compile_context>

<pallas_src>
import functools

import jax
import jax.numpy as jnp
from jax import lax
from jax.experimental import pallas as pl
from jax.experimental.pallas import tpu as pltpu

# ---- static configuration (the "choices" dict / module hyper-params) -------
EMBED_CHOICES = (16, 32)          # choices['embed_dim']
N_CHOICE = len(EMBED_CHOICES)
MAX_D = max(EMBED_CHOICES)        # max_embed_dim = 32
N_HEAD = 4
HEAD = MAX_D // N_HEAD            # 8
FF_HIDDEN = 4 * MAX_D             # 128
BLOCK_SIZE = 8                    # sequence length T
LN_EPS = 1e-5

# rows of the packed small-parameter matrix `vecs` (shape (6 + N_CHOICE, D))
_ROW_LN1_G, _ROW_LN1_B, _ROW_LN2_G, _ROW_LN2_B, _ROW_BO, _ROW_B2 = range(6)
_N_PARAM_ROWS = 6                 # channel masks occupy the trailing rows


# ============================ fused Pallas kernel ===========================

def _mixed_layernorm(x, g_row, b_row, redmat, mask_bcast, alpha_ref):
    """sum_k alpha_k * (LayerNorm over first e_k channels, zero-padded).

    Per-choice masked row-sums of x and x*x are computed as two MXU matmuls
    against `redmat` (D, K), whose column k is the 0/1 mask of the first e_k
    lanes -- no cross-lane XLU reductions, no elementwise pre-masking.
    """
    R, D = x.shape
    g = jnp.broadcast_to(g_row, (R, D))
    b = jnp.broadcast_to(b_row, (R, D))
    sums = jnp.dot(x, redmat, preferred_element_type=jnp.float32)        # (R,K)
    sqsums = jnp.dot(x * x, redmat, preferred_element_type=jnp.float32)  # (R,K)
    acc = jnp.zeros((R, D), jnp.float32)
    for k, e in enumerate(EMBED_CHOICES):            # static, unrolled
        a = alpha_ref[k]                             # scalar from SMEM
        inv_e = 1.0 / float(e)
        mean = sums[:, k:k + 1] * inv_e                                   # (R,1)
        var = jnp.maximum(sqsums[:, k:k + 1] * inv_e - mean * mean, 0.0)  # (R,1)
        y = (x - mean) * lax.rsqrt(var + LN_EPS) * g + b
        if e != MAX_D:
            y = y * mask_bcast[k]                    # zero-pad channels >= e
        acc = acc + a * y
    return acc


def mixed_block_kernel(alpha_ref, x_ref, wqkv_ref, wo_ref, w1_ref, b1_ref,
                       w2_ref, vecs_ref, redmat_ref, bias_ref, out_ref):
    x = x_ref[...].astype(jnp.float32)               # (R, D); R = Bs * T
    R, D = x.shape
    vecs = vecs_ref[...].astype(jnp.float32)         # (6 + K, D)
    redmat = redmat_ref[...].astype(jnp.float32)     # (D, K)

    # hoisted zero-pad-mask broadcasts (only needed for sub-maximal choices);
    # JAX does not CSE broadcast_in_dim, so build them once for both LNs.
    mask_bcast = [
        jnp.broadcast_to(vecs[_N_PARAM_ROWS + k:_N_PARAM_ROWS + k + 1, :],
                         (R, D)) if e != MAX_D else None
        for k, e in enumerate(EMBED_CHOICES)]

    # ---- mixed LayerNorm 1 + causal multi-head self-attention residual -----
    xln = _mixed_layernorm(x, vecs[_ROW_LN1_G:_ROW_LN1_G + 1, :],
                           vecs[_ROW_LN1_B:_ROW_LN1_B + 1, :],
                           redmat, mask_bcast, alpha_ref)

    # per-head projections straight into block-diagonal packed form:
    # (R, D) x (D, HEAD) per head, sublane-concatenated -> (N_HEAD*R, HEAD).
    # (batch rides along in the sublane axis; no lane<->sublane relayout.)
    def packed_proj(base):
        return jnp.concatenate(
            [jnp.dot(xln, wqkv_ref[base + h],
                     preferred_element_type=jnp.float32)
             for h in range(N_HEAD)], axis=0)

    qb = packed_proj(0)
    kb = packed_proj(N_HEAD)
    vb = packed_proj(2 * N_HEAD)
    HT = N_HEAD * R

    # one score matmul for every (head, batch) block + additive mask bias
    s = lax.dot_general(qb, kb, (((1,), (1,)), ((), ())),
                        preferred_element_type=jnp.float32)   # qb @ kb.T
    s = s * (HEAD ** -0.5) + bias_ref[...]
    s = s - jnp.max(s, axis=-1, keepdims=True)
    p = jnp.exp(s)
    denom = jnp.dot(p, jnp.ones((HT, 1), jnp.float32),        # MXU row-sum
                    preferred_element_type=jnp.float32)
    p = p * pl.reciprocal(denom, approx=True)                 # EUP slot
    ob = jnp.dot(p, vb, preferred_element_type=jnp.float32)   # (HT, HEAD)

    # output projection with the head-unpack folded in: per-head sublane
    # slice of ob times the matching (HEAD, D) slice of wo, accumulated.
    attn = jnp.broadcast_to(vecs[_ROW_BO:_ROW_BO + 1, :], (R, D))
    for h in range(N_HEAD):
        attn = attn + jnp.dot(ob[h * R:(h + 1) * R, :], wo_ref[h],
                              preferred_element_type=jnp.float32)
    x = x + attn

    # ---- mixed LayerNorm 2 + feed-forward residual --------------------------
    xln2 = _mixed_layernorm(x, vecs[_ROW_LN2_G:_ROW_LN2_G + 1, :],
                            vecs[_ROW_LN2_B:_ROW_LN2_B + 1, :],
                            redmat, mask_bcast, alpha_ref)
    hdn = jnp.dot(xln2, w1_ref[...], preferred_element_type=jnp.float32)
    hdn = jnp.maximum(hdn + b1_ref[...], 0.0)
    y = jnp.dot(hdn, w2_ref[...], preferred_element_type=jnp.float32) \
        + vecs[_ROW_B2:_ROW_B2 + 1, :]

    out_ref[...] = (x + y).astype(out_ref.dtype)


# ============================ wrapper =======================================

def _pick_grid_steps(batch):
    """1 grid step on single-TensorCore chips (v5e/v6e); 2 'parallel' steps
    on v7x so both TensorCores of the megacore each get half the batch."""
    try:
        kind = jax.devices()[0].device_kind.lower()
    except Exception:  # pragma: no cover - defensive
        kind = ""
    if ("v7" in kind or "7x" in kind) and batch % 2 == 0 and batch >= 2:
        return 2
    return 1


@functools.partial(jax.jit, static_argnames=("grid_steps",))
def _mixed_block_pallas(x, params, alpha, grid_steps):
    B, T, D = x.shape
    assert T == BLOCK_SIZE and D == MAX_D and B % grid_steps == 0
    H = params["w1"].shape[1]
    Bs = B // grid_steps              # batch elements handled per grid step
    R = Bs * T                        # activation rows per grid step
    HT = N_HEAD * R                   # block-diagonal attention extent
    f32 = jnp.float32

    # ---- host-side packing (tiny XLA ops, outside the kernel) --------------
    # q/k/v weights, split per head and stacked: (3*N_HEAD, D, HEAD)
    wqkv_heads = jnp.stack(
        [params["wq"][:, h * HEAD:(h + 1) * HEAD] for h in range(N_HEAD)]
        + [params["wk"][:, h * HEAD:(h + 1) * HEAD] for h in range(N_HEAD)]
        + [params["wv"][:, h * HEAD:(h + 1) * HEAD] for h in range(N_HEAD)],
        axis=0).astype(f32)
    # output projection split per head: (N_HEAD, HEAD, D)
    wo_heads = params["wo"].reshape(N_HEAD, HEAD, D).astype(f32)
    # small 1-D params + per-choice channel masks as rows: (6 + K, D)
    mask_rows = [(jnp.arange(D) < e).astype(f32) for e in EMBED_CHOICES]
    vecs = jnp.stack([params["ln1_g"], params["ln1_b"],
                      params["ln2_g"], params["ln2_b"],
                      params["bo"], params["b2"]] + mask_rows,
                     axis=0).astype(f32)
    # LN reduction-mask matrix (columns = choices): (D, K)
    redmat = jnp.stack(mask_rows, axis=1)
    # combined (head x batch)-block-diagonal + causal additive bias (0/-1e30)
    idx = jnp.arange(HT)
    blk, pos = idx // T, idx % T
    allow = (blk[:, None] == blk[None, :]) & (pos[None, :] <= pos[:, None])
    bias = jnp.where(allow, 0.0, -1e30).astype(f32)           # (HT, HT)

    out = pl.pallas_call(
        mixed_block_kernel,
        out_shape=jax.ShapeDtypeStruct((B * T, D), x.dtype),
        grid=(grid_steps,),
        in_specs=[
            pl.BlockSpec(memory_space=pltpu.MemorySpace.SMEM),           # alpha
            pl.BlockSpec((R, D), lambda i: (i, 0)),                      # x
            pl.BlockSpec((3 * N_HEAD, D, HEAD), lambda i: (0, 0, 0)),    # wqkv
            pl.BlockSpec((N_HEAD, HEAD, D), lambda i: (0, 0, 0)),        # wo
            pl.BlockSpec((D, H), lambda i: (0, 0)),                      # w1
            pl.BlockSpec((1, H), lambda i: (0, 0)),                      # b1
            pl.BlockSpec((H, D), lambda i: (0, 0)),                      # w2
            pl.BlockSpec((_N_PARAM_ROWS + N_CHOICE, D), lambda i: (0, 0)),  # vecs
            pl.BlockSpec((D, N_CHOICE), lambda i: (0, 0)),               # redmat
            pl.BlockSpec((HT, HT), lambda i: (0, 0)),                    # bias
        ],
        out_specs=pl.BlockSpec((R, D), lambda i: (i, 0)),
        compiler_params=pltpu.CompilerParams(
            dimension_semantics=("parallel",)),
    )(alpha, x.reshape(B * T, D), wqkv_heads, wo_heads,
      params["w1"], params["b1"].reshape(1, H), params["w2"],
      vecs, redmat, bias)
    return out.reshape(B, T, D)


def mixed_block_forward(x, params, alpha, grid_steps=None):
    """Pallas implementation of MixedBlock.forward (eval mode, dropout=0)."""
    if grid_steps is None:
        grid_steps = _pick_grid_steps(x.shape[0])
    return _mixed_block_pallas(x, params, alpha, grid_steps=grid_steps)


# ======================= pure-JAX reference (for checking) ==================

def _mixed_ln_ref(x, alpha, gamma, beta):
    out = jnp.zeros_like(x)
    for k, e in enumerate(EMBED_CHOICES):
        xs = x[..., :e]
        mean = xs.mean(-1, keepdims=True)
        var = ((xs - mean) ** 2).mean(-1, keepdims=True)
        y = (xs - mean) / jnp.sqrt(var + LN_EPS) * gamma[:e] + beta[:e]
        y = jnp.pad(y, ((0, 0), (0, 0), (0, MAX_D - e)))
        out = out + alpha[k] * y
    return out


def _attn_ref(x, xln, wq, wk, wv, wo, bo):
    B, T, D = x.shape
    q = (xln @ wq).reshape(B, T, N_HEAD, HEAD).transpose(0, 2, 1, 3)
    k = (xln @ wk).reshape(B, T, N_HEAD, HEAD).transpose(0, 2, 1, 3)
    v = (xln @ wv).reshape(B, T, N_HEAD, HEAD).transpose(0, 2, 1, 3)
    s = jnp.einsum("bhqd,bhkd->bhqk", q, k) * (HEAD ** -0.5)
    mask = jnp.tril(jnp.ones((T, T), bool))
    s = jnp.where(mask, s, -jnp.inf)
    p = jax.nn.softmax(s, axis=-1)
    y = jnp.einsum("bhqk,bhkd->bhqd", p, v).transpose(0, 2, 1, 3).reshape(B, T, D)
    return x + y @ wo + bo


def _block_ref(x, params, alpha):
    ln1 = _mixed_ln_ref(x, alpha, params["ln1_g"], params["ln1_b"])
    x = _attn_ref(x, ln1, params["wq"], params["wk"], params["wv"],
                  params["wo"], params["bo"])
    ln2 = _mixed_ln_ref(x, alpha, params["ln2_g"], params["ln2_b"])
    h = jnp.maximum(ln2 @ params["w1"] + params["b1"], 0.0)
    return x + h @ params["w2"] + params["b2"]


# ============================ main ==========================================

if __name__ == "__main__":
    key = jax.random.PRNGKey(0)
    ks = jax.random.split(key, 16)

    B, T, D, H = 2, BLOCK_SIZE, MAX_D, FF_HIDDEN
    x = jax.random.normal(ks[0], (B, T, D), jnp.float32)

    params = dict(
        ln1_g=1.0 + 0.1 * jax.random.normal(ks[1], (D,), jnp.float32),
        ln1_b=0.1 * jax.random.normal(ks[2], (D,), jnp.float32),
        ln2_g=1.0 + 0.1 * jax.random.normal(ks[3], (D,), jnp.float32),
        ln2_b=0.1 * jax.random.normal(ks[4], (D,), jnp.float32),
        wq=0.1 * jax.random.normal(ks[5], (D, D), jnp.float32),
        wk=0.1 * jax.random.normal(ks[6], (D, D), jnp.float32),
        wv=0.1 * jax.random.normal(ks[7], (D, D), jnp.float32),
        wo=0.1 * jax.random.normal(ks[8], (D, D), jnp.float32),
        bo=0.1 * jax.random.normal(ks[9], (D,), jnp.float32),
        w1=0.1 * jax.random.normal(ks[10], (D, H), jnp.float32),
        b1=0.1 * jax.random.normal(ks[11], (H,), jnp.float32),
        w2=0.1 * jax.random.normal(ks[12], (H, D), jnp.float32),
        b2=0.1 * jax.random.normal(ks[13], (D,), jnp.float32),
    )
    # arch_params['embed_dim'] -> softmaxed architecture weights over choices
    alpha = jax.nn.softmax(jax.random.normal(
        ks[14], (len(EMBED_CHOICES),), jnp.float32))

    ref = _block_ref(x, params, alpha)

    # chip-aware default grid (1 step on v5e/v6e, 2 parallel steps on v7x)
    out = mixed_block_forward(x, params, alpha)
    jax.block_until_ready(out)
    assert out.shape == (B, T, D)
    # tolerance sized for the EUP approx reciprocal in the softmax (~1e-4
    # relative error); real structural bugs would be orders of magnitude worse
    assert jnp.allclose(out, ref, atol=1e-3, rtol=1e-3), float(
        jnp.max(jnp.abs(out - ref)))

    # exercise both grid partitionings regardless of which chip we landed on
    for steps in (1, 2):
        o = mixed_block_forward(x, params, alpha, grid_steps=steps)
        jax.block_until_ready(o)
        assert jnp.allclose(o, ref, atol=1e-3, rtol=1e-3), (
            steps, float(jnp.max(jnp.abs(o - ref))))

    print("KERNEL_OK")
</pallas_src>

<mosaic_0001>
module attributes {stable_mosaic.version = 11 : i64} {
  func.func @mixed_block_kernel(%arg0: i32, %arg1: memref<2xf32, #tpu.memory_space<smem>>, %arg2: memref<16x32xf32, #tpu.memory_space<vmem>>, %arg3: memref<12x32x8xf32, #tpu.memory_space<vmem>>, %arg4: memref<4x8x32xf32, #tpu.memory_space<vmem>>, %arg5: memref<32x128xf32, #tpu.memory_space<vmem>>, %arg6: memref<1x128xf32, #tpu.memory_space<vmem>>, %arg7: memref<128x32xf32, #tpu.memory_space<vmem>>, %arg8: memref<8x32xf32, #tpu.memory_space<vmem>>, %arg9: memref<32x2xf32, #tpu.memory_space<vmem>>, %arg10: memref<64x64xf32, #tpu.memory_space<vmem>>, %arg11: memref<16x32xf32, #tpu.memory_space<vmem>>) attributes {dimension_semantics = [#tpu.dimension_semantics<parallel>], iteration_bounds = array<i64: 1>, scalar_prefetch = 0 : i64, scratch_operands = 0 : i64, tpu.core_type = #tpu.core_type<tc>, window_params = [{transform_indices = @transform_0, window_bounds = array<i64: 2>}, {transform_indices = @transform_1, window_bounds = array<i64: 16, 32>}, {pipeline_mode = #tpu.pipeline_mode<synchronous>, transform_indices = @transform_2, window_bounds = array<i64: 12, 32, 8>}, {pipeline_mode = #tpu.pipeline_mode<synchronous>, transform_indices = @transform_3, window_bounds = array<i64: 4, 8, 32>}, {pipeline_mode = #tpu.pipeline_mode<synchronous>, transform_indices = @transform_4, window_bounds = array<i64: 32, 128>}, {pipeline_mode = #tpu.pipeline_mode<synchronous>, transform_indices = @transform_5, window_bounds = array<i64: 1, 128>}, {pipeline_mode = #tpu.pipeline_mode<synchronous>, transform_indices = @transform_6, window_bounds = array<i64: 128, 32>}, {pipeline_mode = #tpu.pipeline_mode<synchronous>, transform_indices = @transform_7, window_bounds = array<i64: 8, 32>}, {pipeline_mode = #tpu.pipeline_mode<synchronous>, transform_indices = @transform_8, window_bounds = array<i64: 32, 2>}, {pipeline_mode = #tpu.pipeline_mode<synchronous>, transform_indices = @transform_9, window_bounds = array<i64: 64, 64>}, {transform_indices = @transform_10, window_bounds = array<i64: 16, 32>}]} {
    %c0 = arith.constant 0 : index
    %c0_0 = arith.constant 0 : index
    %0 = vector.load %arg2[%c0, %c0_0] : memref<16x32xf32, #tpu.memory_space<vmem>>, vector<16x32xf32>
    %c0_1 = arith.constant 0 : index
    %c0_2 = arith.constant 0 : index
    %1 = vector.load %arg8[%c0_1, %c0_2] : memref<8x32xf32, #tpu.memory_space<vmem>>, vector<8x32xf32>
    %c0_3 = arith.constant 0 : index
    %c0_4 = arith.constant 0 : index
    %2 = vector.load %arg9[%c0_3, %c0_4] : memref<32x2xf32, #tpu.memory_space<vmem>>, vector<32x2xf32>
    %3 = vector.extract_strided_slice %1 {offsets = [6, 0], sizes = [1, 32], strides = [1, 1]} : vector<8x32xf32> to vector<1x32xf32>
    %4 = vector.shape_cast %3 : vector<1x32xf32> to vector<1x32xf32>
    %5 = vector.broadcast %4 : vector<1x32xf32> to vector<16x32xf32>
    %6 = vector.extract_strided_slice %1 {offsets = [0, 0], sizes = [1, 32], strides = [1, 1]} : vector<8x32xf32> to vector<1x32xf32>
    %7 = vector.extract_strided_slice %1 {offsets = [1, 0], sizes = [1, 32], strides = [1, 1]} : vector<8x32xf32> to vector<1x32xf32>
    %8 = vector.shape_cast %6 : vector<1x32xf32> to vector<1x32xf32>
    %9 = vector.broadcast %8 : vector<1x32xf32> to vector<16x32xf32>
    %10 = vector.shape_cast %7 : vector<1x32xf32> to vector<1x32xf32>
    %11 = vector.broadcast %10 : vector<1x32xf32> to vector<16x32xf32>
    %cst = arith.constant dense<0.000000e+00> : vector<16x2xf32>
    %12 = tpu.matmul %0, %2, %cst {dimension_numbers = #tpu.dot_dimension_numbers<[1], [0], [0], [1], [0, 0, 1, 1], [], []>} : vector<16x32xf32>, vector<32x2xf32>, vector<16x2xf32> -> vector<16x2xf32>
    %13 = arith.mulf %0, %0 : vector<16x32xf32>
    %cst_5 = arith.constant dense<0.000000e+00> : vector<16x2xf32>
    %14 = tpu.matmul %13, %2, %cst_5 {dimension_numbers = #tpu.dot_dimension_numbers<[1], [0], [0], [1], [0, 0, 1, 1], [], []>} : vector<16x32xf32>, vector<32x2xf32>, vector<16x2xf32> -> vector<16x2xf32>
    %cst_6 = arith.constant 0.000000e+00 : f32
    %15 = vector.broadcast %cst_6 : f32 to vector<16x32xf32>
    %c0_7 = arith.constant 0 : index
    %16 = memref.load %arg1[%c0_7] : memref<2xf32, #tpu.memory_space<smem>>
    %17 = vector.extract_strided_slice %12 {offsets = [0, 0], sizes = [16, 1], strides = [1, 1]} : vector<16x2xf32> to vector<16x1xf32>
    %cst_8 = arith.constant 6.250000e-02 : f32
    %18 = vector.broadcast %cst_8 : f32 to vector<16x1xf32>
    %19 = arith.mulf %17, %18 : vector<16x1xf32>
    %20 = vector.extract_strided_slice %14 {offsets = [0, 0], sizes = [16, 1], strides = [1, 1]} : vector<16x2xf32> to vector<16x1xf32>
    %cst_9 = arith.constant 6.250000e-02 : f32
    %21 = vector.broadcast %cst_9 : f32 to vector<16x1xf32>
    %22 = arith.mulf %20, %21 : vector<16x1xf32>
    %23 = arith.mulf %19, %19 : vector<16x1xf32>
    %24 = arith.subf %22, %23 : vector<16x1xf32>
    %cst_10 = arith.constant 0.000000e+00 : f32
    %25 = vector.broadcast %cst_10 : f32 to vector<16x1xf32>
    %26 = arith.maximumf %24, %25 : vector<16x1xf32>
    %27 = vector.broadcast %19 : vector<16x1xf32> to vector<16x32xf32>
    %28 = arith.subf %0, %27 : vector<16x32xf32>
    %cst_11 = arith.constant 9.99999974E-6 : f32
    %29 = vector.broadcast %cst_11 : f32 to vector<16x1xf32>
    %30 = arith.addf %26, %29 : vector<16x1xf32>
    %31 = math.rsqrt %30 : vector<16x1xf32>
    %32 = vector.broadcast %31 : vector<16x1xf32> to vector<16x32xf32>
    %33 = arith.mulf %28, %32 : vector<16x32xf32>
    %34 = arith.mulf %33, %9 : vector<16x32xf32>
    %35 = arith.addf %34, %11 : vector<16x32xf32>
    %36 = arith.mulf %35, %5 : vector<16x32xf32>
    %37 = vector.broadcast %16 : f32 to vector<16x32xf32>
    %38 = arith.mulf %37, %36 : vector<16x32xf32>
    %39 = arith.addf %15, %38 : vector<16x32xf32>
    %c1 = arith.constant 1 : index
    %40 = memref.load %arg1[%c1] : memref<2xf32, #tpu.memory_space<smem>>
    %41 = vector.extract_strided_slice %12 {offsets = [0, 1], sizes = [16, 1], strides = [1, 1]} : vector<16x2xf32> to vector<16x1xf32>
    %cst_12 = arith.constant 3.125000e-02 : f32
    %42 = vector.broadcast %cst_12 : f32 to vector<16x1xf32>
    %43 = arith.mulf %41, %42 : vector<16x1xf32>
    %44 = vector.extract_strided_slice %14 {offsets = [0, 1], sizes = [16, 1], strides = [1, 1]} : vector<16x2xf32> to vector<16x1xf32>
    %cst_13 = arith.constant 3.125000e-02 : f32
    %45 = vector.broadcast %cst_13 : f32 to vector<16x1xf32>
    %46 = arith.mulf %44, %45 : vector<16x1xf32>
    %47 = arith.mulf %43, %43 : vector<16x1xf32>
    %48 = arith.subf %46, %47 : vector<16x1xf32>
    %cst_14 = arith.constant 0.000000e+00 : f32
    %49 = vector.broadcast %cst_14 : f32 to vector<16x1xf32>
    %50 = arith.maximumf %48, %49 : vector<16x1xf32>
    %51 = vector.broadcast %43 : vector<16x1xf32> to vector<16x32xf32>
    %52 = arith.subf %0, %51 : vector<16x32xf32>
    %cst_15 = arith.constant 9.99999974E-6 : f32
    %53 = vector.broadcast %cst_15 : f32 to vector<16x1xf32>
    %54 = arith.addf %50, %53 : vector<16x1xf32>
    %55 = math.rsqrt %54 : vector<16x1xf32>
    %56 = vector.broadcast %55 : vector<16x1xf32> to vector<16x32xf32>
    %57 = arith.mulf %52, %56 : vector<16x32xf32>
    %58 = arith.mulf %57, %9 : vector<16x32xf32>
    %59 = arith.addf %58, %11 : vector<16x32xf32>
    %60 = vector.broadcast %40 : f32 to vector<16x32xf32>
    %61 = arith.mulf %60, %59 : vector<16x32xf32>
    %62 = arith.addf %39, %61 : vector<16x32xf32>
    %c0_16 = arith.constant 0 : index
    %c0_17 = arith.constant 0 : index
    %c0_18 = arith.constant 0 : index
    %63 = vector.load %arg3[%c0_16, %c0_17, %c0_18] : memref<12x32x8xf32, #tpu.memory_space<vmem>>, vector<1x32x8xf32>
    %64 = vector.shape_cast %63 : vector<1x32x8xf32> to vector<32x8xf32>
    %cst_19 = arith.constant dense<0.000000e+00> : vector<16x8xf32>
    %65 = tpu.matmul %62, %64, %cst_19 {dimension_numbers = #tpu.dot_dimension_numbers<[1], [0], [0], [1], [0, 0, 1, 1], [], []>} : vector<16x32xf32>, vector<32x8xf32>, vector<16x8xf32> -> vector<16x8xf32>
    %c1_20 = arith.constant 1 : index
    %c0_21 = arith.constant 0 : index
    %c0_22 = arith.constant 0 : index
    %66 = vector.load %arg3[%c1_20, %c0_21, %c0_22] : memref<12x32x8xf32, #tpu.memory_space<vmem>>, vector<1x32x8xf32>
    %67 = vector.shape_cast %66 : vector<1x32x8xf32> to vector<32x8xf32>
    %cst_23 = arith.constant dense<0.000000e+00> : vector<16x8xf32>
    %68 = tpu.matmul %62, %67, %cst_23 {dimension_numbers = #tpu.dot_dimension_numbers<[1], [0], [0], [1], [0, 0, 1, 1], [], []>} : vector<16x32xf32>, vector<32x8xf32>, vector<16x8xf32> -> vector<16x8xf32>
    %c2 = arith.constant 2 : index
    %c0_24 = arith.constant 0 : index
    %c0_25 = arith.constant 0 : index
    %69 = vector.load %arg3[%c2, %c0_24, %c0_25] : memref<12x32x8xf32, #tpu.memory_space<vmem>>, vector<1x32x8xf32>
    %70 = vector.shape_cast %69 : vector<1x32x8xf32> to vector<32x8xf32>
    %cst_26 = arith.constant dense<0.000000e+00> : vector<16x8xf32>
    %71 = tpu.matmul %62, %70, %cst_26 {dimension_numbers = #tpu.dot_dimension_numbers<[1], [0], [0], [1], [0, 0, 1, 1], [], []>} : vector<16x32xf32>, vector<32x8xf32>, vector<16x8xf32> -> vector<16x8xf32>
    %c3 = arith.constant 3 : index
    %c0_27 = arith.constant 0 : index
    %c0_28 = arith.constant 0 : index
    %72 = vector.load %arg3[%c3, %c0_27, %c0_28] : memref<12x32x8xf32, #tpu.memory_space<vmem>>, vector<1x32x8xf32>
    %73 = vector.shape_cast %72 : vector<1x32x8xf32> to vector<32x8xf32>
    %cst_29 = arith.constant dense<0.000000e+00> : vector<16x8xf32>
    %74 = tpu.matmul %62, %73, %cst_29 {dimension_numbers = #tpu.dot_dimension_numbers<[1], [0], [0], [1], [0, 0, 1, 1], [], []>} : vector<16x32xf32>, vector<32x8xf32>, vector<16x8xf32> -> vector<16x8xf32>
    %75 = tpu.concatenate %65, %68, %71, %74 in 0 : vector<16x8xf32>, vector<16x8xf32>, vector<16x8xf32>, vector<16x8xf32> -> vector<64x8xf32>
    %c4 = arith.constant 4 : index
    %c0_30 = arith.constant 0 : index
    %c0_31 = arith.constant 0 : index
    %76 = vector.load %arg3[%c4, %c0_30, %c0_31] : memref<12x32x8xf32, #tpu.memory_space<vmem>>, vector<1x32x8xf32>
    %77 = vector.shape_cast %76 : vector<1x32x8xf32> to vector<32x8xf32>
    %cst_32 = arith.constant dense<0.000000e+00> : vector<16x8xf32>
    %78 = tpu.matmul %62, %77, %cst_32 {dimension_numbers = #tpu.dot_dimension_numbers<[1], [0], [0], [1], [0, 0, 1, 1], [], []>} : vector<16x32xf32>, vector<32x8xf32>, vector<16x8xf32> -> vector<16x8xf32>
    %c5 = arith.constant 5 : index
    %c0_33 = arith.constant 0 : index
    %c0_34 = arith.constant 0 : index
    %79 = vector.load %arg3[%c5, %c0_33, %c0_34] : memref<12x32x8xf32, #tpu.memory_space<vmem>>, vector<1x32x8xf32>
    %80 = vector.shape_cast %79 : vector<1x32x8xf32> to vector<32x8xf32>
    %cst_35 = arith.constant dense<0.000000e+00> : vector<16x8xf32>
    %81 = tpu.matmul %62, %80, %cst_35 {dimension_numbers = #tpu.dot_dimension_numbers<[1], [0], [0], [1], [0, 0, 1, 1], [], []>} : vector<16x32xf32>, vector<32x8xf32>, vector<16x8xf32> -> vector<16x8xf32>
    %c6 = arith.constant 6 : index
    %c0_36 = arith.constant 0 : index
    %c0_37 = arith.constant 0 : index
    %82 = vector.load %arg3[%c6, %c0_36, %c0_37] : memref<12x32x8xf32, #tpu.memory_space<vmem>>, vector<1x32x8xf32>
    %83 = vector.shape_cast %82 : vector<1x32x8xf32> to vector<32x8xf32>
    %cst_38 = arith.constant dense<0.000000e+00> : vector<16x8xf32>
    %84 = tpu.matmul %62, %83, %cst_38 {dimension_numbers = #tpu.dot_dimension_numbers<[1], [0], [0], [1], [0, 0, 1, 1], [], []>} : vector<16x32xf32>, vector<32x8xf32>, vector<16x8xf32> -> vector<16x8xf32>
    %c7 = arith.constant 7 : index
    %c0_39 = arith.constant 0 : index
    %c0_40 = arith.constant 0 : index
    %85 = vector.load %arg3[%c7, %c0_39, %c0_40] : memref<12x32x8xf32, #tpu.memory_space<vmem>>, vector<1x32x8xf32>
    %86 = vector.shape_cast %85 : vector<1x32x8xf32> to vector<32x8xf32>
    %cst_41 = arith.constant dense<0.000000e+00> : vector<16x8xf32>
    %87 = tpu.matmul %62, %86, %cst_41 {dimension_numbers = #tpu.dot_dimension_numbers<[1], [0], [0], [1], [0, 0, 1, 1], [], []>} : vector<16x32xf32>, vector<32x8xf32>, vector<16x8xf32> -> vector<16x8xf32>
    %88 = tpu.concatenate %78, %81, %84, %87 in 0 : vector<16x8xf32>, vector<16x8xf32>, vector<16x8xf32>, vector<16x8xf32> -> vector<64x8xf32>
    %c8 = arith.constant 8 : index
    %c0_42 = arith.constant 0 : index
    %c0_43 = arith.constant 0 : index
    %89 = vector.load %arg3[%c8, %c0_42, %c0_43] : memref<12x32x8xf32, #tpu.memory_space<vmem>>, vector<1x32x8xf32>
    %90 = vector.shape_cast %89 : vector<1x32x8xf32> to vector<32x8xf32>
    %cst_44 = arith.constant dense<0.000000e+00> : vector<16x8xf32>
    %91 = tpu.matmul %62, %90, %cst_44 {dimension_numbers = #tpu.dot_dimension_numbers<[1], [0], [0], [1], [0, 0, 1, 1], [], []>} : vector<16x32xf32>, vector<32x8xf32>, vector<16x8xf32> -> vector<16x8xf32>
    %c9 = arith.constant 9 : index
    %c0_45 = arith.constant 0 : index
    %c0_46 = arith.constant 0 : index
    %92 = vector.load %arg3[%c9, %c0_45, %c0_46] : memref<12x32x8xf32, #tpu.memory_space<vmem>>, vector<1x32x8xf32>
    %93 = vector.shape_cast %92 : vector<1x32x8xf32> to vector<32x8xf32>
    %cst_47 = arith.constant dense<0.000000e+00> : vector<16x8xf32>
    %94 = tpu.matmul %62, %93, %cst_47 {dimension_numbers = #tpu.dot_dimension_numbers<[1], [0], [0], [1], [0, 0, 1, 1], [], []>} : vector<16x32xf32>, vector<32x8xf32>, vector<16x8xf32> -> vector<16x8xf32>
    %c10 = arith.constant 10 : index
    %c0_48 = arith.constant 0 : index
    %c0_49 = arith.constant 0 : index
    %95 = vector.load %arg3[%c10, %c0_48, %c0_49] : memref<12x32x8xf32, #tpu.memory_space<vmem>>, vector<1x32x8xf32>
    %96 = vector.shape_cast %95 : vector<1x32x8xf32> to vector<32x8xf32>
    %cst_50 = arith.constant dense<0.000000e+00> : vector<16x8xf32>
    %97 = tpu.matmul %62, %96, %cst_50 {dimension_numbers = #tpu.dot_dimension_numbers<[1], [0], [0], [1], [0, 0, 1, 1], [], []>} : vector<16x32xf32>, vector<32x8xf32>, vector<16x8xf32> -> vector<16x8xf32>
    %c11 = arith.constant 11 : index
    %c0_51 = arith.constant 0 : index
    %c0_52 = arith.constant 0 : index
    %98 = vector.load %arg3[%c11, %c0_51, %c0_52] : memref<12x32x8xf32, #tpu.memory_space<vmem>>, vector<1x32x8xf32>
    %99 = vector.shape_cast %98 : vector<1x32x8xf32> to vector<32x8xf32>
    %cst_53 = arith.constant dense<0.000000e+00> : vector<16x8xf32>
    %100 = tpu.matmul %62, %99, %cst_53 {dimension_numbers = #tpu.dot_dimension_numbers<[1], [0], [0], [1], [0, 0, 1, 1], [], []>} : vector<16x32xf32>, vector<32x8xf32>, vector<16x8xf32> -> vector<16x8xf32>
    %101 = tpu.concatenate %91, %94, %97, %100 in 0 : vector<16x8xf32>, vector<16x8xf32>, vector<16x8xf32>, vector<16x8xf32> -> vector<64x8xf32>
    %cst_54 = arith.constant dense<0.000000e+00> : vector<64x64xf32>
    %102 = tpu.matmul %75, %88, %cst_54 {dimension_numbers = #tpu.dot_dimension_numbers<[1], [1], [0], [0], [0, 0, 1, 0], [], []>} : vector<64x8xf32>, vector<64x8xf32>, vector<64x64xf32> -> vector<64x64xf32>
    %cst_55 = arith.constant 0.353553385 : f32
    %103 = vector.broadcast %cst_55 : f32 to vector<64x64xf32>
    %104 = arith.mulf %102, %103 : vector<64x64xf32>
    %c0_56 = arith.constant 0 : index
    %c0_57 = arith.constant 0 : index
    %105 = vector.load %arg10[%c0_56, %c0_57] : memref<64x64xf32, #tpu.memory_space<vmem>>, vector<64x64xf32>
    %106 = arith.addf %104, %105 : vector<64x64xf32>
    %cst_58 = arith.constant dense<0xFF800000> : vector<64xf32>
    %107 = vector.multi_reduction <maximumf>, %106, %cst_58 [1] : vector<64x64xf32> to vector<64xf32>
    %108 = vector.shape_cast %107 : vector<64xf32> to vector<64x1xf32>
    %109 = vector.broadcast %108 : vector<64x1xf32> to vector<64x64xf32>
    %110 = arith.subf %106, %109 : vector<64x64xf32>
    %111 = math.exp %110 : vector<64x64xf32>
    %cst_59 = arith.constant 1.000000e+00 : f32
    %112 = vector.broadcast %cst_59 : f32 to vector<64x1xf32>
    %cst_60 = arith.constant dense<0.000000e+00> : vector<64x1xf32>
    %113 = tpu.matmul %111, %112, %cst_60 {dimension_numbers = #tpu.dot_dimension_numbers<[1], [0], [0], [1], [0, 0, 1, 1], [], []>} : vector<64x64xf32>, vector<64x1xf32>, vector<64x1xf32> -> vector<64x1xf32>
    %114 = tpu.reciprocal %113 {approx = true} : vector<64x1xf32> -> vector<64x1xf32>
    %115 = vector.broadcast %114 : vector<64x1xf32> to vector<64x64xf32>
    %116 = arith.mulf %111, %115 : vector<64x64xf32>
    %cst_61 = arith.constant dense<0.000000e+00> : vector<64x8xf32>
    %117 = tpu.matmul %116, %101, %cst_61 {dimension_numbers = #tpu.dot_dimension_numbers<[1], [0], [0], [1], [0, 0, 1, 1], [], []>} : vector<64x64xf32>, vector<64x8xf32>, vector<64x8xf32> -> vector<64x8xf32>
    %118 = vector.extract_strided_slice %1 {offsets = [4, 0], sizes = [1, 32], strides = [1, 1]} : vector<8x32xf32> to vector<1x32xf32>
    %119 = vector.shape_cast %118 : vector<1x32xf32> to vector<1x32xf32>
    %120 = vector.broadcast %119 : vector<1x32xf32> to vector<16x32xf32>
    %121 = vector.extract_strided_slice %117 {offsets = [0, 0], sizes = [16, 8], strides = [1, 1]} : vector<64x8xf32> to vector<16x8xf32>
    %c0_62 = arith.constant 0 : index
    %c0_63 = arith.constant 0 : index
    %c0_64 = arith.constant 0 : index
    %122 = vector.load %arg4[%c0_62, %c0_63, %c0_64] : memref<4x8x32xf32, #tpu.memory_space<vmem>>, vector<1x8x32xf32>
    %123 = vector.shape_cast %122 : vector<1x8x32xf32> to vector<8x32xf32>
    %cst_65 = arith.constant dense<0.000000e+00> : vector<16x32xf32>
    %124 = tpu.matmul %121, %123, %cst_65 {dimension_numbers = #tpu.dot_dimension_numbers<[1], [0], [0], [1], [0, 0, 1, 1], [], []>} : vector<16x8xf32>, vector<8x32xf32>, vector<16x32xf32> -> vector<16x32xf32>
    %125 = arith.addf %120, %124 : vector<16x32xf32>
    %126 = vector.extract_strided_slice %117 {offsets = [16, 0], sizes = [16, 8], strides = [1, 1]} : vector<64x8xf32> to vector<16x8xf32>
    %c1_66 = arith.constant 1 : index
    %c0_67 = arith.constant 0 : index
    %c0_68 = arith.constant 0 : index
    %127 = vector.load %arg4[%c1_66, %c0_67, %c0_68] : memref<4x8x32xf32, #tpu.memory_space<vmem>>, vector<1x8x32xf32>
    %128 = vector.shape_cast %127 : vector<1x8x32xf32> to vector<8x32xf32>
    %cst_69 = arith.constant dense<0.000000e+00> : vector<16x32xf32>
    %129 = tpu.matmul %126, %128, %cst_69 {dimension_numbers = #tpu.dot_dimension_numbers<[1], [0], [0], [1], [0, 0, 1, 1], [], []>} : vector<16x8xf32>, vector<8x32xf32>, vector<16x32xf32> -> vector<16x32xf32>
    %130 = arith.addf %125, %129 : vector<16x32xf32>
    %131 = vector.extract_strided_slice %117 {offsets = [32, 0], sizes = [16, 8], strides = [1, 1]} : vector<64x8xf32> to vector<16x8xf32>
    %c2_70 = arith.constant 2 : index
    %c0_71 = arith.constant 0 : index
    %c0_72 = arith.constant 0 : index
    %132 = vector.load %arg4[%c2_70, %c0_71, %c0_72] : memref<4x8x32xf32, #tpu.memory_space<vmem>>, vector<1x8x32xf32>
    %133 = vector.shape_cast %132 : vector<1x8x32xf32> to vector<8x32xf32>
    %cst_73 = arith.constant dense<0.000000e+00> : vector<16x32xf32>
    %134 = tpu.matmul %131, %133, %cst_73 {dimension_numbers = #tpu.dot_dimension_numbers<[1], [0], [0], [1], [0, 0, 1, 1], [], []>} : vector<16x8xf32>, vector<8x32xf32>, vector<16x32xf32> -> vector<16x32xf32>
    %135 = arith.addf %130, %134 : vector<16x32xf32>
    %136 = vector.extract_strided_slice %117 {offsets = [48, 0], sizes = [16, 8], strides = [1, 1]} : vector<64x8xf32> to vector<16x8xf32>
    %c3_74 = arith.constant 3 : index
    %c0_75 = arith.constant 0 : index
    %c0_76 = arith.constant 0 : index
    %137 = vector.load %arg4[%c3_74, %c0_75, %c0_76] : memref<4x8x32xf32, #tpu.memory_space<vmem>>, vector<1x8x32xf32>
    %138 = vector.shape_cast %137 : vector<1x8x32xf32> to vector<8x32xf32>
    %cst_77 = arith.constant dense<0.000000e+00> : vector<16x32xf32>
    %139 = tpu.matmul %136, %138, %cst_77 {dimension_numbers = #tpu.dot_dimension_numbers<[1], [0], [0], [1], [0, 0, 1, 1], [], []>} : vector<16x8xf32>, vector<8x32xf32>, vector<16x32xf32> -> vector<16x32xf32>
    %140 = arith.addf %135, %139 : vector<16x32xf32>
    %141 = arith.addf %0, %140 : vector<16x32xf32>
    %142 = vector.extract_strided_slice %1 {offsets = [2, 0], sizes = [1, 32], strides = [1, 1]} : vector<8x32xf32> to vector<1x32xf32>
    %143 = vector.extract_strided_slice %1 {offsets = [3, 0], sizes = [1, 32], strides = [1, 1]} : vector<8x32xf32> to vector<1x32xf32>
    %144 = vector.shape_cast %142 : vector<1x32xf32> to vector<1x32xf32>
    %145 = vector.broadcast %144 : vector<1x32xf32> to vector<16x32xf32>
    %146 = vector.shape_cast %143 : vector<1x32xf32> to vector<1x32xf32>
    %147 = vector.broadcast %146 : vector<1x32xf32> to vector<16x32xf32>
    %cst_78 = arith.constant dense<0.000000e+00> : vector<16x2xf32>
    %148 = tpu.matmul %141, %2, %cst_78 {dimension_numbers = #tpu.dot_dimension_numbers<[1], [0], [0], [1], [0, 0, 1, 1], [], []>} : vector<16x32xf32>, vector<32x2xf32>, vector<16x2xf32> -> vector<16x2xf32>
    %149 = arith.mulf %141, %141 : vector<16x32xf32>
    %cst_79 = arith.constant dense<0.000000e+00> : vector<16x2xf32>
    %150 = tpu.matmul %149, %2, %cst_79 {dimension_numbers = #tpu.dot_dimension_numbers<[1], [0], [0], [1], [0, 0, 1, 1], [], []>} : vector<16x32xf32>, vector<32x2xf32>, vector<16x2xf32> -> vector<16x2xf32>
    %cst_80 = arith.constant 0.000000e+00 : f32
    %151 = vector.broadcast %cst_80 : f32 to vector<16x32xf32>
    %c0_81 = arith.constant 0 : index
    %152 = memref.load %arg1[%c0_81] : memref<2xf32, #tpu.memory_space<smem>>
    %153 = vector.extract_strided_slice %148 {offsets = [0, 0], sizes = [16, 1], strides = [1, 1]} : vector<16x2xf32> to vector<16x1xf32>
    %cst_82 = arith.constant 6.250000e-02 : f32
    %154 = vector.broadcast %cst_82 : f32 to vector<16x1xf32>
    %155 = arith.mulf %153, %154 : vector<16x1xf32>
    %156 = vector.extract_strided_slice %150 {offsets = [0, 0], sizes = [16, 1], strides = [1, 1]} : vector<16x2xf32> to vector<16x1xf32>
    %cst_83 = arith.constant 6.250000e-02 : f32
    %157 = vector.broadcast %cst_83 : f32 to vector<16x1xf32>
    %158 = arith.mulf %156, %157 : vector<16x1xf32>
    %159 = arith.mulf %155, %155 : vector<16x1xf32>
    %160 = arith.subf %158, %159 : vector<16x1xf32>
    %cst_84 = arith.constant 0.000000e+00 : f32
    %161 = vector.broadcast %cst_84 : f32 to vector<16x1xf32>
    %162 = arith.maximumf %160, %161 : vector<16x1xf32>
    %163 = vector.broadcast %155 : vector<16x1xf32> to vector<16x32xf32>
    %164 = arith.subf %141, %163 : vector<16x32xf32>
    %cst_85 = arith.constant 9.99999974E-6 : f32
    %165 = vector.broadcast %cst_85 : f32 to vector<16x1xf32>
    %166 = arith.addf %162, %165 : vector<16x1xf32>
    %167 = math.rsqrt %166 : vector<16x1xf32>
    %168 = vector.broadcast %167 : vector<16x1xf32> to vector<16x32xf32>
    %169 = arith.mulf %164, %168 : vector<16x32xf32>
    %170 = arith.mulf %169, %145 : vector<16x32xf32>
    %171 = arith.addf %170, %147 : vector<16x32xf32>
    %172 = arith.mulf %171, %5 : vector<16x32xf32>
    %173 = vector.broadcast %152 : f32 to vector<16x32xf32>
    %174 = arith.mulf %173, %172 : vector<16x32xf32>
    %175 = arith.addf %151, %174 : vector<16x32xf32>
    %c1_86 = arith.constant 1 : index
    %176 = memref.load %arg1[%c1_86] : memref<2xf32, #tpu.memory_space<smem>>
    %177 = vector.extract_strided_slice %148 {offsets = [0, 1], sizes = [16, 1], strides = [1, 1]} : vector<16x2xf32> to vector<16x1xf32>
    %cst_87 = arith.constant 3.125000e-02 : f32
    %178 = vector.broadcast %cst_87 : f32 to vector<16x1xf32>
    %179 = arith.mulf %177, %178 : vector<16x1xf32>
    %180 = vector.extract_strided_slice %150 {offsets = [0, 1], sizes = [16, 1], strides = [1, 1]} : vector<16x2xf32> to vector<16x1xf32>
    %cst_88 = arith.constant 3.125000e-02 : f32
    %181 = vector.broadcast %cst_88 : f32 to vector<16x1xf32>
    %182 = arith.mulf %180, %181 : vector<16x1xf32>
    %183 = arith.mulf %179, %179 : vector<16x1xf32>
    %184 = arith.subf %182, %183 : vector<16x1xf32>
    %cst_89 = arith.constant 0.000000e+00 : f32
    %185 = vector.broadcast %cst_89 : f32 to vector<16x1xf32>
    %186 = arith.maximumf %184, %185 : vector<16x1xf32>
    %187 = vector.broadcast %179 : vector<16x1xf32> to vector<16x32xf32>
    %188 = arith.subf %141, %187 : vector<16x32xf32>
    %cst_90 = arith.constant 9.99999974E-6 : f32
    %189 = vector.broadcast %cst_90 : f32 to vector<16x1xf32>
    %190 = arith.addf %186, %189 : vector<16x1xf32>
    %191 = math.rsqrt %190 : vector<16x1xf32>
    %192 = vector.broadcast %191 : vector<16x1xf32> to vector<16x32xf32>
    %193 = arith.mulf %188, %192 : vector<16x32xf32>
    %194 = arith.mulf %193, %145 : vector<16x32xf32>
    %195 = arith.addf %194, %147 : vector<16x32xf32>
    %196 = vector.broadcast %176 : f32 to vector<16x32xf32>
    %197 = arith.mulf %196, %195 : vector<16x32xf32>
    %198 = arith.addf %175, %197 : vector<16x32xf32>
    %c0_91 = arith.constant 0 : index
    %c0_92 = arith.constant 0 : index
    %199 = vector.load %arg5[%c0_91, %c0_92] : memref<32x128xf32, #tpu.memory_space<vmem>>, vector<32x128xf32>
    %cst_93 = arith.constant dense<0.000000e+00> : vector<16x128xf32>
    %200 = tpu.matmul %198, %199, %cst_93 {dimension_numbers = #tpu.dot_dimension_numbers<[1], [0], [0], [1], [0, 0, 1, 1], [], []>} : vector<16x32xf32>, vector<32x128xf32>, vector<16x128xf32> -> vector<16x128xf32>
    %c0_94 = arith.constant 0 : index
    %c0_95 = arith.constant 0 : index
    %201 = vector.load %arg6[%c0_94, %c0_95] : memref<1x128xf32, #tpu.memory_space<vmem>>, vector<1x128xf32>
    %202 = vector.broadcast %201 : vector<1x128xf32> to vector<16x128xf32>
    %203 = arith.addf %200, %202 : vector<16x128xf32>
    %cst_96 = arith.constant 0.000000e+00 : f32
    %204 = vector.broadcast %cst_96 : f32 to vector<16x128xf32>
    %205 = arith.maximumf %203, %204 : vector<16x128xf32>
    %c0_97 = arith.constant 0 : index
    %c0_98 = arith.constant 0 : index
    %206 = vector.load %arg7[%c0_97, %c0_98] : memref<128x32xf32, #tpu.memory_space<vmem>>, vector<128x32xf32>
    %cst_99 = arith.constant dense<0.000000e+00> : vector<16x32xf32>
    %207 = tpu.matmul %205, %206, %cst_99 {dimension_numbers = #tpu.dot_dimension_numbers<[1], [0], [0], [1], [0, 0, 1, 1], [], []>} : vector<16x128xf32>, vector<128x32xf32>, vector<16x32xf32> -> vector<16x32xf32>
    %208 = vector.extract_strided_slice %1 {offsets = [5, 0], sizes = [1, 32], strides = [1, 1]} : vector<8x32xf32> to vector<1x32xf32>
    %209 = vector.broadcast %208 : vector<1x32xf32> to vector<16x32xf32>
    %210 = arith.addf %207, %209 : vector<16x32xf32>
    %211 = arith.addf %141, %210 : vector<16x32xf32>
    %c0_100 = arith.constant 0 : index
    %c0_101 = arith.constant 0 : index
    %212 = vector.load %arg11[%c0_100, %c0_101] : memref<16x32xf32, #tpu.memory_space<vmem>>, vector<16x32xf32>
    tpu.vector_store %arg11[%c0_100, %c0_101], %211 {strides = array<i32>} : memref<16x32xf32, #tpu.memory_space<vmem>>, vector<16x32xf32>,
    return
  }
  func.func @transform_0(%arg0: i32) -> i32 {
    %c0_i32 = arith.constant 0 : i32
    %c0_i32_0 = arith.constant 0 : i32
    return %c0_i32 : i32
  }
  func.func @transform_1(%arg0: i32) -> (i32, i32) {
    %c0_i32 = arith.constant 0 : i32
    %c0_i32_0 = arith.constant 0 : i32
    return %arg0, %c0_i32 : i32, i32
  }
  func.func @transform_2(%arg0: i32) -> (i32, i32, i32) {
    %c0_i32 = arith.constant 0 : i32
    %c0_i32_0 = arith.constant 0 : i32
    %c0_i32_1 = arith.constant 0 : i32
    %c0_i32_2 = arith.constant 0 : i32
    return %c0_i32, %c0_i32_0, %c0_i32_1 : i32, i32, i32
  }
  func.func @transform_3(%arg0: i32) -> (i32, i32, i32) {
    %c0_i32 = arith.constant 0 : i32
    %c0_i32_0 = arith.constant 0 : i32
    %c0_i32_1 = arith.constant 0 : i32
    %c0_i32_2 = arith.constant 0 : i32
    return %c0_i32, %c0_i32_0, %c0_i32_1 : i32, i32, i32
  }
  func.func @transform_4(%arg0: i32) -> (i32, i32) {
    %c0_i32 = arith.constant 0 : i32
    %c0_i32_0 = arith.constant 0 : i32
    %c0_i32_1 = arith.constant 0 : i32
    return %c0_i32, %c0_i32_0 : i32, i32
  }
  func.func @transform_5(%arg0: i32) -> (i32, i32) {
    %c0_i32 = arith.constant 0 : i32
    %c0_i32_0 = arith.constant 0 : i32
    %c0_i32_1 = arith.constant 0 : i32
    return %c0_i32, %c0_i32_0 : i32, i32
  }
  func.func @transform_6(%arg0: i32) -> (i32, i32) {
    %c0_i32 = arith.constant 0 : i32
    %c0_i32_0 = arith.constant 0 : i32
    %c0_i32_1 = arith.constant 0 : i32
    return %c0_i32, %c0_i32_0 : i32, i32
  }
  func.func @transform_7(%arg0: i32) -> (i32, i32) {
    %c0_i32 = arith.constant 0 : i32
    %c0_i32_0 = arith.constant 0 : i32
    %c0_i32_1 = arith.constant 0 : i32
    return %c0_i32, %c0_i32_0 : i32, i32
  }
  func.func @transform_8(%arg0: i32) -> (i32, i32) {
    %c0_i32 = arith.constant 0 : i32
    %c0_i32_0 = arith.constant 0 : i32
    %c0_i32_1 = arith.constant 0 : i32
    return %c0_i32, %c0_i32_0 : i32, i32
  }
  func.func @transform_9(%arg0: i32) -> (i32, i32) {
    %c0_i32 = arith.constant 0 : i32
    %c0_i32_0 = arith.constant 0 : i32
    %c0_i32_1 = arith.constant 0 : i32
    return %c0_i32, %c0_i32_0 : i32, i32
  }
  func.func @transform_10(%arg0: i32) -> (i32, i32) {
    %c0_i32 = arith.constant 0 : i32
    %c0_i32_0 = arith.constant 0 : i32
    return %arg0, %c0_i32 : i32, i32
  }
}

</mosaic_0001>

<llo_original>
// kernel: _mixed_block_pallas.1
$region0: #{_mixed_block_pallas.1}
  #allocation0 [shape = 'u32[]', space=smem, size = 0x4, offset = 0x4, fixed_abs, tag = 'smem constant byte address 0x4 - core index']
  #allocation1 [shape = 'u32[144,128]{1,0:T(1,128)}', space=vmem, size = 0x12000, scoped, tag = 'internal scratch']
  %s0 = inlined_call_operand.vmem [shape: f32[2], index: 0, kind: input, shape index: {}]
  %s1 = inlined_call_operand.vmem [shape: f32[16,32], index: 1, kind: input, shape index: {}]
  %s2 = inlined_call_operand.vmem [shape: f32[12,32,8], index: 2, kind: input, shape index: {}]
  %s3 = inlined_call_operand.vmem [shape: f32[4,8,32], index: 3, kind: input, shape index: {}]
  %s4 = inlined_call_operand.vmem [shape: f32[32,128], index: 4, kind: input, shape index: {}]
  %s5 = inlined_call_operand.vmem [shape: f32[1,128], index: 5, kind: input, shape index: {}]
  %s6 = inlined_call_operand.vmem [shape: f32[128,32], index: 6, kind: input, shape index: {}]
  %s7 = inlined_call_operand.vmem [shape: f32[8,32], index: 7, kind: input, shape index: {}]
  %s8 = inlined_call_operand.vmem [shape: f32[32,2], index: 8, kind: input, shape index: {}]
  %s9 = inlined_call_operand.vmem [shape: f32[64,64], index: 9, kind: input, shape index: {}]
  %s10 = inlined_call_operand.hbm [shape: f32[16,32], index: 10, kind: output, shape index: {}]
  %s11 = sld [smem:[#allocation0]]
  $region54: #{_mixed_block_pallas.1} parent=0
    _
  %s13 = ssub.s32 1, %s11
  %s14 = scalar_select 0, %s13, %s11
  $region1: #{_mixed_block_pallas.1} parent=0
    #allocation2 [shape = 'u8[512]{0}', space=smem, size = 0x200, scoped, tag = 'input window, operand 0, single buffered']
    #allocation3 [shape = 's32[1]{0}', space=sflag, size = 0x4, scoped, tag = 'scoped memory for _mixed_block_pallas.1']
    #allocation4 [shape = 's32[1]{0}', space=sflag, size = 0x4, scoped, tag = 'scoped memory for _mixed_block_pallas.1']
    #allocation5 [shape = 'u8[8192]{0}', space=vmem, size = 0x2000, scoped, tag = 'output window, operand 0, single buffered']
    %15 = vsyncpa [#allocation4], 0
    %16 = vsyncpa [#allocation3], 0
    // Predicated region
    $region2: #{_mixed_block_pallas.1} parent=1 // pred_check
      _
    $region3: #{_mixed_block_pallas.1} parent=1 // pred_check_branch
      %18 = sbr.rel (0) target = $region5
    $region4: #{_mixed_block_pallas.1} parent=1 // pred_region
      %s20 = ssub.s32 16, 16
      %21 = vsyncadd [#allocation4], %s20
      %s23 = sshll.u32 %s0, 4
      %s24 = int_to_ptr.vmem [resolvable:$true] %s23
      %26 = dma.vmem_to_smem %s24, 16, [#allocation2], [#allocation4]
    $region5: #{_mixed_block_pallas.1} parent=1 // pred_fallthru
      _
    // Predicated region
    $region6: #{_mixed_block_pallas.1} parent=1 // pred_check
      _
    $region7: #{_mixed_block_pallas.1} parent=1 // pred_check_branch
      %28 = sbr.rel (0) target = $region9
    $region8: #{_mixed_block_pallas.1} parent=1 // pred_region
      _
    $region9: #{_mixed_block_pallas.1} parent=1 // pred_fallthru
      _
    // Predicated region
    $region10: #{_mixed_block_pallas.1} parent=1 // pred_check
      _
    $region11: #{_mixed_block_pallas.1} parent=1 // pred_check_branch
      %30 = sbr.rel (0) target = $region13
    $region12: #{_mixed_block_pallas.1} parent=1 // pred_region
      _
    $region13: #{_mixed_block_pallas.1} parent=1 // pred_fallthru
      _
    // Predicated region
    $region14: #{_mixed_block_pallas.1} parent=1 // pred_check
      _
    $region15: #{_mixed_block_pallas.1} parent=1 // pred_check_branch
      %32 = sbr.rel (0) target = $region17
    $region16: #{_mixed_block_pallas.1} parent=1 // pred_region
      _
    $region17: #{_mixed_block_pallas.1} parent=1 // pred_fallthru
      _
    // Predicated region
    $region18: #{_mixed_block_pallas.1} parent=1 // pred_check
      _
    $region19: #{_mixed_block_pallas.1} parent=1 // pred_check_branch
      %34 = sbr.rel (0) target = $region21
    $region20: #{_mixed_block_pallas.1} parent=1 // pred_region
      _
    $region21: #{_mixed_block_pallas.1} parent=1 // pred_fallthru
      _
    // Predicated region
    $region22: #{_mixed_block_pallas.1} parent=1 // pred_check
      _
    $region23: #{_mixed_block_pallas.1} parent=1 // pred_check_branch
      %36 = sbr.rel (0) target = $region25
    $region24: #{_mixed_block_pallas.1} parent=1 // pred_region
      _
    $region25: #{_mixed_block_pallas.1} parent=1 // pred_fallthru
      _
    // Predicated region
    $region26: #{_mixed_block_pallas.1} parent=1 // pred_check
      _
    $region27: #{_mixed_block_pallas.1} parent=1 // pred_check_branch
      %38 = sbr.rel (0) target = $region29
    $region28: #{_mixed_block_pallas.1} parent=1 // pred_region
      _
    $region29: #{_mixed_block_pallas.1} parent=1 // pred_fallthru
      _
    // Predicated region
    $region30: #{_mixed_block_pallas.1} parent=1 // pred_check
      _
    $region31: #{_mixed_block_pallas.1} parent=1 // pred_check_branch
      %40 = sbr.rel (0) target = $region33
    $region32: #{_mixed_block_pallas.1} parent=1 // pred_region
      _
    $region33: #{_mixed_block_pallas.1} parent=1 // pred_fallthru
      _
    // Predicated region
    $region34: #{_mixed_block_pallas.1} parent=1 // pred_check
      _
    $region35: #{_mixed_block_pallas.1} parent=1 // pred_check_branch
      %42 = sbr.rel (0) target = $region37
    $region36: #{_mixed_block_pallas.1} parent=1 // pred_region
      _
    $region37: #{_mixed_block_pallas.1} parent=1 // pred_fallthru
      _
    // Predicated region
    $region38: #{_mixed_block_pallas.1} parent=1 // pred_check
      _
    $region39: #{_mixed_block_pallas.1} parent=1 // pred_check_branch
      %44 = sbr.rel (0) target = $region41
    $region40: #{_mixed_block_pallas.1} parent=1 // pred_region
      _
    $region41: #{_mixed_block_pallas.1} parent=1 // pred_fallthru
      _
    // Predicated region
    $region42: #{_mixed_block_pallas.1} parent=1 // pred_check
      _
    $region43: #{_mixed_block_pallas.1} parent=1 // pred_check_branch
      %46 = sbr.rel (0) target = $region45
    $region44: #{_mixed_block_pallas.1} parent=1 // pred_region
      %47 = dma.done [#allocation4], 16
    $region45: #{_mixed_block_pallas.1} parent=1 // pred_fallthru
      _
    %48 = sfence
    %v49 = vld [vmem:[%s1] sm:$0xff]
    %v50 = vld [vmem:[%s1 + $0x8] sm:$0xff]
    %v51 = vld [vmem:[%s7] sm:$0xff]
    %v52 = vld [vmem:[%s8] sm:$0xff]
    %v53 = vld [vmem:[%s8 + $0x8] sm:$0xff]
    %v54 = vld [vmem:[%s8 + $0x10] sm:$0xff]
    %v55 = vld [vmem:[%s8 + $0x18] sm:$0xff]
    %v56 = vlaneseq
    %v57 = vshrl.u32 %v56, 7
    %v58 = vsub.s32 6, %v57
    %v59 = vrot.slane %v51, %v58
    %v60 = vlaneseq
    %v61 = vshrl.u32 %v60, 7
    %v62 = vsub.s32 0, %v61
    %v63 = vrot.slane %v51, %v62
    %v64 = vlaneseq
    %v65 = vshrl.u32 %v64, 7
    %v66 = vsub.s32 1, %v65
    %v67 = vrot.slane %v51, %v66
    %vm68 = vcmask 261120
    %v70 = vsel %vm68, %v49, 0
    %v73 = vsel %vm68, %v50, 0
    %75 = vmatprep.subr.mxu0 0.0
    %76 = vmatpush1.msra.mxu0 %v52
    %77 = vmatprep.subr.mxu0 0.0
    %78 = vmatpush1.msra.mxu0 %v53
    %79 = vmatprep.subr.mxu0 0.0
    %80 = vmatpush1.msra.mxu0 %v54
    %81 = vmatprep.subr.mxu0 0.0
    %82 = vmatpush1.msra.mxu0 %v55
    %83 = vmatprep.subr.mxu0 0.0
    %84 = vmatpush1.msra.mxu0 0.0
    %85 = vmatprep.subr.mxu0 0.0
    %86 = vmatpush1.msra.mxu0 0.0
    %87 = vmatprep.subr.mxu0 0.0
    %88 = vmatpush1.msra.mxu0 0.0
    %89 = vmatprep.subr.mxu0 0.0
    %90 = vmatpush1.msra.mxu0 0.0
    %91 = vmatprep.subr.mxu0 0.0
    %92 = vmatpush1.msra.mxu0 0.0
    %93 = vmatprep.subr.mxu0 0.0
    %94 = vmatpush1.msra.mxu0 0.0
    %95 = vmatprep.subr.mxu0 0.0
    %96 = vmatpush1.msra.mxu0 0.0
    %97 = vmatprep.subr.mxu0 0.0
    %98 = vmatpush1.msra.mxu0 0.0
    %99 = vmatprep.subr.mxu0 0.0
    %100 = vmatpush1.msra.mxu0 0.0
    %101 = vmatprep.subr.mxu0 0.0
    %102 = vmatpush1.msra.mxu0 0.0
    %103 = vmatprep.subr.mxu0 0.0
    %104 = vmatpush1.msra.mxu0 0.0
    %105 = vmatprep.subr.mxu0 0.0
    %106 = vmatpush1.msra.mxu0 0.0
    %107 = vmatprep.subr.mxu0 0.0
    %108 = vmatpush1.msra.mxu0 0.0
    %109 = vmatprep.subr.mxu0 0.0
    %110 = vmatpush1.msra.mxu0 0.0
    %111 = vmatprep.subr.mxu0 0.0
    %112 = vmatpush1.msra.mxu0 0.0
    %113 = vmatprep.subr.mxu0 0.0
    %114 = vmatpush1.msra.mxu0 0.0
    %115 = vmatprep.subr.mxu0 0.0
    %116 = vmatpush1.msra.mxu0 0.0
    %117 = vmatprep.subr.mxu0 0.0
    %118 = vmatpush1.msra.mxu0 0.0
    %119 = vmatprep.subr.mxu0 0.0
    %120 = vmatpush1.msra.mxu0 0.0
    %121 = vmatprep.subr.mxu0 0.0
    %122 = vmatpush1.msra.mxu0 0.0
    %123 = vmatprep.subr.mxu0 0.0
    %124 = vmatpush1.msra.mxu0 0.0
    %125 = vmatprep.subr.mxu0 0.0
    %126 = vmatpush1.msra.mxu0 0.0
    %127 = vmatprep.subr.mxu0 0.0
    %128 = vmatpush1.msra.mxu0 0.0
    %129 = vmatprep.subr.mxu0 0.0
    %130 = vmatpush1.msra.mxu0 0.0
    %131 = vmatprep.subr.mxu0 0.0
    %132 = vmatpush1.msra.mxu0 0.0
    %133 = vmatprep.subr.mxu0 0.0
    %134 = vmatpush1.msra.mxu0 0.0
    %135 = vmatprep.subr.mxu0 0.0
    %136 = vmatpush1.msra.mxu0 0.0
    %137 = vmatprep.subr.mxu0 0.0
    %138 = vmatpush1.msra.mxu0 0.0
    %139 = vmatprep.mubr.f32.mxu0 0.0
    %140 = vmatmul.mubr.f32.gmra.mrb[0].mxu0 %v70
    %v141 = vpop.f32.mrb[0].mxu0
    %v142 = vadd.f32 0.0, %v141
    %v143 = vpop.f32.mrb[0].mxu0
    %144 = vmatprep.mubr.f32.mxu0 0.0
    %145 = vmatmul.mubr.f32.gmra.mrb[0].mxu0 %v73
    %v146 = vpop.f32.mrb[0].mxu0
    %v147 = vadd.f32 0.0, %v146
    %v148 = vpop.f32.mrb[0].mxu0
    %149 = vdwg.mxu0
    %v150 = vmul.f32 %v49, %v49
    %v151 = vmul.f32 %v50, %v50
    %v153 = vsel %vm68, %v150, 0
    %v156 = vsel %vm68, %v151, 0
    %158 = vmatprep.subr.mxu0 0.0
    %159 = vmatpush1.msra.mxu0 %v52
    %160 = vmatprep.subr.mxu0 0.0
    %161 = vmatpush1.msra.mxu0 %v53
    %162 = vmatprep.subr.mxu0 0.0
    %163 = vmatpush1.msra.mxu0 %v54
    %164 = vmatprep.subr.mxu0 0.0
    %165 = vmatpush1.msra.mxu0 %v55
    %166 = vmatprep.subr.mxu0 0.0
    %167 = vmatpush1.msra.mxu0 0.0
    %168 = vmatprep.subr.mxu0 0.0
    %169 = vmatpush1.msra.mxu0 0.0
    %170 = vmatprep.subr.mxu0 0.0
    %171 = vmatpush1.msra.mxu0 0.0
    %172 = vmatprep.subr.mxu0 0.0
    %173 = vmatpush1.msra.mxu0 0.0
    %174 = vmatprep.subr.mxu0 0.0
    %175 = vmatpush1.msra.mxu0 0.0
    %176 = vmatprep.subr.mxu0 0.0
    %177 = vmatpush1.msra.mxu0 0.0
    %178 = vmatprep.subr.mxu0 0.0
    %179 = vmatpush1.msra.mxu0 0.0
    %180 = vmatprep.subr.mxu0 0.0
    %181 = vmatpush1.msra.mxu0 0.0
    %182 = vmatprep.subr.mxu0 0.0
    %183 = vmatpush1.msra.mxu0 0.0
    %184 = vmatprep.subr.mxu0 0.0
    %185 = vmatpush1.msra.mxu0 0.0
    %186 = vmatprep.subr.mxu0 0.0
    %187 = vmatpush1.msra.mxu0 0.0
    %188 = vmatprep.subr.mxu0 0.0
    %189 = vmatpush1.msra.mxu0 0.0
    %190 = vmatprep.subr.mxu0 0.0
    %191 = vmatpush1.msra.mxu0 0.0
    %192 = vmatprep.subr.mxu0 0.0
    %193 = vmatpush1.msra.mxu0 0.0
    %194 = vmatprep.subr.mxu0 0.0
    %195 = vmatpush1.msra.mxu0 0.0
    %196 = vmatprep.subr.mxu0 0.0
    %197 = vmatpush1.msra.mxu0 0.0
    %198 = vmatprep.subr.mxu0 0.0
    %199 = vmatpush1.msra.mxu0 0.0
    %200 = vmatprep.subr.mxu0 0.0
    %201 = vmatpush1.msra.mxu0 0.0
    %202 = vmatprep.subr.mxu0 0.0
    %203 = vmatpush1.msra.mxu0 0.0
    %204 = vmatprep.subr.mxu0 0.0
    %205 = vmatpush1.msra.mxu0 0.0
    %206 = vmatprep.subr.mxu0 0.0
    %207 = vmatpush1.msra.mxu0 0.0
    %208 = vmatprep.subr.mxu0 0.0
    %209 = vmatpush1.msra.mxu0 0.0
    %210 = vmatprep.subr.mxu0 0.0
    %211 = vmatpush1.msra.mxu0 0.0
    %212 = vmatprep.subr.mxu0 0.0
    %213 = vmatpush1.msra.mxu0 0.0
    %214 = vmatprep.subr.mxu0 0.0
    %215 = vmatpush1.msra.mxu0 0.0
    %216 = vmatprep.subr.mxu0 0.0
    %217 = vmatpush1.msra.mxu0 0.0
    %218 = vmatprep.subr.mxu0 0.0
    %219 = vmatpush1.msra.mxu0 0.0
    %220 = vmatprep.subr.mxu0 0.0
    %221 = vmatpush1.msra.mxu0 0.0
    %222 = vmatprep.mubr.f32.mxu0 0.0
    %223 = vmatmul.mubr.f32.gmra.mrb[0].mxu0 %v153
    %v224 = vpop.f32.mrb[0].mxu0
    %v225 = vadd.f32 0.0, %v224
    %v226 = vpop.f32.mrb[0].mxu0
    %227 = vmatprep.mubr.f32.mxu0 0.0
    %228 = vmatmul.mubr.f32.gmra.mrb[0].mxu0 %v156
    %v229 = vpop.f32.mrb[0].mxu0
    %v230 = vadd.f32 0.0, %v229
    %v231 = vpop.f32.mrb[0].mxu0
    %232 = vdwg.mxu0
    %s233 = sld [smem:[#allocation2]]
    %v234 = vmul.f32 %v142, 0.0625
    %v235 = vmul.f32 %v147, 0.0625
    %v236 = vmul.f32 %v225, 0.0625
    %v237 = vmul.f32 %v230, 0.0625
    %v238 = vmul.f32 %v234, %v234
    %v239 = vmul.f32 %v235, %v235
    %v240 = vsub.f32 %v236, %v238
    %v241 = vsub.f32 %v237, %v239
    %v242 = vmax.f32 %v240, 0.0
    %v243 = vmax.f32 %v241, 0.0
    %245 = vset.pattern.permute.xlu0 0
    %246 = vperm.xlu0 %245, %v234
    %v247 = vpop.permute.xlu0 %246
    %250 = vset.pattern.permute.xlu0 0
    %251 = vperm.xlu0 %250, %v235
    %v252 = vpop.permute.xlu0 %251
    %v254 = vsub.f32 %v49, %v247
    %v255 = vsub.f32 %v50, %v252
    %v256 = vadd.f32 %v242, 1e-05
    %v257 = vadd.f32 %v243, 1e-05
    %v258 = vrsqrt.pop %v256
    %v259 = vrsqrt.pop %v257
    %261 = vset.pattern.permute.xlu0 0
    %262 = vperm.xlu0 %261, %v258
    %v263 = vpop.permute.xlu0 %262
    %266 = vset.pattern.permute.xlu0 0
    %267 = vperm.xlu0 %266, %v259
    %v268 = vpop.permute.xlu0 %267
    %v270 = vmul.f32 %v254, %v263
    %v271 = vmul.f32 %v255, %v268
    %v272 = vmul.f32 %v270, %v63
    %v273 = vmul.f32 %v271, %v63
    %v274 = vadd.f32 %v272, %v67
    %v275 = vadd.f32 %v273, %v67
    %v276 = vmul.f32 %v274, %v59
    %v277 = vmul.f32 %v275, %v59
    %v278 = vstv %s233
    %v279 = vmul.f32 %v278, %v276
    %v280 = vmul.f32 %v278, %v277
    %v281 = vadd.f32 %v279, 0.0
    %v282 = vadd.f32 %v280, 0.0
    %s283 = sld [smem:[#allocation2 + $0x1]]
    %v284 = vmul.f32 %v142, 0.03125
    %v285 = vmul.f32 %v147, 0.03125
    %v286 = vmul.f32 %v225, 0.03125
    %v287 = vmul.f32 %v230, 0.03125
    %v288 = vmul.f32 %v284, %v284
    %v289 = vmul.f32 %v285, %v285
    %v290 = vsub.f32 %v286, %v288
    %v291 = vsub.f32 %v287, %v289
    %v292 = vmax.f32 %v290, 0.0
    %v293 = vmax.f32 %v291, 0.0
    %295 = vset.pattern.permute.xlu0 1
    %296 = vperm.xlu0 %295, %v284
    %v297 = vpop.permute.xlu0 %296
    %300 = vset.pattern.permute.xlu0 1
    %301 = vperm.xlu0 %300, %v285
    %v302 = vpop.permute.xlu0 %301
    %v304 = vsub.f32 %v49, %v297
    %v305 = vsub.f32 %v50, %v302
    %v306 = vadd.f32 %v292, 1e-05
    %v307 = vadd.f32 %v293, 1e-05
    %v308 = vrsqrt.pop %v306
    %v309 = vrsqrt.pop %v307
    %311 = vset.pattern.permute.xlu0 1
    %312 = vperm.xlu0 %311, %v308
    %v313 = vpop.permute.xlu0 %312
    %316 = vset.pattern.permute.xlu0 1
    %317 = vperm.xlu0 %316, %v309
    %v318 = vpop.permute.xlu0 %317
    %v320 = vmul.f32 %v304, %v313
    %v321 = vmul.f32 %v305, %v318
    %v322 = vmul.f32 %v320, %v63
    %v323 = vmul.f32 %v321, %v63
    %v324 = vadd.f32 %v322, %v67
    %v325 = vadd.f32 %v323, %v67
    %v326 = vstv %s283
    %v327 = vmul.f32 %v326, %v324
    %v328 = vmul.f32 %v326, %v325
    %v329 = vadd.f32 %v281, %v327
    %v330 = vadd.f32 %v282, %v328
    %v331 = vld [vmem:[%s2] sm:$0xff]
    %v332 = vld [vmem:[%s2 + $0x8] sm:$0xff]
    %v333 = vld [vmem:[%s2 + $0x10] sm:$0xff]
    %v334 = vld [vmem:[%s2 + $0x18] sm:$0xff]
    %v336 = vsel %vm68, %v329, 0
    %v339 = vsel %vm68, %v330, 0
    %341 = vmatprep.subr.mxu0 0.0
    %342 = vmatpush1.msra.mxu0 %v331
    %343 = vmatprep.subr.mxu0 0.0
    %344 = vmatpush1.msra.mxu0 %v332
    %345 = vmatprep.subr.mxu0 0.0
    %346 = vmatpush1.msra.mxu0 %v333
    %347 = vmatprep.subr.mxu0 0.0
    %348 = vmatpush1.msra.mxu0 %v334
    %349 = vmatprep.subr.mxu0 0.0
    %350 = vmatpush1.msra.mxu0 0.0
    %351 = vmatprep.subr.mxu0 0.0
    %352 = vmatpush1.msra.mxu0 0.0
    %353 = vmatprep.subr.mxu0 0.0
    %354 = vmatpush1.msra.mxu0 0.0
    %355 = vmatprep.subr.mxu0 0.0
    %356 = vmatpush1.msra.mxu0 0.0
    %357 = vmatprep.subr.mxu0 0.0
    %358 = vmatpush1.msra.mxu0 0.0
    %359 = vmatprep.subr.mxu0 0.0
    %360 = vmatpush1.msra.mxu0 0.0
    %361 = vmatprep.subr.mxu0 0.0
    %362 = vmatpush1.msra.mxu0 0.0
    %363 = vmatprep.subr.mxu0 0.0
    %364 = vmatpush1.msra.mxu0 0.0
    %365 = vmatprep.subr.mxu0 0.0
    %366 = vmatpush1.msra.mxu0 0.0
    %367 = vmatprep.subr.mxu0 0.0
    %368 = vmatpush1.msra.mxu0 0.0
    %369 = vmatprep.subr.mxu0 0.0
    %370 = vmatpush1.msra.mxu0 0.0
    %371 = vmatprep.subr.mxu0 0.0
    %372 = vmatpush1.msra.mxu0 0.0
    %373 = vmatprep.subr.mxu0 0.0
    %374 = vmatpush1.msra.mxu0 0.0
    %375 = vmatprep.subr.mxu0 0.0
    %376 = vmatpush1.msra.mxu0 0.0
    %377 = vmatprep.subr.mxu0 0.0
    %378 = vmatpush1.msra.mxu0 0.0
    %379 = vmatprep.subr.mxu0 0.0
    %380 = vmatpush1.msra.mxu0 0.0
    %381 = vmatprep.subr.mxu0 0.0
    %382 = vmatpush1.msra.mxu0 0.0
    %383 = vmatprep.subr.mxu0 0.0
    %384 = vmatpush1.msra.mxu0 0.0
    %385 = vmatprep.subr.mxu0 0.0
    %386 = vmatpush1.msra.mxu0 0.0
    %387 = vmatprep.subr.mxu0 0.0
    %388 = vmatpush1.msra.mxu0 0.0
    %389 = vmatprep.subr.mxu0 0.0
    %390 = vmatpush1.msra.mxu0 0.0
    %391 = vmatprep.subr.mxu0 0.0
    %392 = vmatpush1.msra.mxu0 0.0
    %393 = vmatprep.subr.mxu0 0.0
    %394 = vmatpush1.msra.mxu0 0.0
    %395 = vmatprep.subr.mxu0 0.0
    %396 = vmatpush1.msra.mxu0 0.0
    %397 = vmatprep.subr.mxu0 0.0
    %398 = vmatpush1.msra.mxu0 0.0
    %399 = vmatprep.subr.mxu0 0.0
    %400 = vmatpush1.msra.mxu0 0.0
    %401 = vmatprep.subr.mxu0 0.0
    %402 = vmatpush1.msra.mxu0 0.0
    %403 = vmatprep.subr.mxu0 0.0
    %404 = vmatpush1.msra.mxu0 0.0
    %405 = vmatprep.mubr.f32.mxu0 0.0
    %406 = vmatmul.mubr.f32.gmra.mrb[0].mxu0 %v336
    %v407 = vpop.f32.mrb[0].mxu0
    %v408 = vadd.f32 0.0, %v407
    %v409 = vpop.f32.mrb[0].mxu0
    %410 = vmatprep.mubr.f32.mxu0 0.0
    %411 = vmatmul.mubr.f32.gmra.mrb[0].mxu0 %v339
    %v412 = vpop.f32.mrb[0].mxu0
    %v413 = vadd.f32 0.0, %v412
    %v414 = vpop.f32.mrb[0].mxu0
    %415 = vdwg.mxu0
    %s416 = scalar_lea.vmem %s2, 32
    %v417 = vld [vmem:[%s416] sm:$0xff]
    %v418 = vld [vmem:[%s416 + $0x8] sm:$0xff]
    %v419 = vld [vmem:[%s416 + $0x10] sm:$0xff]
    %v420 = vld [vmem:[%s416 + $0x18] sm:$0xff]
    %421 = vmatprep.subr.mxu0 0.0
    %422 = vmatpush1.msra.mxu0 %v417
    %423 = vmatprep.subr.mxu0 0.0
    %424 = vmatpush1.msra.mxu0 %v418
    %425 = vmatprep.subr.mxu0 0.0
    %426 = vmatpush1.msra.mxu0 %v419
    %427 = vmatprep.subr.mxu0 0.0
    %428 = vmatpush1.msra.mxu0 %v420
    %429 = vmatprep.subr.mxu0 0.0
    %430 = vmatpush1.msra.mxu0 0.0
    %431 = vmatprep.subr.mxu0 0.0
    %432 = vmatpush1.msra.mxu0 0.0
    %433 = vmatprep.subr.mxu0 0.0
    %434 = vmatpush1.msra.mxu0 0.0
    %435 = vmatprep.subr.mxu0 0.0
    %436 = vmatpush1.msra.mxu0 0.0
    %437 = vmatprep.subr.mxu0 0.0
    %438 = vmatpush1.msra.mxu0 0.0
    %439 = vmatprep.subr.mxu0 0.0
    %440 = vmatpush1.msra.mxu0 0.0
    %441 = vmatprep.subr.mxu0 0.0
    %442 = vmatpush1.msra.mxu0 0.0
    %443 = vmatprep.subr.mxu0 0.0
    %444 = vmatpush1.msra.mxu0 0.0
    %445 = vmatprep.subr.mxu0 0.0
    %446 = vmatpush1.msra.mxu0 0.0
    %447 = vmatprep.subr.mxu0 0.0
    %448 = vmatpush1.msra.mxu0 0.0
    %449 = vmatprep.subr.mxu0 0.0
    %450 = vmatpush1.msra.mxu0 0.0
    %451 = vmatprep.subr.mxu0 0.0
    %452 = vmatpush1.msra.mxu0 0.0
    %453 = vmatprep.subr.mxu0 0.0
    %454 = vmatpush1.msra.mxu0 0.0
    %455 = vmatprep.subr.mxu0 0.0
    %456 = vmatpush1.msra.mxu0 0.0
    %457 = vmatprep.subr.mxu0 0.0
    %458 = vmatpush1.msra.mxu0 0.0
    %459 = vmatprep.subr.mxu0 0.0
    %460 = vmatpush1.msra.mxu0 0.0
    %461 = vmatprep.subr.mxu0 0.0
    %462 = vmatpush1.msra.mxu0 0.0
    %463 = vmatprep.subr.mxu0 0.0
    %464 = vmatpush1.msra.mxu0 0.0
    %465 = vmatprep.subr.mxu0 0.0
    %466 = vmatpush1.msra.mxu0 0.0
    %467 = vmatprep.subr.mxu0 0.0
    %468 = vmatpush1.msra.mxu0 0.0
    %469 = vmatprep.subr.mxu0 0.0
    %470 = vmatpush1.msra.mxu0 0.0
    %471 = vmatprep.subr.mxu0 0.0
    %472 = vmatpush1.msra.mxu0 0.0
    %473 = vmatprep.subr.mxu0 0.0
    %474 = vmatpush1.msra.mxu0 0.0
    %475 = vmatprep.subr.mxu0 0.0
    %476 = vmatpush1.msra.mxu0 0.0
    %477 = vmatprep.subr.mxu0 0.0
    %478 = vmatpush1.msra.mxu0 0.0
    %479 = vmatprep.subr.mxu0 0.0
    %480 = vmatpush1.msra.mxu0 0.0
    %481 = vmatprep.subr.mxu0 0.0
    %482 = vmatpush1.msra.mxu0 0.0
    %483 = vmatprep.subr.mxu0 0.0
    %484 = vmatpush1.msra.mxu0 0.0
    %485 = vmatprep.mubr.f32.mxu0 0.0
    %486 = vmatmul.mubr.f32.gmra.mrb[0].mxu0 %v336
    %v487 = vpop.f32.mrb[0].mxu0
    %v488 = vadd.f32 0.0, %v487
    %v489 = vpop.f32.mrb[0].mxu0
    %490 = vmatprep.mubr.f32.mxu0 0.0
    %491 = vmatmul.mubr.f32.gmra.mrb[0].mxu0 %v339
    %v492 = vpop.f32.mrb[0].mxu0
    %v493 = vadd.f32 0.0, %v492
    %v494 = vpop.f32.mrb[0].mxu0
    %495 = vdwg.mxu0
    %s496 = scalar_lea.vmem %s2, 64
    %v497 = vld [vmem:[%s496] sm:$0xff]
    %v498 = vld [vmem:[%s496 + $0x8] sm:$0xff]
    %v499 = vld [vmem:[%s496 + $0x10] sm:$0xff]
    %v500 = vld [vmem:[%s496 + $0x18] sm:$0xff]
    %501 = vmatprep.subr.mxu0 0.0
    %502 = vmatpush1.msra.mxu0 %v497
    %503 = vmatprep.subr.mxu0 0.0
    %504 = vmatpush1.msra.mxu0 %v498
    %505 = vmatprep.subr.mxu0 0.0
    %506 = vmatpush1.msra.mxu0 %v499
    %507 = vmatprep.subr.mxu0 0.0
    %508 = vmatpush1.msra.mxu0 %v500
    %509 = vmatprep.subr.mxu0 0.0
    %510 = vmatpush1.msra.mxu0 0.0
    %511 = vmatprep.subr.mxu0 0.0
    %512 = vmatpush1.msra.mxu0 0.0
    %513 = vmatprep.subr.mxu0 0.0
    %514 = vmatpush1.msra.mxu0 0.0
    %515 = vmatprep.subr.mxu0 0.0
    %516 = vmatpush1.msra.mxu0 0.0
    %517 = vmatprep.subr.mxu0 0.0
    %518 = vmatpush1.msra.mxu0 0.0
    %519 = vmatprep.subr.mxu0 0.0
    %520 = vmatpush1.msra.mxu0 0.0
    %521 = vmatprep.subr.mxu0 0.0
    %522 = vmatpush1.msra.mxu0 0.0
    %523 = vmatprep.subr.mxu0 0.0
    %524 = vmatpush1.msra.mxu0 0.0
    %525 = vmatprep.subr.mxu0 0.0
    %526 = vmatpush1.msra.mxu0 0.0
    %527 = vmatprep.subr.mxu0 0.0
    %528 = vmatpush1.msra.mxu0 0.0
    %529 = vmatprep.subr.mxu0 0.0
    %530 = vmatpush1.msra.mxu0 0.0
    %531 = vmatprep.subr.mxu0 0.0
    %532 = vmatpush1.msra.mxu0 0.0
    %533 = vmatprep.subr.mxu0 0.0
    %534 = vmatpush1.msra.mxu0 0.0
    %535 = vmatprep.subr.mxu0 0.0
    %536 = vmatpush1.msra.mxu0 0.0
    %537 = vmatprep.subr.mxu0 0.0
    %538 = vmatpush1.msra.mxu0 0.0
    %539 = vmatprep.subr.mxu0 0.0
    %540 = vmatpush1.msra.mxu0 0.0
    %541 = vmatprep.subr.mxu0 0.0
    %542 = vmatpush1.msra.mxu0 0.0
    %543 = vmatprep.subr.mxu0 0.0
    %544 = vmatpush1.msra.mxu0 0.0
    %545 = vmatprep.subr.mxu0 0.0
    %546 = vmatpush1.msra.mxu0 0.0
    %547 = vmatprep.subr.mxu0 0.0
    %548 = vmatpush1.msra.mxu0 0.0
    %549 = vmatprep.subr.mxu0 0.0
    %550 = vmatpush1.msra.mxu0 0.0
    %551 = vmatprep.subr.mxu0 0.0
    %552 = vmatpush1.msra.mxu0 0.0
    %553 = vmatprep.subr.mxu0 0.0
    %554 = vmatpush1.msra.mxu0 0.0
    %555 = vmatprep.subr.mxu0 0.0
    %556 = vmatpush1.msra.mxu0 0.0
    %557 = vmatprep.subr.mxu0 0.0
    %558 = vmatpush1.msra.mxu0 0.0
    %559 = vmatprep.subr.mxu0 0.0
    %560 = vmatpush1.msra.mxu0 0.0
    %561 = vmatprep.subr.mxu0 0.0
    %562 = vmatpush1.msra.mxu0 0.0
    %563 = vmatprep.subr.mxu0 0.0
    %564 = vmatpush1.msra.mxu0 0.0
    %565 = vmatprep.mubr.f32.mxu0 0.0
    %566 = vmatmul.mubr.f32.gmra.mrb[0].mxu0 %v336
    %v567 = vpop.f32.mrb[0].mxu0
    %v568 = vadd.f32 0.0, %v567
    %v569 = vpop.f32.mrb[0].mxu0
    %570 = vmatprep.mubr.f32.mxu0 0.0
    %571 = vmatmul.mubr.f32.gmra.mrb[0].mxu0 %v339
    %v572 = vpop.f32.mrb[0].mxu0
    %v573 = vadd.f32 0.0, %v572
    %v574 = vpop.f32.mrb[0].mxu0
    %575 = vdwg.mxu0
    %s576 = scalar_lea.vmem %s2, 96
    %v577 = vld [vmem:[%s576] sm:$0xff]
    %v578 = vld [vmem:[%s576 + $0x8] sm:$0xff]
    %v579 = vld [vmem:[%s576 + $0x10] sm:$0xff]
    %v580 = vld [vmem:[%s576 + $0x18] sm:$0xff]
    %581 = vmatprep.subr.mxu0 0.0
    %582 = vmatpush1.msra.mxu0 %v577
    %583 = vmatprep.subr.mxu0 0.0
    %584 = vmatpush1.msra.mxu0 %v578
    %585 = vmatprep.subr.mxu0 0.0
    %586 = vmatpush1.msra.mxu0 %v579
    %587 = vmatprep.subr.mxu0 0.0
    %588 = vmatpush1.msra.mxu0 %v580
    %589 = vmatprep.subr.mxu0 0.0
    %590 = vmatpush1.msra.mxu0 0.0
    %591 = vmatprep.subr.mxu0 0.0
    %592 = vmatpush1.msra.mxu0 0.0
    %593 = vmatprep.subr.mxu0 0.0
    %594 = vmatpush1.msra.mxu0 0.0
    %595 = vmatprep.subr.mxu0 0.0
    %596 = vmatpush1.msra.mxu0 0.0
    %597 = vmatprep.subr.mxu0 0.0
    %598 = vmatpush1.msra.mxu0 0.0
    %599 = vmatprep.subr.mxu0 0.0
    %600 = vmatpush1.msra.mxu0 0.0
    %601 = vmatprep.subr.mxu0 0.0
    %602 = vmatpush1.msra.mxu0 0.0
    %603 = vmatprep.subr.mxu0 0.0
    %604 = vmatpush1.msra.mxu0 0.0
    %605 = vmatprep.subr.mxu0 0.0
    %606 = vmatpush1.msra.mxu0 0.0
    %607 = vmatprep.subr.mxu0 0.0
    %608 = vmatpush1.msra.mxu0 0.0
    %609 = vmatprep.subr.mxu0 0.0
    %610 = vmatpush1.msra.mxu0 0.0
    %611 = vmatprep.subr.mxu0 0.0
    %612 = vmatpush1.msra.mxu0 0.0
    %613 = vmatprep.subr.mxu0 0.0
    %614 = vmatpush1.msra.mxu0 0.0
    %615 = vmatprep.subr.mxu0 0.0
    %616 = vmatpush1.msra.mxu0 0.0
    %617 = vmatprep.subr.mxu0 0.0
    %618 = vmatpush1.msra.mxu0 0.0
    %619 = vmatprep.subr.mxu0 0.0
    %620 = vmatpush1.msra.mxu0 0.0
    %621 = vmatprep.subr.mxu0 0.0
    %622 = vmatpush1.msra.mxu0 0.0
    %623 = vmatprep.subr.mxu0 0.0
    %624 = vmatpush1.msra.mxu0 0.0
    %625 = vmatprep.subr.mxu0 0.0
    %626 = vmatpush1.msra.mxu0 0.0
    %627 = vmatprep.subr.mxu0 0.0
    %628 = vmatpush1.msra.mxu0 0.0
    %629 = vmatprep.subr.mxu0 0.0
    %630 = vmatpush1.msra.mxu0 0.0
    %631 = vmatprep.subr.mxu0 0.0
    %632 = vmatpush1.msra.mxu0 0.0
    %633 = vmatprep.subr.mxu0 0.0
    %634 = vmatpush1.msra.mxu0 0.0
    %635 = vmatprep.subr.mxu0 0.0
    %636 = vmatpush1.msra.mxu0 0.0
    %637 = vmatprep.subr.mxu0 0.0
    %638 = vmatpush1.msra.mxu0 0.0
    %639 = vmatprep.subr.mxu0 0.0
    %640 = vmatpush1.msra.mxu0 0.0
    %641 = vmatprep.subr.mxu0 0.0
    %642 = vmatpush1.msra.mxu0 0.0
    %643 = vmatprep.subr.mxu0 0.0
    %644 = vmatpush1.msra.mxu0 0.0
    %645 = vmatprep.mubr.f32.mxu0 0.0
    %646 = vmatmul.mubr.f32.gmra.mrb[0].mxu0 %v336
    %v647 = vpop.f32.mrb[0].mxu0
    %v648 = vadd.f32 0.0, %v647
    %v649 = vpop.f32.mrb[0].mxu0
    %650 = vmatprep.mubr.f32.mxu0 0.0
    %651 = vmatmul.mubr.f32.gmra.mrb[0].mxu0 %v339
    %v652 = vpop.f32.mrb[0].mxu0
    %v653 = vadd.f32 0.0, %v652
    %v654 = vpop.f32.mrb[0].mxu0
    %655 = vdwg.mxu0
    %s656 = scalar_lea.vmem %s2, 128
    %v657 = vld [vmem:[%s656] sm:$0xff]
    %v658 = vld [vmem:[%s656 + $0x8] sm:$0xff]
    %v659 = vld [vmem:[%s656 + $0x10] sm:$0xff]
    %v660 = vld [vmem:[%s656 + $0x18] sm:$0xff]
    %661 = vmatprep.subr.mxu0 0.0
    %662 = vmatpush1.msra.mxu0 %v657
    %663 = vmatprep.subr.mxu0 0.0
    %664 = vmatpush1.msra.mxu0 %v658
    %665 = vmatprep.subr.mxu0 0.0
    %666 = vmatpush1.msra.mxu0 %v659
    %667 = vmatprep.subr.mxu0 0.0
    %668 = vmatpush1.msra.mxu0 %v660
    %669 = vmatprep.subr.mxu0 0.0
    %670 = vmatpush1.msra.mxu0 0.0
    %671 = vmatprep.subr.mxu0 0.0
    %672 = vmatpush1.msra.mxu0 0.0
    %673 = vmatprep.subr.mxu0 0.0
    %674 = vmatpush1.msra.mxu0 0.0
    %675 = vmatprep.subr.mxu0 0.0
    %676 = vmatpush1.msra.mxu0 0.0
    %677 = vmatprep.subr.mxu0 0.0
    %678 = vmatpush1.msra.mxu0 0.0
    %679 = vmatprep.subr.mxu0 0.0
    %680 = vmatpush1.msra.mxu0 0.0
    %681 = vmatprep.subr.mxu0 0.0
    %682 = vmatpush1.msra.mxu0 0.0
    %683 = vmatprep.subr.mxu0 0.0
    %684 = vmatpush1.msra.mxu0 0.0
    %685 = vmatprep.subr.mxu0 0.0
    %686 = vmatpush1.msra.mxu0 0.0
    %687 = vmatprep.subr.mxu0 0.0
    %688 = vmatpush1.msra.mxu0 0.0
    %689 = vmatprep.subr.mxu0 0.0
    %690 = vmatpush1.msra.mxu0 0.0
    %691 = vmatprep.subr.mxu0 0.0
    %692 = vmatpush1.msra.mxu0 0.0
    %693 = vmatprep.subr.mxu0 0.0
    %694 = vmatpush1.msra.mxu0 0.0
    %695 = vmatprep.subr.mxu0 0.0
    %696 = vmatpush1.msra.mxu0 0.0
    %697 = vmatprep.subr.mxu0 0.0
    %698 = vmatpush1.msra.mxu0 0.0
    %699 = vmatprep.subr.mxu0 0.0
    %700 = vmatpush1.msra.mxu0 0.0
    %701 = vmatprep.subr.mxu0 0.0
    %702 = vmatpush1.msra.mxu0 0.0
    %703 = vmatprep.subr.mxu0 0.0
    %704 = vmatpush1.msra.mxu0 0.0
    %705 = vmatprep.subr.mxu0 0.0
    %706 = vmatpush1.msra.mxu0 0.0
    %707 = vmatprep.subr.mxu0 0.0
    %708 = vmatpush1.msra.mxu0 0.0
    %709 = vmatprep.subr.mxu0 0.0
    %710 = vmatpush1.msra.mxu0 0.0
    %711 = vmatprep.subr.mxu0 0.0
    %712 = vmatpush1.msra.mxu0 0.0
    %713 = vmatprep.subr.mxu0 0.0
    %714 = vmatpush1.msra.mxu0 0.0
    %715 = vmatprep.subr.mxu0 0.0
    %716 = vmatpush1.msra.mxu0 0.0
    %717 = vmatprep.subr.mxu0 0.0
    %718 = vmatpush1.msra.mxu0 0.0
    %719 = vmatprep.subr.mxu0 0.0
    %720 = vmatpush1.msra.mxu0 0.0
    %721 = vmatprep.subr.mxu0 0.0
    %722 = vmatpush1.msra.mxu0 0.0
    %723 = vmatprep.subr.mxu0 0.0
    %724 = vmatpush1.msra.mxu0 0.0
    %725 = vmatprep.mubr.f32.mxu0 0.0
    %726 = vmatmul.mubr.f32.gmra.mrb[0].mxu0 %v336
    %v727 = vpop.f32.mrb[0].mxu0
    %v728 = vadd.f32 0.0, %v727
    %v729 = vpop.f32.mrb[0].mxu0
    %730 = vmatprep.mubr.f32.mxu0 0.0
    %731 = vmatmul.mubr.f32.gmra.mrb[0].mxu0 %v339
    %v732 = vpop.f32.mrb[0].mxu0
    %v733 = vadd.f32 0.0, %v732
    %v734 = vpop.f32.mrb[0].mxu0
    %735 = vdwg.mxu0
    %s736 = scalar_lea.vmem %s2, 160
    %v737 = vld [vmem:[%s736] sm:$0xff]
    %v738 = vld [vmem:[%s736 + $0x8] sm:$0xff]
    %v739 = vld [vmem:[%s736 + $0x10] sm:$0xff]
    %v740 = vld [vmem:[%s736 + $0x18] sm:$0xff]
    %741 = vmatprep.subr.mxu0 0.0
    %742 = vmatpush1.msra.mxu0 %v737
    %743 = vmatprep.subr.mxu0 0.0
    %744 = vmatpush1.msra.mxu0 %v738
    %745 = vmatprep.subr.mxu0 0.0
    %746 = vmatpush1.msra.mxu0 %v739
    %747 = vmatprep.subr.mxu0 0.0
    %748 = vmatpush1.msra.mxu0 %v740
    %749 = vmatprep.subr.mxu0 0.0
    %750 = vmatpush1.msra.mxu0 0.0
    %751 = vmatprep.subr.mxu0 0.0
    %752 = vmatpush1.msra.mxu0 0.0
    %753 = vmatprep.subr.mxu0 0.0
    %754 = vmatpush1.msra.mxu0 0.0
    %755 = vmatprep.subr.mxu0 0.0
    %756 = vmatpush1.msra.mxu0 0.0
    %757 = vmatprep.subr.mxu0 0.0
    %758 = vmatpush1.msra.mxu0 0.0
    %759 = vmatprep.subr.mxu0 0.0
    %760 = vmatpush1.msra.mxu0 0.0
    %761 = vmatprep.subr.mxu0 0.0
    %762 = vmatpush1.msra.mxu0 0.0
    %763 = vmatprep.subr.mxu0 0.0
    %764 = vmatpush1.msra.mxu0 0.0
    %765 = vmatprep.subr.mxu0 0.0
    %766 = vmatpush1.msra.mxu0 0.0
    %767 = vmatprep.subr.mxu0 0.0
    %768 = vmatpush1.msra.mxu0 0.0
    %769 = vmatprep.subr.mxu0 0.0
    %770 = vmatpush1.msra.mxu0 0.0
    %771 = vmatprep.subr.mxu0 0.0
    %772 = vmatpush1.msra.mxu0 0.0
    %773 = vmatprep.subr.mxu0 0.0
    %774 = vmatpush1.msra.mxu0 0.0
    %775 = vmatprep.subr.mxu0 0.0
    %776 = vmatpush1.msra.mxu0 0.0
    %777 = vmatprep.subr.mxu0 0.0
    %778 = vmatpush1.msra.mxu0 0.0
    %779 = vmatprep.subr.mxu0 0.0
    %780 = vmatpush1.msra.mxu0 0.0
    %781 = vmatprep.subr.mxu0 0.0
    %782 = vmatpush1.msra.mxu0 0.0
    %783 = vmatprep.subr.mxu0 0.0
    %784 = vmatpush1.msra.mxu0 0.0
    %785 = vmatprep.subr.mxu0 0.0
    %786 = vmatpush1.msra.mxu0 0.0
    %787 = vmatprep.subr.mxu0 0.0
    %788 = vmatpush1.msra.mxu0 0.0
    %789 = vmatprep.subr.mxu0 0.0
    %790 = vmatpush1.msra.mxu0 0.0
    %791 = vmatprep.subr.mxu0 0.0
    %792 = vmatpush1.msra.mxu0 0.0
    %793 = vmatprep.subr.mxu0 0.0
    %794 = vmatpush1.msra.mxu0 0.0
    %795 = vmatprep.subr.mxu0 0.0
    %796 = vmatpush1.msra.mxu0 0.0
    %797 = vmatprep.subr.mxu0 0.0
    %798 = vmatpush1.msra.mxu0 0.0
    %799 = vmatprep.subr.mxu0 0.0
    %800 = vmatpush1.msra.mxu0 0.0
    %801 = vmatprep.subr.mxu0 0.0
    %802 = vmatpush1.msra.mxu0 0.0
    %803 = vmatprep.subr.mxu0 0.0
    %804 = vmatpush1.msra.mxu0 0.0
    %805 = vmatprep.mubr.f32.mxu0 0.0
    %806 = vmatmul.mubr.f32.gmra.mrb[0].mxu0 %v336
    %v807 = vpop.f32.mrb[0].mxu0
    %v808 = vadd.f32 0.0, %v807
    %v809 = vpop.f32.mrb[0].mxu0
    %810 = vmatprep.mubr.f32.mxu0 0.0
    %811 = vmatmul.mubr.f32.gmra.mrb[0].mxu0 %v339
    %v812 = vpop.f32.mrb[0].mxu0
    %v813 = vadd.f32 0.0, %v812
    %v814 = vpop.f32.mrb[0].mxu0
    %815 = vdwg.mxu0
    %s816 = scalar_lea.vmem %s2, 192
    %v817 = vld [vmem:[%s816] sm:$0xff]
    %v818 = vld [vmem:[%s816 + $0x8] sm:$0xff]
    %v819 = vld [vmem:[%s816 + $0x10] sm:$0xff]
    %v820 = vld [vmem:[%s816 + $0x18] sm:$0xff]
    %821 = vmatprep.subr.mxu0 0.0
    %822 = vmatpush1.msra.mxu0 %v817
    %823 = vmatprep.subr.mxu0 0.0
    %824 = vmatpush1.msra.mxu0 %v818
    %825 = vmatprep.subr.mxu0 0.0
    %826 = vmatpush1.msra.mxu0 %v819
    %827 = vmatprep.subr.mxu0 0.0
    %828 = vmatpush1.msra.mxu0 %v820
    %829 = vmatprep.subr.mxu0 0.0
    %830 = vmatpush1.msra.mxu0 0.0
    %831 = vmatprep.subr.mxu0 0.0
    %832 = vmatpush1.msra.mxu0 0.0
    %833 = vmatprep.subr.mxu0 0.0
    %834 = vmatpush1.msra.mxu0 0.0
    %835 = vmatprep.subr.mxu0 0.0
    %836 = vmatpush1.msra.mxu0 0.0
    %837 = vmatprep.subr.mxu0 0.0
    %838 = vmatpush1.msra.mxu0 0.0
    %839 = vmatprep.subr.mxu0 0.0
    %840 = vmatpush1.msra.mxu0 0.0
    %841 = vmatprep.subr.mxu0 0.0
    %842 = vmatpush1.msra.mxu0 0.0
    %843 = vmatprep.subr.mxu0 0.0
    %844 = vmatpush1.msra.mxu0 0.0
    %845 = vmatprep.subr.mxu0 0.0
    %846 = vmatpush1.msra.mxu0 0.0
    %847 = vmatprep.subr.mxu0 0.0
    %848 = vmatpush1.msra.mxu0 0.0
    %849 = vmatprep.subr.mxu0 0.0
    %850 = vmatpush1.msra.mxu0 0.0
    %851 = vmatprep.subr.mxu0 0.0
    %852 = vmatpush1.msra.mxu0 0.0
    %853 = vmatprep.subr.mxu0 0.0
    %854 = vmatpush1.msra.mxu0 0.0
    %855 = vmatprep.subr.mxu0 0.0
    %856 = vmatpush1.msra.mxu0 0.0
    %857 = vmatprep.subr.mxu0 0.0
    %858 = vmatpush1.msra.mxu0 0.0
    %859 = vmatprep.subr.mxu0 0.0
    %860 = vmatpush1.msra.mxu0 0.0
    %861 = vmatprep.subr.mxu0 0.0
    %862 = vmatpush1.msra.mxu0 0.0
    %863 = vmatprep.subr.mxu0 0.0
    %864 = vmatpush1.msra.mxu0 0.0
    %865 = vmatprep.subr.mxu0 0.0
    %866 = vmatpush1.msra.mxu0 0.0
    %867 = vmatprep.subr.mxu0 0.0
    %868 = vmatpush1.msra.mxu0 0.0
    %869 = vmatprep.subr.mxu0 0.0
    %870 = vmatpush1.msra.mxu0 0.0
    %871 = vmatprep.subr.mxu0 0.0
    %872 = vmatpush1.msra.mxu0 0.0
    %873 = vmatprep.subr.mxu0 0.0
    %874 = vmatpush1.msra.mxu0 0.0
    %875 = vmatprep.subr.mxu0 0.0
    %876 = vmatpush1.msra.mxu0 0.0
    %877 = vmatprep.subr.mxu0 0.0
    %878 = vmatpush1.msra.mxu0 0.0
    %879 = vmatprep.subr.mxu0 0.0
    %880 = vmatpush1.msra.mxu0 0.0
    %881 = vmatprep.subr.mxu0 0.0
    %882 = vmatpush1.msra.mxu0 0.0
    %883 = vmatprep.subr.mxu0 0.0
    %884 = vmatpush1.msra.mxu0 0.0
    %885 = vmatprep.mubr.f32.mxu0 0.0
    %886 = vmatmul.mubr.f32.gmra.mrb[0].mxu0 %v336
    %v887 = vpop.f32.mrb[0].mxu0
    %v888 = vadd.f32 0.0, %v887
    %v889 = vpop.f32.mrb[0].mxu0
    %890 = vmatprep.mubr.f32.mxu0 0.0
    %891 = vmatmul.mubr.f32.gmra.mrb[0].mxu0 %v339
    %v892 = vpop.f32.mrb[0].mxu0
    %v893 = vadd.f32 0.0, %v892
    %v894 = vpop.f32.mrb[0].mxu0
    %895 = vdwg.mxu0
    %s896 = scalar_lea.vmem %s2, 224
    %v897 = vld [vmem:[%s896] sm:$0xff]
    %v898 = vld [vmem:[%s896 + $0x8] sm:$0xff]
    %v899 = vld [vmem:[%s896 + $0x10] sm:$0xff]
    %v900 = vld [vmem:[%s896 + $0x18] sm:$0xff]
    %901 = vmatprep.subr.mxu0 0.0
    %902 = vmatpush1.msra.mxu0 %v897
    %903 = vmatprep.subr.mxu0 0.0
    %904 = vmatpush1.msra.mxu0 %v898
    %905 = vmatprep.subr.mxu0 0.0
    %906 = vmatpush1.msra.mxu0 %v899
    %907 = vmatprep.subr.mxu0 0.0
    %908 = vmatpush1.msra.mxu0 %v900
    %909 = vmatprep.subr.mxu0 0.0
    %910 = vmatpush1.msra.mxu0 0.0
    %911 = vmatprep.subr.mxu0 0.0
    %912 = vmatpush1.msra.mxu0 0.0
    %913 = vmatprep.subr.mxu0 0.0
    %914 = vmatpush1.msra.mxu0 0.0
    %915 = vmatprep.subr.mxu0 0.0
    %916 = vmatpush1.msra.mxu0 0.0
    %917 = vmatprep.subr.mxu0 0.0
    %918 = vmatpush1.msra.mxu0 0.0
    %919 = vmatprep.subr.mxu0 0.0
    %920 = vmatpush1.msra.mxu0 0.0
    %921 = vmatprep.subr.mxu0 0.0
    %922 = vmatpush1.msra.mxu0 0.0
    %923 = vmatprep.subr.mxu0 0.0
    %924 = vmatpush1.msra.mxu0 0.0
    %925 = vmatprep.subr.mxu0 0.0
    %926 = vmatpush1.msra.mxu0 0.0
    %927 = vmatprep.subr.mxu0 0.0
    %928 = vmatpush1.msra.mxu0 0.0
    %929 = vmatprep.subr.mxu0 0.0
    %930 = vmatpush1.msra.mxu0 0.0
    %931 = vmatprep.subr.mxu0 0.0
    %932 = vmatpush1.msra.mxu0 0.0
    %933 = vmatprep.subr.mxu0 0.0
    %934 = vmatpush1.msra.mxu0 0.0
    %935 = vmatprep.subr.mxu0 0.0
    %936 = vmatpush1.msra.mxu0 0.0
    %937 = vmatprep.subr.mxu0 0.0
    %938 = vmatpush1.msra.mxu0 0.0
    %939 = vmatprep.subr.mxu0 0.0
    %940 = vmatpush1.msra.mxu0 0.0
    %941 = vmatprep.subr.mxu0 0.0
    %942 = vmatpush1.msra.mxu0 0.0
    %943 = vmatprep.subr.mxu0 0.0
    %944 = vmatpush1.msra.mxu0 0.0
    %945 = vmatprep.subr.mxu0 0.0
    %946 = vmatpush1.msra.mxu0 0.0
    %947 = vmatprep.subr.mxu0 0.0
    %948 = vmatpush1.msra.mxu0 0.0
    %949 = vmatprep.subr.mxu0 0.0
    %950 = vmatpush1.msra.mxu0 0.0
    %951 = vmatprep.subr.mxu0 0.0
    %952 = vmatpush1.msra.mxu0 0.0
    %953 = vmatprep.subr.mxu0 0.0
    %954 = vmatpush1.msra.mxu0 0.0
    %955 = vmatprep.subr.mxu0 0.0
    %956 = vmatpush1.msra.mxu0 0.0
    %957 = vmatprep.subr.mxu0 0.0
    %958 = vmatpush1.msra.mxu0 0.0
    %959 = vmatprep.subr.mxu0 0.0
    %960 = vmatpush1.msra.mxu0 0.0
    %961 = vmatprep.subr.mxu0 0.0
    %962 = vmatpush1.msra.mxu0 0.0
    %963 = vmatprep.subr.mxu0 0.0
    %964 = vmatpush1.msra.mxu0 0.0
    %965 = vmatprep.mubr.f32.mxu0 0.0
    %966 = vmatmul.mubr.f32.gmra.mrb[0].mxu0 %v336
    %v967 = vpop.f32.mrb[0].mxu0
    %v968 = vadd.f32 0.0, %v967
    %v969 = vpop.f32.mrb[0].mxu0
    %970 = vmatprep.mubr.f32.mxu0 0.0
    %971 = vmatmul.mubr.f32.gmra.mrb[0].mxu0 %v339
    %v972 = vpop.f32.mrb[0].mxu0
    %v973 = vadd.f32 0.0, %v972
    %v974 = vpop.f32.mrb[0].mxu0
    %975 = vdwg.mxu0
    %s976 = scalar_lea.vmem %s2, 256
    %v977 = vld [vmem:[%s976] sm:$0xff]
    %v978 = vld [vmem:[%s976 + $0x8] sm:$0xff]
    %v979 = vld [vmem:[%s976 + $0x10] sm:$0xff]
    %v980 = vld [vmem:[%s976 + $0x18] sm:$0xff]
    %981 = vmatprep.subr.mxu0 0.0
    %982 = vmatpush1.msra.mxu0 %v977
    %983 = vmatprep.subr.mxu0 0.0
    %984 = vmatpush1.msra.mxu0 %v978
    %985 = vmatprep.subr.mxu0 0.0
    %986 = vmatpush1.msra.mxu0 %v979
    %987 = vmatprep.subr.mxu0 0.0
    %988 = vmatpush1.msra.mxu0 %v980
    %989 = vmatprep.subr.mxu0 0.0
    %990 = vmatpush1.msra.mxu0 0.0
    %991 = vmatprep.subr.mxu0 0.0
    %992 = vmatpush1.msra.mxu0 0.0
    %993 = vmatprep.subr.mxu0 0.0
    %994 = vmatpush1.msra.mxu0 0.0
    %995 = vmatprep.subr.mxu0 0.0
    %996 = vmatpush1.msra.mxu0 0.0
    %997 = vmatprep.subr.mxu0 0.0
    %998 = vmatpush1.msra.mxu0 0.0
    %999 = vmatprep.subr.mxu0 0.0
    %1000 = vmatpush1.msra.mxu0 0.0
    %1001 = vmatprep.subr.mxu0 0.0
    %1002 = vmatpush1.msra.mxu0 0.0
    %1003 = vmatprep.subr.mxu0 0.0
    %1004 = vmatpush1.msra.mxu0 0.0
    %1005 = vmatprep.subr.mxu0 0.0
    %1006 = vmatpush1.msra.mxu0 0.0
    %1007 = vmatprep.subr.mxu0 0.0
    %1008 = vmatpush1.msra.mxu0 0.0
    %1009 = vmatprep.subr.mxu0 0.0
    %1010 = vmatpush1.msra.mxu0 0.0
    %1011 = vmatprep.subr.mxu0 0.0
    %1012 = vmatpush1.msra.mxu0 0.0
    %1013 = vmatprep.subr.mxu0 0.0
    %1014 = vmatpush1.msra.mxu0 0.0
    %1015 = vmatprep.subr.mxu0 0.0
    %1016 = vmatpush1.msra.mxu0 0.0
    %1017 = vmatprep.subr.mxu0 0.0
    %1018 = vmatpush1.msra.mxu0 0.0
    %1019 = vmatprep.subr.mxu0 0.0
    %1020 = vmatpush1.msra.mxu0 0.0
    %1021 = vmatprep.subr.mxu0 0.0
    %1022 = vmatpush1.msra.mxu0 0.0
    %1023 = vmatprep.subr.mxu0 0.0
    %1024 = vmatpush1.msra.mxu0 0.0
    %1025 = vmatprep.subr.mxu0 0.0
    %1026 = vmatpush1.msra.mxu0 0.0
    %1027 = vmatprep.subr.mxu0 0.0
    %1028 = vmatpush1.msra.mxu0 0.0
    %1029 = vmatprep.subr.mxu0 0.0
    %1030 = vmatpush1.msra.mxu0 0.0
    %1031 = vmatprep.subr.mxu0 0.0
    %1032 = vmatpush1.msra.mxu0 0.0
    %1033 = vmatprep.subr.mxu0 0.0
    %1034 = vmatpush1.msra.mxu0 0.0
    %1035 = vmatprep.subr.mxu0 0.0
    %1036 = vmatpush1.msra.mxu0 0.0
    %1037 = vmatprep.subr.mxu0 0.0
    %1038 = vmatpush1.msra.mxu0 0.0
    %1039 = vmatprep.subr.mxu0 0.0
    %1040 = vmatpush1.msra.mxu0 0.0
    %1041 = vmatprep.subr.mxu0 0.0
    %1042 = vmatpush1.msra.mxu0 0.0
    %1043 = vmatprep.subr.mxu0 0.0
    %1044 = vmatpush1.msra.mxu0 0.0
    %1045 = vmatprep.mubr.f32.mxu0 0.0
    %1046 = vmatmul.mubr.f32.gmra.mrb[0].mxu0 %v336
    %v1047 = vpop.f32.mrb[0].mxu0
    %v1048 = vadd.f32 0.0, %v1047
    %v1049 = vpop.f32.mrb[0].mxu0
    %1050 = vmatprep.mubr.f32.mxu0 0.0
    %1051 = vmatmul.mubr.f32.gmra.mrb[0].mxu0 %v339
    %v1052 = vpop.f32.mrb[0].mxu0
    %v1053 = vadd.f32 0.0, %v1052
    %v1054 = vpop.f32.mrb[0].mxu0
    %1055 = vdwg.mxu0
    %s1056 = scalar_lea.vmem %s2, 288
    %v1057 = vld [vmem:[%s1056] sm:$0xff]
    %v1058 = vld [vmem:[%s1056 + $0x8] sm:$0xff]
    %v1059 = vld [vmem:[%s1056 + $0x10] sm:$0xff]
    %v1060 = vld [vmem:[%s1056 + $0x18] sm:$0xff]
    %1061 = vmatprep.subr.mxu0 0.0
    %1062 = vmatpush1.msra.mxu0 %v1057
    %1063 = vmatprep.subr.mxu0 0.0
    %1064 = vmatpush1.msra.mxu0 %v1058
    %1065 = vmatprep.subr.mxu0 0.0
    %1066 = vmatpush1.msra.mxu0 %v1059
    %1067 = vmatprep.subr.mxu0 0.0
    %1068 = vmatpush1.msra.mxu0 %v1060
    %1069 = vmatprep.subr.mxu0 0.0
    %1070 = vmatpush1.msra.mxu0 0.0
    %1071 = vmatprep.subr.mxu0 0.0
    %1072 = vmatpush1.msra.mxu0 0.0
    %1073 = vmatprep.subr.mxu0 0.0
    %1074 = vmatpush1.msra.mxu0 0.0
    %1075 = vmatprep.subr.mxu0 0.0
    %1076 = vmatpush1.msra.mxu0 0.0
    %1077 = vmatprep.subr.mxu0 0.0
    %1078 = vmatpush1.msra.mxu0 0.0
    %1079 = vmatprep.subr.mxu0 0.0
    %1080 = vmatpush1.msra.mxu0 0.0
    %1081 = vmatprep.subr.mxu0 0.0
    %1082 = vmatpush1.msra.mxu0 0.0
    %1083 = vmatprep.subr.mxu0 0.0
    %1084 = vmatpush1.msra.mxu0 0.0
    %1085 = vmatprep.subr.mxu0 0.0
    %1086 = vmatpush1.msra.mxu0 0.0
    %1087 = vmatprep.subr.mxu0 0.0
    %1088 = vmatpush1.msra.mxu0 0.0
    %1089 = vmatprep.subr.mxu0 0.0
    %1090 = vmatpush1.msra.mxu0 0.0
    %1091 = vmatprep.subr.mxu0 0.0
    %1092 = vmatpush1.msra.mxu0 0.0
    %1093 = vmatprep.subr.mxu0 0.0
    %1094 = vmatpush1.msra.mxu0 0.0
    %1095 = vmatprep.subr.mxu0 0.0
    %1096 = vmatpush1.msra.mxu0 0.0
    %1097 = vmatprep.subr.mxu0 0.0
    %1098 = vmatpush1.msra.mxu0 0.0
    %1099 = vmatprep.subr.mxu0 0.0
    %1100 = vmatpush1.msra.mxu0 0.0
    %1101 = vmatprep.subr.mxu0 0.0
    %1102 = vmatpush1.msra.mxu0 0.0
    %1103 = vmatprep.subr.mxu0 0.0
    %1104 = vmatpush1.msra.mxu0 0.0
    %1105 = vmatprep.subr.mxu0 0.0
    %1106 = vmatpush1.msra.mxu0 0.0
    %1107 = vmatprep.subr.mxu0 0.0
    %1108 = vmatpush1.msra.mxu0 0.0
    %1109 = vmatprep.subr.mxu0 0.0
    %1110 = vmatpush1.msra.mxu0 0.0
    %1111 = vmatprep.subr.mxu0 0.0
    %1112 = vmatpush1.msra.mxu0 0.0
    %1113 = vmatprep.subr.mxu0 0.0
    %1114 = vmatpush1.msra.mxu0 0.0
    %1115 = vmatprep.subr.mxu0 0.0
    %1116 = vmatpush1.msra.mxu0 0.0
    %1117 = vmatprep.subr.mxu0 0.0
    %1118 = vmatpush1.msra.mxu0 0.0
    %1119 = vmatprep.subr.mxu0 0.0
    %1120 = vmatpush1.msra.mxu0 0.0
    %1121 = vmatprep.subr.mxu0 0.0
    %1122 = vmatpush1.msra.mxu0 0.0
    %1123 = vmatprep.subr.mxu0 0.0
    %1124 = vmatpush1.msra.mxu0 0.0
    %1125 = vmatprep.mubr.f32.mxu0 0.0
    %1126 = vmatmul.mubr.f32.gmra.mrb[0].mxu0 %v336
    %v1127 = vpop.f32.mrb[0].mxu0
    %v1128 = vadd.f32 0.0, %v1127
    %v1129 = vpop.f32.mrb[0].mxu0
    %1130 = vmatprep.mubr.f32.mxu0 0.0
    %1131 = vmatmul.mubr.f32.gmra.mrb[0].mxu0 %v339
    %v1132 = vpop.f32.mrb[0].mxu0
    %v1133 = vadd.f32 0.0, %v1132
    %v1134 = vpop.f32.mrb[0].mxu0
    %1135 = vdwg.mxu0
    %s1136 = scalar_lea.vmem %s2, 320
    %v1137 = vld [vmem:[%s1136] sm:$0xff]
    %v1138 = vld [vmem:[%s1136 + $0x8] sm:$0xff]
    %v1139 = vld [vmem:[%s1136 + $0x10] sm:$0xff]
    %v1140 = vld [vmem:[%s1136 + $0x18] sm:$0xff]
    %1141 = vmatprep.subr.mxu0 0.0
    %1142 = vmatpush1.msra.mxu0 %v1137
    %1143 = vmatprep.subr.mxu0 0.0
    %1144 = vmatpush1.msra.mxu0 %v1138
    %1145 = vmatprep.subr.mxu0 0.0
    %1146 = vmatpush1.msra.mxu0 %v1139
    %1147 = vmatprep.subr.mxu0 0.0
    %1148 = vmatpush1.msra.mxu0 %v1140
    %1149 = vmatprep.subr.mxu0 0.0
    %1150 = vmatpush1.msra.mxu0 0.0
    %1151 = vmatprep.subr.mxu0 0.0
    %1152 = vmatpush1.msra.mxu0 0.0
    %1153 = vmatprep.subr.mxu0 0.0
    %1154 = vmatpush1.msra.mxu0 0.0
    %1155 = vmatprep.subr.mxu0 0.0
    %1156 = vmatpush1.msra.mxu0 0.0
    %1157 = vmatprep.subr.mxu0 0.0
    %1158 = vmatpush1.msra.mxu0 0.0
    %1159 = vmatprep.subr.mxu0 0.0
    %1160 = vmatpush1.msra.mxu0 0.0
    %1161 = vmatprep.subr.mxu0 0.0
    %1162 = vmatpush1.msra.mxu0 0.0
    %1163 = vmatprep.subr.mxu0 0.0
    %1164 = vmatpush1.msra.mxu0 0.0
    %1165 = vmatprep.subr.mxu0 0.0
    %1166 = vmatpush1.msra.mxu0 0.0
    %1167 = vmatprep.subr.mxu0 0.0
    %1168 = vmatpush1.msra.mxu0 0.0
    %1169 = vmatprep.subr.mxu0 0.0
    %1170 = vmatpush1.msra.mxu0 0.0
    %1171 = vmatprep.subr.mxu0 0.0
    %1172 = vmatpush1.msra.mxu0 0.0
    %1173 = vmatprep.subr.mxu0 0.0
    %1174 = vmatpush1.msra.mxu0 0.0
    %1175 = vmatprep.subr.mxu0 0.0
    %1176 = vmatpush1.msra.mxu0 0.0
    %1177 = vmatprep.subr.mxu0 0.0
    %1178 = vmatpush1.msra.mxu0 0.0
    %1179 = vmatprep.subr.mxu0 0.0
    %1180 = vmatpush1.msra.mxu0 0.0
    %1181 = vmatprep.subr.mxu0 0.0
    %1182 = vmatpush1.msra.mxu0 0.0
    %1183 = vmatprep.subr.mxu0 0.0
    %1184 = vmatpush1.msra.mxu0 0.0
    %1185 = vmatprep.subr.mxu0 0.0
    %1186 = vmatpush1.msra.mxu0 0.0
    %1187 = vmatprep.subr.mxu0 0.0
    %1188 = vmatpush1.msra.mxu0 0.0
    %1189 = vmatprep.subr.mxu0 0.0
    %1190 = vmatpush1.msra.mxu0 0.0
    %1191 = vmatprep.subr.mxu0 0.0
    %1192 = vmatpush1.msra.mxu0 0.0
    %1193 = vmatprep.subr.mxu0 0.0
    %1194 = vmatpush1.msra.mxu0 0.0
    %1195 = vmatprep.subr.mxu0 0.0
    %1196 = vmatpush1.msra.mxu0 0.0
    %1197 = vmatprep.subr.mxu0 0.0
    %1198 = vmatpush1.msra.mxu0 0.0
    %1199 = vmatprep.subr.mxu0 0.0
    %1200 = vmatpush1.msra.mxu0 0.0
    %1201 = vmatprep.subr.mxu0 0.0
    %1202 = vmatpush1.msra.mxu0 0.0
    %1203 = vmatprep.subr.mxu0 0.0
    %1204 = vmatpush1.msra.mxu0 0.0
    %1205 = vmatprep.mubr.f32.mxu0 0.0
    %1206 = vmatmul.mubr.f32.gmra.mrb[0].mxu0 %v336
    %v1207 = vpop.f32.mrb[0].mxu0
    %v1208 = vadd.f32 0.0, %v1207
    %v1209 = vpop.f32.mrb[0].mxu0
    %1210 = vmatprep.mubr.f32.mxu0 0.0
    %1211 = vmatmul.mubr.f32.gmra.mrb[0].mxu0 %v339
    %v1212 = vpop.f32.mrb[0].mxu0
    %v1213 = vadd.f32 0.0, %v1212
    %v1214 = vpop.f32.mrb[0].mxu0
    %1215 = vdwg.mxu0
    %s1216 = scalar_lea.vmem %s2, 352
    %v1217 = vld [vmem:[%s1216] sm:$0xff]
    %v1218 = vld [vmem:[%s1216 + $0x8] sm:$0xff]
    %v1219 = vld [vmem:[%s1216 + $0x10] sm:$0xff]
    %v1220 = vld [vmem:[%s1216 + $0x18] sm:$0xff]
    %1221 = vmatprep.subr.mxu0 0.0
    %1222 = vmatpush1.msra.mxu0 %v1217
    %1223 = vmatprep.subr.mxu0 0.0
    %1224 = vmatpush1.msra.mxu0 %v1218
    %1225 = vmatprep.subr.mxu0 0.0
    %1226 = vmatpush1.msra.mxu0 %v1219
    %1227 = vmatprep.subr.mxu0 0.0
    %1228 = vmatpush1.msra.mxu0 %v1220
    %1229 = vmatprep.subr.mxu0 0.0
    %1230 = vmatpush1.msra.mxu0 0.0
    %1231 = vmatprep.subr.mxu0 0.0
    %1232 = vmatpush1.msra.mxu0 0.0
    %1233 = vmatprep.subr.mxu0 0.0
    %1234 = vmatpush1.msra.mxu0 0.0
    %1235 = vmatprep.subr.mxu0 0.0
    %1236 = vmatpush1.msra.mxu0 0.0
    %1237 = vmatprep.subr.mxu0 0.0
    %1238 = vmatpush1.msra.mxu0 0.0
    %1239 = vmatprep.subr.mxu0 0.0
    %1240 = vmatpush1.msra.mxu0 0.0
    %1241 = vmatprep.subr.mxu0 0.0
    %1242 = vmatpush1.msra.mxu0 0.0
    %1243 = vmatprep.subr.mxu0 0.0
    %1244 = vmatpush1.msra.mxu0 0.0
    %1245 = vmatprep.subr.mxu0 0.0
    %1246 = vmatpush1.msra.mxu0 0.0
    %1247 = vmatprep.subr.mxu0 0.0
    %1248 = vmatpush1.msra.mxu0 0.0
    %1249 = vmatprep.subr.mxu0 0.0
    %1250 = vmatpush1.msra.mxu0 0.0
    %1251 = vmatprep.subr.mxu0 0.0
    %1252 = vmatpush1.msra.mxu0 0.0
    %1253 = vmatprep.subr.mxu0 0.0
    %1254 = vmatpush1.msra.mxu0 0.0
    %1255 = vmatprep.subr.mxu0 0.0
    %1256 = vmatpush1.msra.mxu0 0.0
    %1257 = vmatprep.subr.mxu0 0.0
    %1258 = vmatpush1.msra.mxu0 0.0
    %1259 = vmatprep.subr.mxu0 0.0
    %1260 = vmatpush1.msra.mxu0 0.0
    %1261 = vmatprep.subr.mxu0 0.0
    %1262 = vmatpush1.msra.mxu0 0.0
    %1263 = vmatprep.subr.mxu0 0.0
    %1264 = vmatpush1.msra.mxu0 0.0
    %1265 = vmatprep.subr.mxu0 0.0
    %1266 = vmatpush1.msra.mxu0 0.0
    %1267 = vmatprep.subr.mxu0 0.0
    %1268 = vmatpush1.msra.mxu0 0.0
    %1269 = vmatprep.subr.mxu0 0.0
    %1270 = vmatpush1.msra.mxu0 0.0
    %1271 = vmatprep.subr.mxu0 0.0
    %1272 = vmatpush1.msra.mxu0 0.0
    %1273 = vmatprep.subr.mxu0 0.0
    %1274 = vmatpush1.msra.mxu0 0.0
    %1275 = vmatprep.subr.mxu0 0.0
    %1276 = vmatpush1.msra.mxu0 0.0
    %1277 = vmatprep.subr.mxu0 0.0
    %1278 = vmatpush1.msra.mxu0 0.0
    %1279 = vmatprep.subr.mxu0 0.0
    %1280 = vmatpush1.msra.mxu0 0.0
    %1281 = vmatprep.subr.mxu0 0.0
    %1282 = vmatpush1.msra.mxu0 0.0
    %1283 = vmatprep.subr.mxu0 0.0
    %1284 = vmatpush1.msra.mxu0 0.0
    %1285 = vmatprep.mubr.f32.mxu0 0.0
    %1286 = vmatmul.mubr.f32.gmra.mrb[0].mxu0 %v336
    %v1287 = vpop.f32.mrb[0].mxu0
    %v1288 = vadd.f32 0.0, %v1287
    %v1289 = vpop.f32.mrb[0].mxu0
    %1290 = vmatprep.mubr.f32.mxu0 0.0
    %1291 = vmatmul.mubr.f32.gmra.mrb[0].mxu0 %v339
    %v1292 = vpop.f32.mrb[0].mxu0
    %v1293 = vadd.f32 0.0, %v1292
    %v1294 = vpop.f32.mrb[0].mxu0
    %1295 = vdwg.mxu0
    %vm1296 = vcmask 64512
    %v1298 = vsel %vm1296, %v408, 0
    %v1301 = vsel %vm1296, %v413, 0
    %v1304 = vsel %vm1296, %v488, 0
    %v1307 = vsel %vm1296, %v493, 0
    %v1310 = vsel %vm1296, %v568, 0
    %v1313 = vsel %vm1296, %v573, 0
    %v1316 = vsel %vm1296, %v648, 0
    %v1319 = vsel %vm1296, %v653, 0
    %v1322 = vsel %vm1296, %v728, 0
    %v1325 = vsel %vm1296, %v733, 0
    %v1328 = vsel %vm1296, %v808, 0
    %v1331 = vsel %vm1296, %v813, 0
    %v1334 = vsel %vm1296, %v888, 0
    %v1337 = vsel %vm1296, %v893, 0
    %v1340 = vsel %vm1296, %v968, 0
    %v1343 = vsel %vm1296, %v973, 0
    %1345 = vmatprep.subr.mxu0 0.0
    %1346 = vmatpush1.xpose.msra.mxu0 %v1322
    %1347 = vmatprep.subr.mxu0 0.0
    %1348 = vmatpush1.xpose.msra.mxu0 %v1325
    %1349 = vmatprep.subr.mxu0 0.0
    %1350 = vmatpush1.xpose.msra.mxu0 %v1328
    %1351 = vmatprep.subr.mxu0 0.0
    %1352 = vmatpush1.xpose.msra.mxu0 %v1331
    %1353 = vmatprep.subr.mxu0 0.0
    %1354 = vmatpush1.xpose.msra.mxu0 %v1334
    %1355 = vmatprep.subr.mxu0 0.0
    %1356 = vmatpush1.xpose.msra.mxu0 %v1337
    %1357 = vmatprep.subr.mxu0 0.0
    %1358 = vmatpush1.xpose.msra.mxu0 %v1340
    %1359 = vmatprep.subr.mxu0 0.0
    %1360 = vmatpush1.xpose.msra.mxu0 %v1343
    %1361 = vmatprep.subr.mxu0 0.0
    %1362 = vmatpush1.xpose.msra.mxu0 0.0
    %1363 = vmatprep.subr.mxu0 0.0
    %1364 = vmatpush1.xpose.msra.mxu0 0.0
    %1365 = vmatprep.subr.mxu0 0.0
    %1366 = vmatpush1.xpose.msra.mxu0 0.0
    %1367 = vmatprep.subr.mxu0 0.0
    %1368 = vmatpush1.xpose.msra.mxu0 0.0
    %1369 = vmatprep.subr.mxu0 0.0
    %1370 = vmatpush1.xpose.msra.mxu0 0.0
    %1371 = vmatprep.subr.mxu0 0.0
    %1372 = vmatpush1.xpose.msra.mxu0 0.0
    %1373 = vmatprep.subr.mxu0 0.0
    %1374 = vmatpush1.xpose.msra.mxu0 0.0
    %1375 = vmatprep.subr.mxu0 0.0
    %1376 = vmatpush1.xpose.msra.mxu0 0.0
    %1377 = vmatprep.subr.mxu0 0.0
    %1378 = vmatpush1.xpose.msra.mxu0 0.0
    %1379 = vmatprep.subr.mxu0 0.0
    %1380 = vmatpush1.xpose.msra.mxu0 0.0
    %1381 = vmatprep.subr.mxu0 0.0
    %1382 = vmatpush1.xpose.msra.mxu0 0.0
    %1383 = vmatprep.subr.mxu0 0.0
    %1384 = vmatpush1.xpose.msra.mxu0 0.0
    %1385 = vmatprep.subr.mxu0 0.0
    %1386 = vmatpush1.xpose.msra.mxu0 0.0
    %1387 = vmatprep.subr.mxu0 0.0
    %1388 = vmatpush1.xpose.msra.mxu0 0.0
    %1389 = vmatprep.subr.mxu0 0.0
    %1390 = vmatpush1.xpose.msra.mxu0 0.0
    %1391 = vmatprep.subr.mxu0 0.0
    %1392 = vmatpush1.xpose.msra.mxu0 0.0
    %1393 = vmatprep.subr.mxu0 0.0
    %1394 = vmatpush1.xpose.msra.mxu0 0.0
    %1395 = vmatprep.subr.mxu0 0.0
    %1396 = vmatpush1.xpose.msra.mxu0 0.0
    %1397 = vmatprep.subr.mxu0 0.0
    %1398 = vmatpush1.xpose.msra.mxu0 0.0
    %1399 = vmatprep.subr.mxu0 0.0
    %1400 = vmatpush1.xpose.msra.mxu0 0.0
    %1401 = vmatprep.subr.mxu0 0.0
    %1402 = vmatpush1.xpose.msra.mxu0 0.0
    %1403 = vmatprep.subr.mxu0 0.0
    %1404 = vmatpush1.xpose.msra.mxu0 0.0
    %1405 = vmatprep.subr.mxu0 0.0
    %1406 = vmatpush1.xpose.msra.mxu0 0.0
    %1407 = vmatprep.subr.mxu0 0.0
    %1408 = vmatpush1.xpose.msra.mxu0 0.0
    %1409 = vmatprep.mubr.f32.mxu0 0.0
    %1410 = vmatmul.mubr.f32.gmra.mrb[0].mxu0 %v1298
    %v1411 = vpop.f32.mrb[0].mxu0
    %v1412 = vadd.f32 0.0, %v1411
    %v1413 = vpop.f32.mrb[0].mxu0
    %1414 = vmatprep.mubr.f32.mxu0 0.0
    %1415 = vmatmul.mubr.f32.gmra.mrb[0].mxu0 %v1301
    %v1416 = vpop.f32.mrb[0].mxu0
    %v1417 = vadd.f32 0.0, %v1416
    %v1418 = vpop.f32.mrb[0].mxu0
    %1419 = vmatprep.mubr.f32.mxu0 0.0
    %1420 = vmatmul.mubr.f32.gmra.mrb[0].mxu0 %v1304
    %v1421 = vpop.f32.mrb[0].mxu0
    %v1422 = vadd.f32 0.0, %v1421
    %v1423 = vpop.f32.mrb[0].mxu0
    %1424 = vmatprep.mubr.f32.mxu0 0.0
    %1425 = vmatmul.mubr.f32.gmra.mrb[0].mxu0 %v1307
    %v1426 = vpop.f32.mrb[0].mxu0
    %v1427 = vadd.f32 0.0, %v1426
    %v1428 = vpop.f32.mrb[0].mxu0
    %1429 = vmatprep.mubr.f32.mxu0 0.0
    %1430 = vmatmul.mubr.f32.gmra.mrb[0].mxu0 %v1310
    %v1431 = vpop.f32.mrb[0].mxu0
    %v1432 = vadd.f32 0.0, %v1431
    %v1433 = vpop.f32.mrb[0].mxu0
    %1434 = vmatprep.mubr.f32.mxu0 0.0
    %1435 = vmatmul.mubr.f32.gmra.mrb[0].mxu0 %v1313
    %v1436 = vpop.f32.mrb[0].mxu0
    %v1437 = vadd.f32 0.0, %v1436
    %v1438 = vpop.f32.mrb[0].mxu0
    %1439 = vmatprep.mubr.f32.mxu0 0.0
    %1440 = vmatmul.mubr.f32.gmra.mrb[0].mxu0 %v1316
    %v1441 = vpop.f32.mrb[0].mxu0
    %v1442 = vadd.f32 0.0, %v1441
    %v1443 = vpop.f32.mrb[0].mxu0
    %1444 = vmatprep.mubr.f32.mxu0 0.0
    %1445 = vmatmul.mubr.f32.gmra.mrb[0].mxu0 %v1319
    %v1446 = vpop.f32.mrb[0].mxu0
    %v1447 = vadd.f32 0.0, %v1446
    %v1448 = vpop.f32.mrb[0].mxu0
    %1449 = vdwg.mxu0
    %v1450 = vmul.f32 %v1412, 0.35355338
    %v1451 = vmul.f32 %v1417, 0.35355338
    %v1452 = vmul.f32 %v1422, 0.35355338
    %v1453 = vmul.f32 %v1427, 0.35355338
    %v1454 = vmul.f32 %v1432, 0.35355338
    %v1455 = vmul.f32 %v1437, 0.35355338
    %v1456 = vmul.f32 %v1442, 0.35355338
    %v1457 = vmul.f32 %v1447, 0.35355338
    %v1458 = vld [vmem:[%s9] sm:$0xff]
    %v1459 = vld [vmem:[%s9 + $0x8] sm:$0xff]
    %v1460 = vld [vmem:[%s9 + $0x10] sm:$0xff]
    %v1461 = vld [vmem:[%s9 + $0x18] sm:$0xff]
    %v1462 = vld [vmem:[%s9 + $0x20] sm:$0xff]
    %v1463 = vld [vmem:[%s9 + $0x28] sm:$0xff]
    %v1464 = vld [vmem:[%s9 + $0x30] sm:$0xff]
    %v1465 = vld [vmem:[%s9 + $0x38] sm:$0xff]
    %v1466 = vadd.f32 %v1450, %v1458
    %v1467 = vadd.f32 %v1451, %v1459
    %v1468 = vadd.f32 %v1452, %v1460
    %v1469 = vadd.f32 %v1453, %v1461
    %v1470 = vadd.f32 %v1454, %v1462
    %v1471 = vadd.f32 %v1455, %v1463
    %v1472 = vadd.f32 %v1456, %v1464
    %v1473 = vadd.f32 %v1457, %v1465
    %vm1474 = vcmask 523264
    %v1475 = vsel %vm1474, %v1466, -inf
    %1476 = vmax.xlane.f32.xlu0 %v1475
    %v1477 = vpop.xlane.xlu0 %1476
    %v1478 = vsel %vm1474, %v1467, -inf
    %1479 = vmax.xlane.f32.xlu0 %v1478
    %v1480 = vpop.xlane.xlu0 %1479
    %v1481 = vsel %vm1474, %v1468, -inf
    %1482 = vmax.xlane.f32.xlu0 %v1481
    %v1483 = vpop.xlane.xlu0 %1482
    %v1484 = vsel %vm1474, %v1469, -inf
    %1485 = vmax.xlane.f32.xlu0 %v1484
    %v1486 = vpop.xlane.xlu0 %1485
    %v1487 = vsel %vm1474, %v1470, -inf
    %1488 = vmax.xlane.f32.xlu0 %v1487
    %v1489 = vpop.xlane.xlu0 %1488
    %v1490 = vsel %vm1474, %v1471, -inf
    %1491 = vmax.xlane.f32.xlu0 %v1490
    %v1492 = vpop.xlane.xlu0 %1491
    %v1493 = vsel %vm1474, %v1472, -inf
    %1494 = vmax.xlane.f32.xlu0 %v1493
    %v1495 = vpop.xlane.xlu0 %1494
    %v1496 = vsel %vm1474, %v1473, -inf
    %1497 = vmax.xlane.f32.xlu0 %v1496
    %v1498 = vpop.xlane.xlu0 %1497
    %v1499 = vsub.f32 %v1466, %v1477
    %v1500 = vsub.f32 %v1467, %v1480
    %v1501 = vsub.f32 %v1468, %v1483
    %v1502 = vsub.f32 %v1469, %v1486
    %v1503 = vsub.f32 %v1470, %v1489
    %v1504 = vsub.f32 %v1471, %v1492
    %v1505 = vsub.f32 %v1472, %v1495
    %v1506 = vsub.f32 %v1473, %v1498
    %v1507 = vmul.f32 %v1499, 1.442695
    %v1508 = vpow.pop %v1507
    %v1509 = vmul.f32 %v1500, 1.442695
    %v1510 = vpow.pop %v1509
    %v1511 = vmul.f32 %v1501, 1.442695
    %v1512 = vpow.pop %v1511
    %v1513 = vmul.f32 %v1502, 1.442695
    %v1514 = vpow.pop %v1513
    %v1515 = vmul.f32 %v1503, 1.442695
    %v1516 = vpow.pop %v1515
    %v1517 = vmul.f32 %v1504, 1.442695
    %v1518 = vpow.pop %v1517
    %v1519 = vmul.f32 %v1505, 1.442695
    %v1520 = vpow.pop %v1519
    %v1521 = vmul.f32 %v1506, 1.442695
    %v1522 = vpow.pop %v1521
    %v1524 = vsel %vm1474, %v1508, 0
    %v1527 = vsel %vm1474, %v1510, 0
    %v1530 = vsel %vm1474, %v1512, 0
    %v1533 = vsel %vm1474, %v1514, 0
    %v1536 = vsel %vm1474, %v1516, 0
    %v1539 = vsel %vm1474, %v1518, 0
    %v1542 = vsel %vm1474, %v1520, 0
    %v1545 = vsel %vm1474, %v1522, 0
    %1547 = vmatprep.subr.mxu0 0.0
    %1548 = vmatpush1.msra.mxu0 1.0
    %1549 = vmatprep.subr.mxu0 0.0
    %1550 = vmatpush1.msra.mxu0 1.0
    %1551 = vmatprep.subr.mxu0 0.0
    %1552 = vmatpush1.msra.mxu0 1.0
    %1553 = vmatprep.subr.mxu0 0.0
    %1554 = vmatpush1.msra.mxu0 1.0
    %1555 = vmatprep.subr.mxu0 0.0
    %1556 = vmatpush1.msra.mxu0 1.0
    %1557 = vmatprep.subr.mxu0 0.0
    %1558 = vmatpush1.msra.mxu0 1.0
    %1559 = vmatprep.subr.mxu0 0.0
    %1560 = vmatpush1.msra.mxu0 1.0
    %1561 = vmatprep.subr.mxu0 0.0
    %1562 = vmatpush1.msra.mxu0 1.0
    %1563 = vmatprep.subr.mxu0 0.0
    %1564 = vmatpush1.msra.mxu0 0.0
    %1565 = vmatprep.subr.mxu0 0.0
    %1566 = vmatpush1.msra.mxu0 0.0
    %1567 = vmatprep.subr.mxu0 0.0
    %1568 = vmatpush1.msra.mxu0 0.0
    %1569 = vmatprep.subr.mxu0 0.0
    %1570 = vmatpush1.msra.mxu0 0.0
    %1571 = vmatprep.subr.mxu0 0.0
    %1572 = vmatpush1.msra.mxu0 0.0
    %1573 = vmatprep.subr.mxu0 0.0
    %1574 = vmatpush1.msra.mxu0 0.0
    %1575 = vmatprep.subr.mxu0 0.0
    %1576 = vmatpush1.msra.mxu0 0.0
    %1577 = vmatprep.subr.mxu0 0.0
    %1578 = vmatpush1.msra.mxu0 0.0
    %1579 = vmatprep.subr.mxu0 0.0
    %1580 = vmatpush1.msra.mxu0 0.0
    %1581 = vmatprep.subr.mxu0 0.0
    %1582 = vmatpush1.msra.mxu0 0.0
    %1583 = vmatprep.subr.mxu0 0.0
    %1584 = vmatpush1.msra.mxu0 0.0
    %1585 = vmatprep.subr.mxu0 0.0
    %1586 = vmatpush1.msra.mxu0 0.0
    %1587 = vmatprep.subr.mxu0 0.0
    %1588 = vmatpush1.msra.mxu0 0.0
    %1589 = vmatprep.subr.mxu0 0.0
    %1590 = vmatpush1.msra.mxu0 0.0
    %1591 = vmatprep.subr.mxu0 0.0
    %1592 = vmatpush1.msra.mxu0 0.0
    %1593 = vmatprep.subr.mxu0 0.0
    %1594 = vmatpush1.msra.mxu0 0.0
    %1595 = vmatprep.subr.mxu0 0.0
    %1596 = vmatpush1.msra.mxu0 0.0
    %1597 = vmatprep.subr.mxu0 0.0
    %1598 = vmatpush1.msra.mxu0 0.0
    %1599 = vmatprep.subr.mxu0 0.0
    %1600 = vmatpush1.msra.mxu0 0.0
    %1601 = vmatprep.subr.mxu0 0.0
    %1602 = vmatpush1.msra.mxu0 0.0
    %1603 = vmatprep.subr.mxu0 0.0
    %1604 = vmatpush1.msra.mxu0 0.0
    %1605 = vmatprep.subr.mxu0 0.0
    %1606 = vmatpush1.msra.mxu0 0.0
    %1607 = vmatprep.subr.mxu0 0.0
    %1608 = vmatpush1.msra.mxu0 0.0
    %1609 = vmatprep.subr.mxu0 0.0
    %1610 = vmatpush1.msra.mxu0 0.0
    %1611 = vmatprep.mubr.f32.mxu0 0.0
    %1612 = vmatmul.mubr.f32.gmra.mrb[0].mxu0 %v1524
    %v1613 = vpop.f32.mrb[0].mxu0
    %v1614 = vadd.f32 0.0, %v1613
    %v1615 = vpop.f32.mrb[0].mxu0
    %1616 = vmatprep.mubr.f32.mxu0 0.0
    %1617 = vmatmul.mubr.f32.gmra.mrb[0].mxu0 %v1527
    %v1618 = vpop.f32.mrb[0].mxu0
    %v1619 = vadd.f32 0.0, %v1618
    %v1620 = vpop.f32.mrb[0].mxu0
    %1621 = vmatprep.mubr.f32.mxu0 0.0
    %1622 = vmatmul.mubr.f32.gmra.mrb[0].mxu0 %v1530
    %v1623 = vpop.f32.mrb[0].mxu0
    %v1624 = vadd.f32 0.0, %v1623
    %v1625 = vpop.f32.mrb[0].mxu0
    %1626 = vmatprep.mubr.f32.mxu0 0.0
    %1627 = vmatmul.mubr.f32.gmra.mrb[0].mxu0 %v1533
    %v1628 = vpop.f32.mrb[0].mxu0
    %v1629 = vadd.f32 0.0, %v1628
    %v1630 = vpop.f32.mrb[0].mxu0
    %1631 = vmatprep.mubr.f32.mxu0 0.0
    %1632 = vmatmul.mubr.f32.gmra.mrb[0].mxu0 %v1536
    %v1633 = vpop.f32.mrb[0].mxu0
    %v1634 = vadd.f32 0.0, %v1633
    %v1635 = vpop.f32.mrb[0].mxu0
    %1636 = vmatprep.mubr.f32.mxu0 0.0
    %1637 = vmatmul.mubr.f32.gmra.mrb[0].mxu0 %v1539
    %v1638 = vpop.f32.mrb[0].mxu0
    %v1639 = vadd.f32 0.0, %v1638
    %v1640 = vpop.f32.mrb[0].mxu0
    %1641 = vmatprep.mubr.f32.mxu0 0.0
    %1642 = vmatmul.mubr.f32.gmra.mrb[0].mxu0 %v1542
    %v1643 = vpop.f32.mrb[0].mxu0
    %v1644 = vadd.f32 0.0, %v1643
    %v1645 = vpop.f32.mrb[0].mxu0
    %1646 = vmatprep.mubr.f32.mxu0 0.0
    %1647 = vmatmul.mubr.f32.gmra.mrb[0].mxu0 %v1545
    %v1648 = vpop.f32.mrb[0].mxu0
    %v1649 = vadd.f32 0.0, %v1648
    %v1650 = vpop.f32.mrb[0].mxu0
    %1651 = vdwg.mxu0
    %v1652 = vrcp.pop %v1614
    %v1653 = vrcp.pop %v1619
    %v1654 = vrcp.pop %v1624
    %v1655 = vrcp.pop %v1629
    %v1656 = vrcp.pop %v1634
    %v1657 = vrcp.pop %v1639
    %v1658 = vrcp.pop %v1644
    %v1659 = vrcp.pop %v1649
    %1661 = vset.pattern.permute.xlu0 0
    %1662 = vperm.xlu0 %1661, %v1652
    %v1663 = vpop.permute.xlu0 %1662
    %1666 = vset.pattern.permute.xlu0 0
    %1667 = vperm.xlu0 %1666, %v1653
    %v1668 = vpop.permute.xlu0 %1667
    %1671 = vset.pattern.permute.xlu0 0
    %1672 = vperm.xlu0 %1671, %v1654
    %v1673 = vpop.permute.xlu0 %1672
    %1676 = vset.pattern.permute.xlu0 0
    %1677 = vperm.xlu0 %1676, %v1655
    %v1678 = vpop.permute.xlu0 %1677
    %1681 = vset.pattern.permute.xlu0 0
    %1682 = vperm.xlu0 %1681, %v1656
    %v1683 = vpop.permute.xlu0 %1682
    %1686 = vset.pattern.permute.xlu0 0
    %1687 = vperm.xlu0 %1686, %v1657
    %v1688 = vpop.permute.xlu0 %1687
    %1691 = vset.pattern.permute.xlu0 0
    %1692 = vperm.xlu0 %1691, %v1658
    %v1693 = vpop.permute.xlu0 %1692
    %1696 = vset.pattern.permute.xlu0 0
    %1697 = vperm.xlu0 %1696, %v1659
    %v1698 = vpop.permute.xlu0 %1697
    %v1700 = vmul.f32 %v1508, %v1663
    %v1701 = vmul.f32 %v1510, %v1668
    %v1702 = vmul.f32 %v1512, %v1673
    %v1703 = vmul.f32 %v1514, %v1678
    %v1704 = vmul.f32 %v1516, %v1683
    %v1705 = vmul.f32 %v1518, %v1688
    %v1706 = vmul.f32 %v1520, %v1693
    %v1707 = vmul.f32 %v1522, %v1698
    %v1709 = vsel %vm1474, %v1700, 0
    %v1712 = vsel %vm1474, %v1701, 0
    %v1715 = vsel %vm1474, %v1702, 0
    %v1718 = vsel %vm1474, %v1703, 0
    %v1721 = vsel %vm1474, %v1704, 0
    %v1724 = vsel %vm1474, %v1705, 0
    %v1727 = vsel %vm1474, %v1706, 0
    %v1730 = vsel %vm1474, %v1707, 0
    %1732 = vmatprep.subr.mxu0 0.0
    %1733 = vmatpush1.msra.mxu0 %v1048
    %1734 = vmatprep.subr.mxu0 0.0
    %1735 = vmatpush1.msra.mxu0 %v1053
    %1736 = vmatprep.subr.mxu0 0.0
    %1737 = vmatpush1.msra.mxu0 %v1128
    %1738 = vmatprep.subr.mxu0 0.0
    %1739 = vmatpush1.msra.mxu0 %v1133
    %1740 = vmatprep.subr.mxu0 0.0
    %1741 = vmatpush1.msra.mxu0 %v1208
    %1742 = vmatprep.subr.mxu0 0.0
    %1743 = vmatpush1.msra.mxu0 %v1213
    %1744 = vmatprep.subr.mxu0 0.0
    %1745 = vmatpush1.msra.mxu0 %v1288
    %1746 = vmatprep.subr.mxu0 0.0
    %1747 = vmatpush1.msra.mxu0 %v1293
    %1748 = vmatprep.subr.mxu0 0.0
    %1749 = vmatpush1.msra.mxu0 0.0
    %1750 = vmatprep.subr.mxu0 0.0
    %1751 = vmatpush1.msra.mxu0 0.0
    %1752 = vmatprep.subr.mxu0 0.0
    %1753 = vmatpush1.msra.mxu0 0.0
    %1754 = vmatprep.subr.mxu0 0.0
    %1755 = vmatpush1.msra.mxu0 0.0
    %1756 = vmatprep.subr.mxu0 0.0
    %1757 = vmatpush1.msra.mxu0 0.0
    %1758 = vmatprep.subr.mxu0 0.0
    %1759 = vmatpush1.msra.mxu0 0.0
    %1760 = vmatprep.subr.mxu0 0.0
    %1761 = vmatpush1.msra.mxu0 0.0
    %1762 = vmatprep.subr.mxu0 0.0
    %1763 = vmatpush1.msra.mxu0 0.0
    %1764 = vmatprep.subr.mxu0 0.0
    %1765 = vmatpush1.msra.mxu0 0.0
    %1766 = vmatprep.subr.mxu0 0.0
    %1767 = vmatpush1.msra.mxu0 0.0
    %1768 = vmatprep.subr.mxu0 0.0
    %1769 = vmatpush1.msra.mxu0 0.0
    %1770 = vmatprep.subr.mxu0 0.0
    %1771 = vmatpush1.msra.mxu0 0.0
    %1772 = vmatprep.subr.mxu0 0.0
    %1773 = vmatpush1.msra.mxu0 0.0
    %1774 = vmatprep.subr.mxu0 0.0
    %1775 = vmatpush1.msra.mxu0 0.0
    %1776 = vmatprep.subr.mxu0 0.0
    %1777 = vmatpush1.msra.mxu0 0.0
    %1778 = vmatprep.subr.mxu0 0.0
    %1779 = vmatpush1.msra.mxu0 0.0
    %1780 = vmatprep.subr.mxu0 0.0
    %1781 = vmatpush1.msra.mxu0 0.0
    %1782 = vmatprep.subr.mxu0 0.0
    %1783 = vmatpush1.msra.mxu0 0.0
    %1784 = vmatprep.subr.mxu0 0.0
    %1785 = vmatpush1.msra.mxu0 0.0
    %1786 = vmatprep.subr.mxu0 0.0
    %1787 = vmatpush1.msra.mxu0 0.0
    %1788 = vmatprep.subr.mxu0 0.0
    %1789 = vmatpush1.msra.mxu0 0.0
    %1790 = vmatprep.subr.mxu0 0.0
    %1791 = vmatpush1.msra.mxu0 0.0
    %1792 = vmatprep.subr.mxu0 0.0
    %1793 = vmatpush1.msra.mxu0 0.0
    %1794 = vmatprep.subr.mxu0 0.0
    %1795 = vmatpush1.msra.mxu0 0.0
    %1796 = vmatprep.mubr.f32.mxu0 0.0
    %1797 = vmatmul.mubr.f32.gmra.mrb[0].mxu0 %v1709
    %v1798 = vpop.f32.mrb[0].mxu0
    %v1799 = vadd.f32 0.0, %v1798
    %v1800 = vpop.f32.mrb[0].mxu0
    %1801 = vmatprep.mubr.f32.mxu0 0.0
    %1802 = vmatmul.mubr.f32.gmra.mrb[0].mxu0 %v1712
    %v1803 = vpop.f32.mrb[0].mxu0
    %v1804 = vadd.f32 0.0, %v1803
    %v1805 = vpop.f32.mrb[0].mxu0
    %1806 = vmatprep.mubr.f32.mxu0 0.0
    %1807 = vmatmul.mubr.f32.gmra.mrb[0].mxu0 %v1715
    %v1808 = vpop.f32.mrb[0].mxu0
    %v1809 = vadd.f32 0.0, %v1808
    %v1810 = vpop.f32.mrb[0].mxu0
    %1811 = vmatprep.mubr.f32.mxu0 0.0
    %1812 = vmatmul.mubr.f32.gmra.mrb[0].mxu0 %v1718
    %v1813 = vpop.f32.mrb[0].mxu0
    %v1814 = vadd.f32 0.0, %v1813
    %v1815 = vpop.f32.mrb[0].mxu0
    %1816 = vmatprep.mubr.f32.mxu0 0.0
    %1817 = vmatmul.mubr.f32.gmra.mrb[0].mxu0 %v1721
    %v1818 = vpop.f32.mrb[0].mxu0
    %v1819 = vadd.f32 0.0, %v1818
    %v1820 = vpop.f32.mrb[0].mxu0
    %1821 = vmatprep.mubr.f32.mxu0 0.0
    %1822 = vmatmul.mubr.f32.gmra.mrb[0].mxu0 %v1724
    %v1823 = vpop.f32.mrb[0].mxu0
    %v1824 = vadd.f32 0.0, %v1823
    %v1825 = vpop.f32.mrb[0].mxu0
    %1826 = vmatprep.mubr.f32.mxu0 0.0
    %1827 = vmatmul.mubr.f32.gmra.mrb[0].mxu0 %v1727
    %v1828 = vpop.f32.mrb[0].mxu0
    %v1829 = vadd.f32 0.0, %v1828
    %v1830 = vpop.f32.mrb[0].mxu0
    %1831 = vmatprep.mubr.f32.mxu0 0.0
    %1832 = vmatmul.mubr.f32.gmra.mrb[0].mxu0 %v1730
    %v1833 = vpop.f32.mrb[0].mxu0
    %v1834 = vadd.f32 0.0, %v1833
    %v1835 = vpop.f32.mrb[0].mxu0
    %1836 = vdwg.mxu0
    %v1837 = vlaneseq
    %v1838 = vshrl.u32 %v1837, 7
    %v1839 = vsub.s32 4, %v1838
    %v1840 = vrot.slane %v51, %v1839
    %v1841 = vld [vmem:[%s3] sm:$0xff]
    %v1843 = vsel %vm1296, %v1799, 0
    %v1846 = vsel %vm1296, %v1804, 0
    %1848 = vmatprep.subr.mxu0 0.0
    %1849 = vmatpush1.msra.mxu0 %v1841
    %1850 = vmatprep.subr.mxu0 0.0
    %1851 = vmatpush1.msra.mxu0 0.0
    %1852 = vmatprep.subr.mxu0 0.0
    %1853 = vmatpush1.msra.mxu0 0.0
    %1854 = vmatprep.subr.mxu0 0.0
    %1855 = vmatpush1.msra.mxu0 0.0
    %1856 = vmatprep.subr.mxu0 0.0
    %1857 = vmatpush1.msra.mxu0 0.0
    %1858 = vmatprep.subr.mxu0 0.0
    %1859 = vmatpush1.msra.mxu0 0.0
    %1860 = vmatprep.subr.mxu0 0.0
    %1861 = vmatpush1.msra.mxu0 0.0
    %1862 = vmatprep.subr.mxu0 0.0
    %1863 = vmatpush1.msra.mxu0 0.0
    %1864 = vmatprep.subr.mxu0 0.0
    %1865 = vmatpush1.msra.mxu0 0.0
    %1866 = vmatprep.subr.mxu0 0.0
    %1867 = vmatpush1.msra.mxu0 0.0
    %1868 = vmatprep.subr.mxu0 0.0
    %1869 = vmatpush1.msra.mxu0 0.0
    %1870 = vmatprep.subr.mxu0 0.0
    %1871 = vmatpush1.msra.mxu0 0.0
    %1872 = vmatprep.subr.mxu0 0.0
    %1873 = vmatpush1.msra.mxu0 0.0
    %1874 = vmatprep.subr.mxu0 0.0
    %1875 = vmatpush1.msra.mxu0 0.0
    %1876 = vmatprep.subr.mxu0 0.0
    %1877 = vmatpush1.msra.mxu0 0.0
    %1878 = vmatprep.subr.mxu0 0.0
    %1879 = vmatpush1.msra.mxu0 0.0
    %1880 = vmatprep.subr.mxu0 0.0
    %1881 = vmatpush1.msra.mxu0 0.0
    %1882 = vmatprep.subr.mxu0 0.0
    %1883 = vmatpush1.msra.mxu0 0.0
    %1884 = vmatprep.subr.mxu0 0.0
    %1885 = vmatpush1.msra.mxu0 0.0
    %1886 = vmatprep.subr.mxu0 0.0
    %1887 = vmatpush1.msra.mxu0 0.0
    %1888 = vmatprep.subr.mxu0 0.0
    %1889 = vmatpush1.msra.mxu0 0.0
    %1890 = vmatprep.subr.mxu0 0.0
    %1891 = vmatpush1.msra.mxu0 0.0
    %1892 = vmatprep.subr.mxu0 0.0
    %1893 = vmatpush1.msra.mxu0 0.0
    %1894 = vmatprep.subr.mxu0 0.0
    %1895 = vmatpush1.msra.mxu0 0.0
    %1896 = vmatprep.subr.mxu0 0.0
    %1897 = vmatpush1.msra.mxu0 0.0
    %1898 = vmatprep.subr.mxu0 0.0
    %1899 = vmatpush1.msra.mxu0 0.0
    %1900 = vmatprep.subr.mxu0 0.0
    %1901 = vmatpush1.msra.mxu0 0.0
    %1902 = vmatprep.subr.mxu0 0.0
    %1903 = vmatpush1.msra.mxu0 0.0
    %1904 = vmatprep.subr.mxu0 0.0
    %1905 = vmatpush1.msra.mxu0 0.0
    %1906 = vmatprep.subr.mxu0 0.0
    %1907 = vmatpush1.msra.mxu0 0.0
    %1908 = vmatprep.subr.mxu0 0.0
    %1909 = vmatpush1.msra.mxu0 0.0
    %1910 = vmatprep.subr.mxu0 0.0
    %1911 = vmatpush1.msra.mxu0 0.0
    %1912 = vmatprep.mubr.f32.mxu0 0.0
    %1913 = vmatmul.mubr.f32.gmra.mrb[0].mxu0 %v1843
    %v1914 = vpop.f32.mrb[0].mxu0
    %v1915 = vadd.f32 0.0, %v1914
    %v1916 = vpop.f32.mrb[0].mxu0
    %1917 = vmatprep.mubr.f32.mxu0 0.0
    %1918 = vmatmul.mubr.f32.gmra.mrb[0].mxu0 %v1846
    %v1919 = vpop.f32.mrb[0].mxu0
    %v1920 = vadd.f32 0.0, %v1919
    %v1921 = vpop.f32.mrb[0].mxu0
    %1922 = vdwg.mxu0
    %v1923 = vadd.f32 %v1840, %v1915
    %v1924 = vadd.f32 %v1840, %v1920
    %s1925 = scalar_lea.vmem %s3, 8
    %v1926 = vld [vmem:[%s1925] sm:$0xff]
    %v1928 = vsel %vm1296, %v1809, 0
    %v1931 = vsel %vm1296, %v1814, 0
    %1933 = vmatprep.subr.mxu0 0.0
    %1934 = vmatpush1.msra.mxu0 %v1926
    %1935 = vmatprep.subr.mxu0 0.0
    %1936 = vmatpush1.msra.mxu0 0.0
    %1937 = vmatprep.subr.mxu0 0.0
    %1938 = vmatpush1.msra.mxu0 0.0
    %1939 = vmatprep.subr.mxu0 0.0
    %1940 = vmatpush1.msra.mxu0 0.0
    %1941 = vmatprep.subr.mxu0 0.0
    %1942 = vmatpush1.msra.mxu0 0.0
    %1943 = vmatprep.subr.mxu0 0.0
    %1944 = vmatpush1.msra.mxu0 0.0
    %1945 = vmatprep.subr.mxu0 0.0
    %1946 = vmatpush1.msra.mxu0 0.0
    %1947 = vmatprep.subr.mxu0 0.0
    %1948 = vmatpush1.msra.mxu0 0.0
    %1949 = vmatprep.subr.mxu0 0.0
    %1950 = vmatpush1.msra.mxu0 0.0
    %1951 = vmatprep.subr.mxu0 0.0
    %1952 = vmatpush1.msra.mxu0 0.0
    %1953 = vmatprep.subr.mxu0 0.0
    %1954 = vmatpush1.msra.mxu0 0.0
    %1955 = vmatprep.subr.mxu0 0.0
    %1956 = vmatpush1.msra.mxu0 0.0
    %1957 = vmatprep.subr.mxu0 0.0
    %1958 = vmatpush1.msra.mxu0 0.0
    %1959 = vmatprep.subr.mxu0 0.0
    %1960 = vmatpush1.msra.mxu0 0.0
    %1961 = vmatprep.subr.mxu0 0.0
    %1962 = vmatpush1.msra.mxu0 0.0
    %1963 = vmatprep.subr.mxu0 0.0
    %1964 = vmatpush1.msra.mxu0 0.0
    %1965 = vmatprep.subr.mxu0 0.0
    %1966 = vmatpush1.msra.mxu0 0.0
    %1967 = vmatprep.subr.mxu0 0.0
    %1968 = vmatpush1.msra.mxu0 0.0
    %1969 = vmatprep.subr.mxu0 0.0
    %1970 = vmatpush1.msra.mxu0 0.0
    %1971 = vmatprep.subr.mxu0 0.0
    %1972 = vmatpush1.msra.mxu0 0.0
    %1973 = vmatprep.subr.mxu0 0.0
    %1974 = vmatpush1.msra.mxu0 0.0
    %1975 = vmatprep.subr.mxu0 0.0
    %1976 = vmatpush1.msra.mxu0 0.0
    %1977 = vmatprep.subr.mxu0 0.0
    %1978 = vmatpush1.msra.mxu0 0.0
    %1979 = vmatprep.subr.mxu0 0.0
    %1980 = vmatpush1.msra.mxu0 0.0
    %1981 = vmatprep.subr.mxu0 0.0
    %1982 = vmatpush1.msra.mxu0 0.0
    %1983 = vmatprep.subr.mxu0 0.0
    %1984 = vmatpush1.msra.mxu0 0.0
    %1985 = vmatprep.subr.mxu0 0.0
    %1986 = vmatpush1.msra.mxu0 0.0
    %1987 = vmatprep.subr.mxu0 0.0
    %1988 = vmatpush1.msra.mxu0 0.0
    %1989 = vmatprep.subr.mxu0 0.0
    %1990 = vmatpush1.msra.mxu0 0.0
    %1991 = vmatprep.subr.mxu0 0.0
    %1992 = vmatpush1.msra.mxu0 0.0
    %1993 = vmatprep.subr.mxu0 0.0
    %1994 = vmatpush1.msra.mxu0 0.0
    %1995 = vmatprep.subr.mxu0 0.0
    %1996 = vmatpush1.msra.mxu0 0.0
    %1997 = vmatprep.mubr.f32.mxu0 0.0
    %1998 = vmatmul.mubr.f32.gmra.mrb[0].mxu0 %v1928
    %v1999 = vpop.f32.mrb[0].mxu0
    %v2000 = vadd.f32 0.0, %v1999
    %v2001 = vpop.f32.mrb[0].mxu0
    %2002 = vmatprep.mubr.f32.mxu0 0.0
    %2003 = vmatmul.mubr.f32.gmra.mrb[0].mxu0 %v1931
    %v2004 = vpop.f32.mrb[0].mxu0
    %v2005 = vadd.f32 0.0, %v2004
    %v2006 = vpop.f32.mrb[0].mxu0
    %2007 = vdwg.mxu0
    %v2008 = vadd.f32 %v1923, %v2000
    %v2009 = vadd.f32 %v1924, %v2005
    %s2010 = scalar_lea.vmem %s3, 16
    %v2011 = vld [vmem:[%s2010] sm:$0xff]
    %v2013 = vsel %vm1296, %v1819, 0
    %v2016 = vsel %vm1296, %v1824, 0
    %2018 = vmatprep.subr.mxu0 0.0
    %2019 = vmatpush1.msra.mxu0 %v2011
    %2020 = vmatprep.subr.mxu0 0.0
    %2021 = vmatpush1.msra.mxu0 0.0
    %2022 = vmatprep.subr.mxu0 0.0
    %2023 = vmatpush1.msra.mxu0 0.0
    %2024 = vmatprep.subr.mxu0 0.0
    %2025 = vmatpush1.msra.mxu0 0.0
    %2026 = vmatprep.subr.mxu0 0.0
    %2027 = vmatpush1.msra.mxu0 0.0
    %2028 = vmatprep.subr.mxu0 0.0
    %2029 = vmatpush1.msra.mxu0 0.0
    %2030 = vmatprep.subr.mxu0 0.0
    %2031 = vmatpush1.msra.mxu0 0.0
    %2032 = vmatprep.subr.mxu0 0.0
    %2033 = vmatpush1.msra.mxu0 0.0
    %2034 = vmatprep.subr.mxu0 0.0
    %2035 = vmatpush1.msra.mxu0 0.0
    %2036 = vmatprep.subr.mxu0 0.0
    %2037 = vmatpush1.msra.mxu0 0.0
    %2038 = vmatprep.subr.mxu0 0.0
    %2039 = vmatpush1.msra.mxu0 0.0
    %2040 = vmatprep.subr.mxu0 0.0
    %2041 = vmatpush1.msra.mxu0 0.0
    %2042 = vmatprep.subr.mxu0 0.0
    %2043 = vmatpush1.msra.mxu0 0.0
    %2044 = vmatprep.subr.mxu0 0.0
    %2045 = vmatpush1.msra.mxu0 0.0
    %2046 = vmatprep.subr.mxu0 0.0
    %2047 = vmatpush1.msra.mxu0 0.0
    %2048 = vmatprep.subr.mxu0 0.0
    %2049 = vmatpush1.msra.mxu0 0.0
    %2050 = vmatprep.subr.mxu0 0.0
    %2051 = vmatpush1.msra.mxu0 0.0
    %2052 = vmatprep.subr.mxu0 0.0
    %2053 = vmatpush1.msra.mxu0 0.0
    %2054 = vmatprep.subr.mxu0 0.0
    %2055 = vmatpush1.msra.mxu0 0.0
    %2056 = vmatprep.subr.mxu0 0.0
    %2057 = vmatpush1.msra.mxu0 0.0
    %2058 = vmatprep.subr.mxu0 0.0
    %2059 = vmatpush1.msra.mxu0 0.0
    %2060 = vmatprep.subr.mxu0 0.0
    %2061 = vmatpush1.msra.mxu0 0.0
    %2062 = vmatprep.subr.mxu0 0.0
    %2063 = vmatpush1.msra.mxu0 0.0
    %2064 = vmatprep.subr.mxu0 0.0
    %2065 = vmatpush1.msra.mxu0 0.0
    %2066 = vmatprep.subr.mxu0 0.0
    %2067 = vmatpush1.msra.mxu0 0.0
    %2068 = vmatprep.subr.mxu0 0.0
    %2069 = vmatpush1.msra.mxu0 0.0
    %2070 = vmatprep.subr.mxu0 0.0
    %2071 = vmatpush1.msra.mxu0 0.0
    %2072 = vmatprep.subr.mxu0 0.0
    %2073 = vmatpush1.msra.mxu0 0.0
    %2074 = vmatprep.subr.mxu0 0.0
    %2075 = vmatpush1.msra.mxu0 0.0
    %2076 = vmatprep.subr.mxu0 0.0
    %2077 = vmatpush1.msra.mxu0 0.0
    %2078 = vmatprep.subr.mxu0 0.0
    %2079 = vmatpush1.msra.mxu0 0.0
    %2080 = vmatprep.subr.mxu0 0.0
    %2081 = vmatpush1.msra.mxu0 0.0
    %2082 = vmatprep.mubr.f32.mxu0 0.0
    %2083 = vmatmul.mubr.f32.gmra.mrb[0].mxu0 %v2013
    %v2084 = vpop.f32.mrb[0].mxu0
    %v2085 = vadd.f32 0.0, %v2084
    %v2086 = vpop.f32.mrb[0].mxu0
    %2087 = vmatprep.mubr.f32.mxu0 0.0
    %2088 = vmatmul.mubr.f32.gmra.mrb[0].mxu0 %v2016
    %v2089 = vpop.f32.mrb[0].mxu0
    %v2090 = vadd.f32 0.0, %v2089
    %v2091 = vpop.f32.mrb[0].mxu0
    %2092 = vdwg.mxu0
    %v2093 = vadd.f32 %v2008, %v2085
    %v2094 = vadd.f32 %v2009, %v2090
    %s2095 = scalar_lea.vmem %s3, 24
    %v2096 = vld [vmem:[%s2095] sm:$0xff]
    %v2098 = vsel %vm1296, %v1829, 0
    %v2101 = vsel %vm1296, %v1834, 0
    %2103 = vmatprep.subr.mxu0 0.0
    %2104 = vmatpush1.msra.mxu0 %v2096
    %2105 = vmatprep.subr.mxu0 0.0
    %2106 = vmatpush1.msra.mxu0 0.0
    %2107 = vmatprep.subr.mxu0 0.0
    %2108 = vmatpush1.msra.mxu0 0.0
    %2109 = vmatprep.subr.mxu0 0.0
    %2110 = vmatpush1.msra.mxu0 0.0
    %2111 = vmatprep.subr.mxu0 0.0
    %2112 = vmatpush1.msra.mxu0 0.0
    %2113 = vmatprep.subr.mxu0 0.0
    %2114 = vmatpush1.msra.mxu0 0.0
    %2115 = vmatprep.subr.mxu0 0.0
    %2116 = vmatpush1.msra.mxu0 0.0
    %2117 = vmatprep.subr.mxu0 0.0
    %2118 = vmatpush1.msra.mxu0 0.0
    %2119 = vmatprep.subr.mxu0 0.0
    %2120 = vmatpush1.msra.mxu0 0.0
    %2121 = vmatprep.subr.mxu0 0.0
    %2122 = vmatpush1.msra.mxu0 0.0
    %2123 = vmatprep.subr.mxu0 0.0
    %2124 = vmatpush1.msra.mxu0 0.0
    %2125 = vmatprep.subr.mxu0 0.0
    %2126 = vmatpush1.msra.mxu0 0.0
    %2127 = vmatprep.subr.mxu0 0.0
    %2128 = vmatpush1.msra.mxu0 0.0
    %2129 = vmatprep.subr.mxu0 0.0
    %2130 = vmatpush1.msra.mxu0 0.0
    %2131 = vmatprep.subr.mxu0 0.0
    %2132 = vmatpush1.msra.mxu0 0.0
    %2133 = vmatprep.subr.mxu0 0.0
    %2134 = vmatpush1.msra.mxu0 0.0
    %2135 = vmatprep.subr.mxu0 0.0
    %2136 = vmatpush1.msra.mxu0 0.0
    %2137 = vmatprep.subr.mxu0 0.0
    %2138 = vmatpush1.msra.mxu0 0.0
    %2139 = vmatprep.subr.mxu0 0.0
    %2140 = vmatpush1.msra.mxu0 0.0
    %2141 = vmatprep.subr.mxu0 0.0
    %2142 = vmatpush1.msra.mxu0 0.0
    %2143 = vmatprep.subr.mxu0 0.0
    %2144 = vmatpush1.msra.mxu0 0.0
    %2145 = vmatprep.subr.mxu0 0.0
    %2146 = vmatpush1.msra.mxu0 0.0
    %2147 = vmatprep.subr.mxu0 0.0
    %2148 = vmatpush1.msra.mxu0 0.0
    %2149 = vmatprep.subr.mxu0 0.0
    %2150 = vmatpush1.msra.mxu0 0.0
    %2151 = vmatprep.subr.mxu0 0.0
    %2152 = vmatpush1.msra.mxu0 0.0
    %2153 = vmatprep.subr.mxu0 0.0
    %2154 = vmatpush1.msra.mxu0 0.0
    %2155 = vmatprep.subr.mxu0 0.0
    %2156 = vmatpush1.msra.mxu0 0.0
    %2157 = vmatprep.subr.mxu0 0.0
    %2158 = vmatpush1.msra.mxu0 0.0
    %2159 = vmatprep.subr.mxu0 0.0
    %2160 = vmatpush1.msra.mxu0 0.0
    %2161 = vmatprep.subr.mxu0 0.0
    %2162 = vmatpush1.msra.mxu0 0.0
    %2163 = vmatprep.subr.mxu0 0.0
    %2164 = vmatpush1.msra.mxu0 0.0
    %2165 = vmatprep.subr.mxu0 0.0
    %2166 = vmatpush1.msra.mxu0 0.0
    %2167 = vmatprep.mubr.f32.mxu0 0.0
    %2168 = vmatmul.mubr.f32.gmra.mrb[0].mxu0 %v2098
    %v2169 = vpop.f32.mrb[0].mxu0
    %v2170 = vadd.f32 0.0, %v2169
    %v2171 = vpop.f32.mrb[0].mxu0
    %2172 = vmatprep.mubr.f32.mxu0 0.0
    %2173 = vmatmul.mubr.f32.gmra.mrb[0].mxu0 %v2101
    %v2174 = vpop.f32.mrb[0].mxu0
    %v2175 = vadd.f32 0.0, %v2174
    %v2176 = vpop.f32.mrb[0].mxu0
    %2177 = vdwg.mxu0
    %v2178 = vadd.f32 %v2093, %v2170
    %v2179 = vadd.f32 %v2094, %v2175
    %v2180 = vadd.f32 %v49, %v2178
    %v2181 = vadd.f32 %v50, %v2179
    %v2182 = vlaneseq
    %v2183 = vshrl.u32 %v2182, 7
    %v2184 = vsub.s32 2, %v2183
    %v2185 = vrot.slane %v51, %v2184
    %v2186 = vlaneseq
    %v2187 = vshrl.u32 %v2186, 7
    %v2188 = vsub.s32 3, %v2187
    %v2189 = vrot.slane %v51, %v2188
    %v2191 = vsel %vm68, %v2180, 0
    %v2194 = vsel %vm68, %v2181, 0
    %2196 = vmatprep.subr.mxu0 0.0
    %2197 = vmatpush1.msra.mxu0 %v52
    %2198 = vmatprep.subr.mxu0 0.0
    %2199 = vmatpush1.msra.mxu0 %v53
    %2200 = vmatprep.subr.mxu0 0.0
    %2201 = vmatpush1.msra.mxu0 %v54
    %2202 = vmatprep.subr.mxu0 0.0
    %2203 = vmatpush1.msra.mxu0 %v55
    %2204 = vmatprep.subr.mxu0 0.0
    %2205 = vmatpush1.msra.mxu0 0.0
    %2206 = vmatprep.subr.mxu0 0.0
    %2207 = vmatpush1.msra.mxu0 0.0
    %2208 = vmatprep.subr.mxu0 0.0
    %2209 = vmatpush1.msra.mxu0 0.0
    %2210 = vmatprep.subr.mxu0 0.0
    %2211 = vmatpush1.msra.mxu0 0.0
    %2212 = vmatprep.subr.mxu0 0.0
    %2213 = vmatpush1.msra.mxu0 0.0
    %2214 = vmatprep.subr.mxu0 0.0
    %2215 = vmatpush1.msra.mxu0 0.0
    %2216 = vmatprep.subr.mxu0 0.0
    %2217 = vmatpush1.msra.mxu0 0.0
    %2218 = vmatprep.subr.mxu0 0.0
    %2219 = vmatpush1.msra.mxu0 0.0
    %2220 = vmatprep.subr.mxu0 0.0
    %2221 = vmatpush1.msra.mxu0 0.0
    %2222 = vmatprep.subr.mxu0 0.0
    %2223 = vmatpush1.msra.mxu0 0.0
    %2224 = vmatprep.subr.mxu0 0.0
    %2225 = vmatpush1.msra.mxu0 0.0
    %2226 = vmatprep.subr.mxu0 0.0
    %2227 = vmatpush1.msra.mxu0 0.0
    %2228 = vmatprep.subr.mxu0 0.0
    %2229 = vmatpush1.msra.mxu0 0.0
    %2230 = vmatprep.subr.mxu0 0.0
    %2231 = vmatpush1.msra.mxu0 0.0
    %2232 = vmatprep.subr.mxu0 0.0
    %2233 = vmatpush1.msra.mxu0 0.0
    %2234 = vmatprep.subr.mxu0 0.0
    %2235 = vmatpush1.msra.mxu0 0.0
    %2236 = vmatprep.subr.mxu0 0.0
    %2237 = vmatpush1.msra.mxu0 0.0
    %2238 = vmatprep.subr.mxu0 0.0
    %2239 = vmatpush1.msra.mxu0 0.0
    %2240 = vmatprep.subr.mxu0 0.0
    %2241 = vmatpush1.msra.mxu0 0.0
    %2242 = vmatprep.subr.mxu0 0.0
    %2243 = vmatpush1.msra.mxu0 0.0
    %2244 = vmatprep.subr.mxu0 0.0
    %2245 = vmatpush1.msra.mxu0 0.0
    %2246 = vmatprep.subr.mxu0 0.0
    %2247 = vmatpush1.msra.mxu0 0.0
    %2248 = vmatprep.subr.mxu0 0.0
    %2249 = vmatpush1.msra.mxu0 0.0
    %2250 = vmatprep.subr.mxu0 0.0
    %2251 = vmatpush1.msra.mxu0 0.0
    %2252 = vmatprep.subr.mxu0 0.0
    %2253 = vmatpush1.msra.mxu0 0.0
    %2254 = vmatprep.subr.mxu0 0.0
    %2255 = vmatpush1.msra.mxu0 0.0
    %2256 = vmatprep.subr.mxu0 0.0
    %2257 = vmatpush1.msra.mxu0 0.0
    %2258 = vmatprep.subr.mxu0 0.0
    %2259 = vmatpush1.msra.mxu0 0.0
    %2260 = vmatprep.mubr.f32.mxu0 0.0
    %2261 = vmatmul.mubr.f32.gmra.mrb[0].mxu0 %v2191
    %v2262 = vpop.f32.mrb[0].mxu0
    %v2263 = vadd.f32 0.0, %v2262
    %v2264 = vpop.f32.mrb[0].mxu0
    %2265 = vmatprep.mubr.f32.mxu0 0.0
    %2266 = vmatmul.mubr.f32.gmra.mrb[0].mxu0 %v2194
    %v2267 = vpop.f32.mrb[0].mxu0
    %v2268 = vadd.f32 0.0, %v2267
    %v2269 = vpop.f32.mrb[0].mxu0
    %2270 = vdwg.mxu0
    %v2271 = vmul.f32 %v2180, %v2180
    %v2272 = vmul.f32 %v2181, %v2181
    %v2274 = vsel %vm68, %v2271, 0
    %v2277 = vsel %vm68, %v2272, 0
    %2279 = vmatprep.subr.mxu0 0.0
    %2280 = vmatpush1.msra.mxu0 %v52
    %2281 = vmatprep.subr.mxu0 0.0
    %2282 = vmatpush1.msra.mxu0 %v53
    %2283 = vmatprep.subr.mxu0 0.0
    %2284 = vmatpush1.msra.mxu0 %v54
    %2285 = vmatprep.subr.mxu0 0.0
    %2286 = vmatpush1.msra.mxu0 %v55
    %2287 = vmatprep.subr.mxu0 0.0
    %2288 = vmatpush1.msra.mxu0 0.0
    %2289 = vmatprep.subr.mxu0 0.0
    %2290 = vmatpush1.msra.mxu0 0.0
    %2291 = vmatprep.subr.mxu0 0.0
    %2292 = vmatpush1.msra.mxu0 0.0
    %2293 = vmatprep.subr.mxu0 0.0
    %2294 = vmatpush1.msra.mxu0 0.0
    %2295 = vmatprep.subr.mxu0 0.0
    %2296 = vmatpush1.msra.mxu0 0.0
    %2297 = vmatprep.subr.mxu0 0.0
    %2298 = vmatpush1.msra.mxu0 0.0
    %2299 = vmatprep.subr.mxu0 0.0
    %2300 = vmatpush1.msra.mxu0 0.0
    %2301 = vmatprep.subr.mxu0 0.0
    %2302 = vmatpush1.msra.mxu0 0.0
    %2303 = vmatprep.subr.mxu0 0.0
    %2304 = vmatpush1.msra.mxu0 0.0
    %2305 = vmatprep.subr.mxu0 0.0
    %2306 = vmatpush1.msra.mxu0 0.0
    %2307 = vmatprep.subr.mxu0 0.0
    %2308 = vmatpush1.msra.mxu0 0.0
    %2309 = vmatprep.subr.mxu0 0.0
    %2310 = vmatpush1.msra.mxu0 0.0
    %2311 = vmatprep.subr.mxu0 0.0
    %2312 = vmatpush1.msra.mxu0 0.0
    %2313 = vmatprep.subr.mxu0 0.0
    %2314 = vmatpush1.msra.mxu0 0.0
    %2315 = vmatprep.subr.mxu0 0.0
    %2316 = vmatpush1.msra.mxu0 0.0
    %2317 = vmatprep.subr.mxu0 0.0
    %2318 = vmatpush1.msra.mxu0 0.0
    %2319 = vmatprep.subr.mxu0 0.0
    %2320 = vmatpush1.msra.mxu0 0.0
    %2321 = vmatprep.subr.mxu0 0.0
    %2322 = vmatpush1.msra.mxu0 0.0
    %2323 = vmatprep.subr.mxu0 0.0
    %2324 = vmatpush1.msra.mxu0 0.0
    %2325 = vmatprep.subr.mxu0 0.0
    %2326 = vmatpush1.msra.mxu0 0.0
    %2327 = vmatprep.subr.mxu0 0.0
    %2328 = vmatpush1.msra.mxu0 0.0
    %2329 = vmatprep.subr.mxu0 0.0
    %2330 = vmatpush1.msra.mxu0 0.0
    %2331 = vmatprep.subr.mxu0 0.0
    %2332 = vmatpush1.msra.mxu0 0.0
    %2333 = vmatprep.subr.mxu0 0.0
    %2334 = vmatpush1.msra.mxu0 0.0
    %2335 = vmatprep.subr.mxu0 0.0
    %2336 = vmatpush1.msra.mxu0 0.0
    %2337 = vmatprep.subr.mxu0 0.0
    %2338 = vmatpush1.msra.mxu0 0.0
    %2339 = vmatprep.subr.mxu0 0.0
    %2340 = vmatpush1.msra.mxu0 0.0
    %2341 = vmatprep.subr.mxu0 0.0
    %2342 = vmatpush1.msra.mxu0 0.0
    %2343 = vmatprep.mubr.f32.mxu0 0.0
    %2344 = vmatmul.mubr.f32.gmra.mrb[0].mxu0 %v2274
    %v2345 = vpop.f32.mrb[0].mxu0
    %v2346 = vadd.f32 0.0, %v2345
    %v2347 = vpop.f32.mrb[0].mxu0
    %2348 = vmatprep.mubr.f32.mxu0 0.0
    %2349 = vmatmul.mubr.f32.gmra.mrb[0].mxu0 %v2277
    %v2350 = vpop.f32.mrb[0].mxu0
    %v2351 = vadd.f32 0.0, %v2350
    %v2352 = vpop.f32.mrb[0].mxu0
    %2353 = vdwg.mxu0
    %v2354 = vmul.f32 %v2263, 0.0625
    %v2355 = vmul.f32 %v2268, 0.0625
    %v2356 = vmul.f32 %v2346, 0.0625
    %v2357 = vmul.f32 %v2351, 0.0625
    %v2358 = vmul.f32 %v2354, %v2354
    %v2359 = vmul.f32 %v2355, %v2355
    %v2360 = vsub.f32 %v2356, %v2358
    %v2361 = vsub.f32 %v2357, %v2359
    %v2362 = vmax.f32 %v2360, 0.0
    %v2363 = vmax.f32 %v2361, 0.0
    %2365 = vset.pattern.permute.xlu0 0
    %2366 = vperm.xlu0 %2365, %v2354
    %v2367 = vpop.permute.xlu0 %2366
    %2370 = vset.pattern.permute.xlu0 0
    %2371 = vperm.xlu0 %2370, %v2355
    %v2372 = vpop.permute.xlu0 %2371
    %v2374 = vsub.f32 %v2180, %v2367
    %v2375 = vsub.f32 %v2181, %v2372
    %v2376 = vadd.f32 %v2362, 1e-05
    %v2377 = vadd.f32 %v2363, 1e-05
    %v2378 = vrsqrt.pop %v2376
    %v2379 = vrsqrt.pop %v2377
    %2381 = vset.pattern.permute.xlu0 0
    %2382 = vperm.xlu0 %2381, %v2378
    %v2383 = vpop.permute.xlu0 %2382
    %2386 = vset.pattern.permute.xlu0 0
    %2387 = vperm.xlu0 %2386, %v2379
    %v2388 = vpop.permute.xlu0 %2387
    %v2390 = vmul.f32 %v2374, %v2383
    %v2391 = vmul.f32 %v2375, %v2388
    %v2392 = vmul.f32 %v2390, %v2185
    %v2393 = vmul.f32 %v2391, %v2185
    %v2394 = vadd.f32 %v2392, %v2189
    %v2395 = vadd.f32 %v2393, %v2189
    %v2396 = vmul.f32 %v2394, %v59
    %v2397 = vmul.f32 %v2395, %v59
    %v2398 = vmul.f32 %v278, %v2396
    %v2399 = vmul.f32 %v278, %v2397
    %v2400 = vadd.f32 %v2398, 0.0
    %v2401 = vadd.f32 %v2399, 0.0
    %v2402 = vmul.f32 %v2263, 0.03125
    %v2403 = vmul.f32 %v2268, 0.03125
    %v2404 = vmul.f32 %v2346, 0.03125
    %v2405 = vmul.f32 %v2351, 0.03125
    %v2406 = vmul.f32 %v2402, %v2402
    %v2407 = vmul.f32 %v2403, %v2403
    %v2408 = vsub.f32 %v2404, %v2406
    %v2409 = vsub.f32 %v2405, %v2407
    %v2410 = vmax.f32 %v2408, 0.0
    %v2411 = vmax.f32 %v2409, 0.0
    %2413 = vset.pattern.permute.xlu0 1
    %2414 = vperm.xlu0 %2413, %v2402
    %v2415 = vpop.permute.xlu0 %2414
    %2418 = vset.pattern.permute.xlu0 1
    %2419 = vperm.xlu0 %2418, %v2403
    %v2420 = vpop.permute.xlu0 %2419
    %v2422 = vsub.f32 %v2180, %v2415
    %v2423 = vsub.f32 %v2181, %v2420
    %v2424 = vadd.f32 %v2410, 1e-05
    %v2425 = vadd.f32 %v2411, 1e-05
    %v2426 = vrsqrt.pop %v2424
    %v2427 = vrsqrt.pop %v2425
    %2429 = vset.pattern.permute.xlu0 1
    %2430 = vperm.xlu0 %2429, %v2426
    %v2431 = vpop.permute.xlu0 %2430
    %2434 = vset.pattern.permute.xlu0 1
    %2435 = vperm.xlu0 %2434, %v2427
    %v2436 = vpop.permute.xlu0 %2435
    %v2438 = vmul.f32 %v2422, %v2431
    %v2439 = vmul.f32 %v2423, %v2436
    %v2440 = vmul.f32 %v2438, %v2185
    %v2441 = vmul.f32 %v2439, %v2185
    %v2442 = vadd.f32 %v2440, %v2189
    %v2443 = vadd.f32 %v2441, %v2189
    %v2444 = vmul.f32 %v326, %v2442
    %v2445 = vmul.f32 %v326, %v2443
    %v2446 = vadd.f32 %v2400, %v2444
    %v2447 = vadd.f32 %v2401, %v2445
    %v2448 = vld [vmem:[%s4] sm:$0xff]
    %v2449 = vld [vmem:[%s4 + $0x8] sm:$0xff]
    %v2450 = vld [vmem:[%s4 + $0x10] sm:$0xff]
    %v2451 = vld [vmem:[%s4 + $0x18] sm:$0xff]
    %v2452 = vld [vmem:[%s5] sm:$0x1]
    %v2454 = vlaneseq
    %v2455 = vshrl.u32 %v2454, 7
    %v2456 = vsub.s32 0, %v2455
    %v2457 = vrot.slane %v2452, %v2456
    %v2460 = vsel %vm68, %v2446, 0
    %v2463 = vsel %vm68, %v2447, 0
    %2465 = vmatprep.subr.mxu0 0.0
    %2466 = vmatpush1.msra.mxu0 %v2448
    %2467 = vmatprep.subr.mxu0 0.0
    %2468 = vmatpush1.msra.mxu0 %v2449
    %2469 = vmatprep.subr.mxu0 0.0
    %2470 = vmatpush1.msra.mxu0 %v2450
    %2471 = vmatprep.subr.mxu0 0.0
    %2472 = vmatpush1.msra.mxu0 %v2451
    %2473 = vmatprep.subr.mxu0 0.0
    %2474 = vmatpush1.msra.mxu0 0.0
    %2475 = vmatprep.subr.mxu0 0.0
    %2476 = vmatpush1.msra.mxu0 0.0
    %2477 = vmatprep.subr.mxu0 0.0
    %2478 = vmatpush1.msra.mxu0 0.0
    %2479 = vmatprep.subr.mxu0 0.0
    %2480 = vmatpush1.msra.mxu0 0.0
    %2481 = vmatprep.subr.mxu0 0.0
    %2482 = vmatpush1.msra.mxu0 0.0
    %2483 = vmatprep.subr.mxu0 0.0
    %2484 = vmatpush1.msra.mxu0 0.0
    %2485 = vmatprep.subr.mxu0 0.0
    %2486 = vmatpush1.msra.mxu0 0.0
    %2487 = vmatprep.subr.mxu0 0.0
    %2488 = vmatpush1.msra.mxu0 0.0
    %2489 = vmatprep.subr.mxu0 0.0
    %2490 = vmatpush1.msra.mxu0 0.0
    %2491 = vmatprep.subr.mxu0 0.0
    %2492 = vmatpush1.msra.mxu0 0.0
    %2493 = vmatprep.subr.mxu0 0.0
    %2494 = vmatpush1.msra.mxu0 0.0
    %2495 = vmatprep.subr.mxu0 0.0
    %2496 = vmatpush1.msra.mxu0 0.0
    %2497 = vmatprep.subr.mxu0 0.0
    %2498 = vmatpush1.msra.mxu0 0.0
    %2499 = vmatprep.subr.mxu0 0.0
    %2500 = vmatpush1.msra.mxu0 0.0
    %2501 = vmatprep.subr.mxu0 0.0
    %2502 = vmatpush1.msra.mxu0 0.0
    %2503 = vmatprep.subr.mxu0 0.0
    %2504 = vmatpush1.msra.mxu0 0.0
    %2505 = vmatprep.subr.mxu0 0.0
    %2506 = vmatpush1.msra.mxu0 0.0
    %2507 = vmatprep.subr.mxu0 0.0
    %2508 = vmatpush1.msra.mxu0 0.0
    %2509 = vmatprep.subr.mxu0 0.0
    %2510 = vmatpush1.msra.mxu0 0.0
    %2511 = vmatprep.subr.mxu0 0.0
    %2512 = vmatpush1.msra.mxu0 0.0
    %2513 = vmatprep.subr.mxu0 0.0
    %2514 = vmatpush1.msra.mxu0 0.0
    %2515 = vmatprep.subr.mxu0 0.0
    %2516 = vmatpush1.msra.mxu0 0.0
    %2517 = vmatprep.subr.mxu0 0.0
    %2518 = vmatpush1.msra.mxu0 0.0
    %2519 = vmatprep.subr.mxu0 0.0
    %2520 = vmatpush1.msra.mxu0 0.0
    %2521 = vmatprep.subr.mxu0 0.0
    %2522 = vmatpush1.msra.mxu0 0.0
    %2523 = vmatprep.subr.mxu0 0.0
    %2524 = vmatpush1.msra.mxu0 0.0
    %2525 = vmatprep.subr.mxu0 0.0
    %2526 = vmatpush1.msra.mxu0 0.0
    %2527 = vmatprep.subr.mxu0 0.0
    %2528 = vmatpush1.msra.mxu0 0.0
    %2529 = vmatprep.mubr.f32.mxu0 0.0
    %2530 = vmatmul.mubr.f32.gmra.mrb[0].mxu0 %v2460
    %v2531 = vpop.f32.mrb[0].mxu0
    %v2532 = vadd.f32 %v2457, %v2531
    %v2533 = vpop.f32.mrb[0].mxu0
    %2534 = vmatprep.mubr.f32.mxu0 0.0
    %2535 = vmatmul.mubr.f32.gmra.mrb[0].mxu0 %v2463
    %v2536 = vpop.f32.mrb[0].mxu0
    %v2537 = vadd.f32 %v2457, %v2536
    %v2538 = vpop.f32.mrb[0].mxu0
    %2539 = vdwg.mxu0
    %v2540 = vmax.f32 %v2532, 0.0
    %v2541 = vmax.f32 %v2537, 0.0
    %v2542 = vld [vmem:[%s6] sm:$0xff]
    %v2543 = vld [vmem:[%s6 + $0x8] sm:$0xff]
    %v2544 = vld [vmem:[%s6 + $0x10] sm:$0xff]
    %v2545 = vld [vmem:[%s6 + $0x18] sm:$0xff]
    %v2546 = vld [vmem:[%s6 + $0x20] sm:$0xff]
    %v2547 = vld [vmem:[%s6 + $0x28] sm:$0xff]
    %v2548 = vld [vmem:[%s6 + $0x30] sm:$0xff]
    %v2549 = vld [vmem:[%s6 + $0x38] sm:$0xff]
    %v2550 = vld [vmem:[%s6 + $0x40] sm:$0xff]
    %v2551 = vld [vmem:[%s6 + $0x48] sm:$0xff]
    %v2552 = vld [vmem:[%s6 + $0x50] sm:$0xff]
    %v2553 = vld [vmem:[%s6 + $0x58] sm:$0xff]
    %v2554 = vld [vmem:[%s6 + $0x60] sm:$0xff]
    %v2555 = vld [vmem:[%s6 + $0x68] sm:$0xff]
    %v2556 = vld [vmem:[%s6 + $0x70] sm:$0xff]
    %v2557 = vld [vmem:[%s6 + $0x78] sm:$0xff]
    %v2558 = vlaneseq
    %v2559 = vshrl.u32 %v2558, 7
    %v2560 = vsub.s32 5, %v2559
    %v2561 = vrot.slane %v51, %v2560
    %2562 = vmatprep.subr.mxu0 0.0
    %2563 = vmatpush1.msra.mxu0 %v2542
    %2564 = vmatprep.subr.mxu0 0.0
    %2565 = vmatpush1.msra.mxu0 %v2543
    %2566 = vmatprep.subr.mxu0 0.0
    %2567 = vmatpush1.msra.mxu0 %v2544
    %2568 = vmatprep.subr.mxu0 0.0
    %2569 = vmatpush1.msra.mxu0 %v2545
    %2570 = vmatprep.subr.mxu0 0.0
    %2571 = vmatpush1.msra.mxu0 %v2546
    %2572 = vmatprep.subr.mxu0 0.0
    %2573 = vmatpush1.msra.mxu0 %v2547
    %2574 = vmatprep.subr.mxu0 0.0
    %2575 = vmatpush1.msra.mxu0 %v2548
    %2576 = vmatprep.subr.mxu0 0.0
    %2577 = vmatpush1.msra.mxu0 %v2549
    %2578 = vmatprep.subr.mxu0 0.0
    %2579 = vmatpush1.msra.mxu0 %v2550
    %2580 = vmatprep.subr.mxu0 0.0
    %2581 = vmatpush1.msra.mxu0 %v2551
    %2582 = vmatprep.subr.mxu0 0.0
    %2583 = vmatpush1.msra.mxu0 %v2552
    %2584 = vmatprep.subr.mxu0 0.0
    %2585 = vmatpush1.msra.mxu0 %v2553
    %2586 = vmatprep.subr.mxu0 0.0
    %2587 = vmatpush1.msra.mxu0 %v2554
    %2588 = vmatprep.subr.mxu0 0.0
    %2589 = vmatpush1.msra.mxu0 %v2555
    %2590 = vmatprep.subr.mxu0 0.0
    %2591 = vmatpush1.msra.mxu0 %v2556
    %2592 = vmatprep.subr.mxu0 0.0
    %2593 = vmatpush1.msra.mxu0 %v2557
    %2594 = vmatprep.subr.mxu0 0.0
    %2595 = vmatpush1.msra.mxu0 0.0
    %2596 = vmatprep.subr.mxu0 0.0
    %2597 = vmatpush1.msra.mxu0 0.0
    %2598 = vmatprep.subr.mxu0 0.0
    %2599 = vmatpush1.msra.mxu0 0.0
    %2600 = vmatprep.subr.mxu0 0.0
    %2601 = vmatpush1.msra.mxu0 0.0
    %2602 = vmatprep.subr.mxu0 0.0
    %2603 = vmatpush1.msra.mxu0 0.0
    %2604 = vmatprep.subr.mxu0 0.0
    %2605 = vmatpush1.msra.mxu0 0.0
    %2606 = vmatprep.subr.mxu0 0.0
    %2607 = vmatpush1.msra.mxu0 0.0
    %2608 = vmatprep.subr.mxu0 0.0
    %2609 = vmatpush1.msra.mxu0 0.0
    %2610 = vmatprep.subr.mxu0 0.0
    %2611 = vmatpush1.msra.mxu0 0.0
    %2612 = vmatprep.subr.mxu0 0.0
    %2613 = vmatpush1.msra.mxu0 0.0
    %2614 = vmatprep.subr.mxu0 0.0
    %2615 = vmatpush1.msra.mxu0 0.0
    %2616 = vmatprep.subr.mxu0 0.0
    %2617 = vmatpush1.msra.mxu0 0.0
    %2618 = vmatprep.subr.mxu0 0.0
    %2619 = vmatpush1.msra.mxu0 0.0
    %2620 = vmatprep.subr.mxu0 0.0
    %2621 = vmatpush1.msra.mxu0 0.0
    %2622 = vmatprep.subr.mxu0 0.0
    %2623 = vmatpush1.msra.mxu0 0.0
    %2624 = vmatprep.subr.mxu0 0.0
    %2625 = vmatpush1.msra.mxu0 0.0
    %2626 = vmatprep.mubr.f32.mxu0 0.0
    %2627 = vmatmul.mubr.f32.gmra.mrb[0].mxu0 %v2540
    %v2628 = vpop.f32.mrb[0].mxu0
    %v2629 = vadd.f32 %v2561, %v2628
    %v2630 = vpop.f32.mrb[0].mxu0
    %2631 = vmatprep.mubr.f32.mxu0 0.0
    %2632 = vmatmul.mubr.f32.gmra.mrb[0].mxu0 %v2541
    %v2633 = vpop.f32.mrb[0].mxu0
    %v2634 = vadd.f32 %v2561, %v2633
    %v2635 = vpop.f32.mrb[0].mxu0
    %2636 = vdwg.mxu0
    %v2637 = vadd.f32 %v2180, %v2629
    %v2638 = vadd.f32 %v2181, %v2634
    %2639 = vst.msk [vmem:[#allocation5] sm:$0xff] %vm68, %v2637
    %2640 = vst.msk [vmem:[#allocation5 + $0x8] sm:$0xff] %vm68, %v2638
    // Predicated region
    $region46: #{_mixed_block_pallas.1} parent=1 // pred_check
      _
    $region47: #{_mixed_block_pallas.1} parent=1 // pred_check_branch
      %2642 = sbr.rel (0) target = $region49
    $region48: #{_mixed_block_pallas.1} parent=1 // pred_region
      %s2644 = ssub.s32 256, 256
      %2645 = vsyncadd [#allocation3], %s2644
      %s2646 = sshll.u32 [#allocation5], 4
      %s2647 = int_to_ptr.vmem [resolvable:$true] %s2646
      %2652 = dma.vmem_to_hbm [thread:$0]  %s2647, 256, %s10, [#allocation3], 128, 128, 8
    $region49: #{_mixed_block_pallas.1} parent=1 // pred_fallthru
      _
    // Predicated region
    $region50: #{_mixed_block_pallas.1} parent=1 // pred_check
      _
    $region51: #{_mixed_block_pallas.1} parent=1 // pred_check_branch
      %2654 = sbr.rel (0) target = $region53
    $region52: #{_mixed_block_pallas.1} parent=1 // pred_region
      %2655 = dma.done [#allocation3], 256
    $region53: #{_mixed_block_pallas.1} parent=1 // pred_fallthru
      _
    %2656 = vsyncpa [#allocation3], 1
    %2657 = vsyncpa [#allocation4], 1

</llo_original>
